<compile_context>
chip_gen: v7x
topology: tpu7x:2x2x1
jax: 0.10.0
libtpu: 0.0.40
codegen_flags: <defaults>
</compile_context>

<pallas_src>
import functools

import jax
import jax.numpy as jnp
from jax.experimental import pallas as pl
from jax.experimental.pallas import tpu as pltpu

EPS = 1e-5  # torch.nn.LayerNorm default eps


def _round_up(n, m):
  return ((n + m - 1) // m) * m


# ----------------------------- fused kernel ---------------------------------


def _fused_pitch_kernel(xp_ref, w0_ref, wrest_ref, cb_ref, g_ref, bt_ref,
                        lw_ref, lb_ref, out_ref, *, n_layers, ksize, t_tile,
                        t_true):
  """Fused n_layers x (Conv1d + ReLU + LayerNorm) + Linear for one time tile.

  xp_ref:    [1, t_total, idim]   host-zero-padded input (bf16)
  w0_ref:    [K, idim, C]         layer-0 conv weight (bf16, [Cout,Cin,K] permuted)
  wrest_ref: [(L-1)*K or 1, C, C] layers 1..L-1 conv weights (bf16)
  cb_ref/g_ref/bt_ref: [L, 1, C]  conv bias / LN gamma / LN beta (f32)
  lw_ref:    [C, odim] (bf16), lb_ref: [1, odim] (f32)
  out_ref:   [1, t_tile, odim]
  """
  pad = ksize // 2
  halo = n_layers * pad
  n_chans = cb_ref.shape[-1]

  j = pl.program_id(1)
  s = j * t_tile                       # tile start in original time coords
  w_in = t_tile + 2 * halo

  # Layer-0 input window: rows [j*t_tile, j*t_tile + w_in) of the padded input
  # (host padding already supplies zeros outside the true [0, t_true) range).
  start = pl.multiple_of(j * t_tile, 8)
  h = xp_ref[0, pl.ds(start, w_in), :]          # [w_in, idim], bf16

  for l in range(n_layers):
    w_out = t_tile + 2 * (n_layers - 1 - l) * pad

    # --- Conv1d (valid within the window): K shifted MXU matmuls ----------
    acc = jnp.zeros((w_out, n_chans), jnp.float32)
    for k in range(ksize):
      if l == 0:
        wk = w0_ref[k]                          # [idim, C]
      else:
        wk = wrest_ref[(l - 1) * ksize + k]     # [C, C]
      acc = acc + jnp.dot(h[k:k + w_out, :], wk,
                          preferred_element_type=jnp.float32)
    acc = acc + cb_ref[l]                       # [1, C] broadcast

    # --- ReLU --------------------------------------------------------------
    acc = jnp.maximum(acc, 0.0)

    # --- LayerNorm over channels (single-pass stats) ------------------------
    inv_c = 1.0 / n_chans
    mean = jnp.sum(acc, axis=-1, keepdims=True) * inv_c
    msq = jnp.sum(acc * acc, axis=-1, keepdims=True) * inv_c
    var = jnp.maximum(msq - mean * mean, 0.0)
    y = (acc - mean) * jax.lax.rsqrt(var + EPS)
    y = y * g_ref[l] + bt_ref[l]

    # --- zero rows outside the true sequence (per-layer Conv1d zero pad) ----
    off = s - (n_layers - 1 - l) * pad          # original time of window row 0
    rows = jax.lax.broadcasted_iota(jnp.int32, (w_out, 1), 0) + off
    valid = jnp.logical_and(rows >= 0, rows < t_true)
    y = y * valid.astype(jnp.float32)

    # Dropout: identity in eval mode.
    h = y.astype(jnp.bfloat16)                  # next layer's matmul input

  # --- final Linear(n_chans, odim), fused (h has exactly t_tile rows) -------
  out = jnp.dot(h, lw_ref[...], preferred_element_type=jnp.float32)
  out = out + lb_ref[...]
  out_ref[0] = out.astype(out_ref.dtype)


# ----------------------------- wrapper ---------------------------------------


def pitch_predictor_forward(x, params, t_tile=256):
  """x: [B, T, idim] -> [B, T, odim]."""
  B, T, idim = x.shape
  L = params["n_layers"]
  K = params["kernel_size"]
  pad = K // 2
  halo = L * pad
  C = params["gamma"].shape[-1]
  odim = params["lin_w"].shape[-1]

  tT = min(_round_up(t_tile, 8), _round_up(T, 8))   # time tile, multiple of 8
  nT = pl.cdiv(T, tT)
  t_padded = nT * tT
  t_total = t_padded + 2 * halo

  # Pad the (small, idim-channel) input once: halo on the left, halo + tile
  # alignment on the right.  Zeros outside [0, T) feed layer 0's zero padding.
  xp = jnp.pad(x.astype(jnp.bfloat16),
               ((0, 0), (halo, t_total - T - halo), (0, 0)))

  wrest = params["w_rest"]
  if wrest.shape[0] == 0:   # n_layers == 1: dummy block, never read
    wrest = jnp.zeros((1, C, C), jnp.bfloat16)
  n_rest = wrest.shape[0]

  kernel = functools.partial(_fused_pitch_kernel, n_layers=L, ksize=K,
                             t_tile=tT, t_true=T)

  out = pl.pallas_call(
      kernel,
      out_shape=jax.ShapeDtypeStruct((B, t_padded, odim), x.dtype),
      grid=(B, nT),
      in_specs=[
          pl.BlockSpec((1, t_total, idim), lambda b, j: (b, 0, 0)),
          pl.BlockSpec((K, idim, C), lambda b, j: (0, 0, 0)),
          pl.BlockSpec((n_rest, C, C), lambda b, j: (0, 0, 0)),
          pl.BlockSpec((L, 1, C), lambda b, j: (0, 0, 0)),
          pl.BlockSpec((L, 1, C), lambda b, j: (0, 0, 0)),
          pl.BlockSpec((L, 1, C), lambda b, j: (0, 0, 0)),
          pl.BlockSpec((C, odim), lambda b, j: (0, 0)),
          pl.BlockSpec((1, odim), lambda b, j: (0, 0)),
      ],
      out_specs=pl.BlockSpec((1, tT, odim), lambda b, j: (b, j, 0)),
      compiler_params=pltpu.CompilerParams(
          dimension_semantics=("parallel", "parallel"),
          vmem_limit_bytes=48 * 1024 * 1024),
  )(xp, params["w0"], wrest, params["conv_b"], params["gamma"],
    params["beta"], params["lin_w"], params["lin_b"])

  return out[:, :T, :]


# ----------------------- pure-JAX reference (for checking) -------------------


def pitch_predictor_reference(x, params):
  """f32 reference with the same (bf16-quantized) weights."""
  B, T, idim = x.shape
  L = params["n_layers"]
  K = params["kernel_size"]
  pad = K // 2
  h = x.astype(jnp.float32)
  for l in range(L):
    if l == 0:
      w = params["w0"].astype(jnp.float32)          # [K, idim, C]
    else:
      w = params["w_rest"][(l - 1) * K:l * K].astype(jnp.float32)
    hp = jnp.pad(h, ((0, 0), (pad, pad), (0, 0)))
    acc = params["conv_b"][l][None]                  # [1, 1, C]
    acc = jnp.broadcast_to(acc, (B, T, w.shape[-1])).astype(jnp.float32)
    for k in range(K):
      acc = acc + jnp.einsum("btc,cd->btd", hp[:, k:k + T, :], w[k])
    acc = jnp.maximum(acc, 0.0)
    mean = jnp.mean(acc, axis=-1, keepdims=True)
    var = jnp.mean((acc - mean) ** 2, axis=-1, keepdims=True)
    h = (acc - mean) * jax.lax.rsqrt(var + EPS)
    h = h * params["gamma"][l][None] + params["beta"][l][None]
  out = jnp.einsum("btc,cd->btd", h, params["lin_w"].astype(jnp.float32))
  return out + params["lin_b"][None]


def init_pitch_predictor_params(key, idim, n_layers=5, n_chans=384, odim=2,
                                kernel_size=5):
  """Deterministic synthetic parameters (shapes match the PyTorch module)."""
  keys = jax.random.split(key, 2 * n_layers + 2)
  w_layers, b_layers = [], []
  for idx in range(n_layers):
    in_chans = idim if idx == 0 else n_chans
    scale = 1.0 / jnp.sqrt(jnp.asarray(in_chans * kernel_size, jnp.float32))
    # PyTorch Conv1d weight is [Cout, Cin, K]; stored here as [K, Cin, Cout].
    w = scale * jax.random.normal(keys[2 * idx],
                                  (kernel_size, in_chans, n_chans), jnp.float32)
    b = scale * jax.random.normal(keys[2 * idx + 1], (1, n_chans), jnp.float32)
    w_layers.append(w)
    b_layers.append(b)
  lscale = 1.0 / jnp.sqrt(jnp.asarray(n_chans, jnp.float32))
  if n_layers > 1:
    w_rest = jnp.concatenate(w_layers[1:], axis=0).astype(jnp.bfloat16)
  else:
    w_rest = jnp.zeros((0, n_chans, n_chans), jnp.bfloat16)
  return {
      "n_layers": n_layers,
      "kernel_size": kernel_size,
      "w0": w_layers[0].astype(jnp.bfloat16),            # [K, idim, C]
      "w_rest": w_rest,                                  # [(L-1)*K, C, C]
      "conv_b": jnp.stack(b_layers),                     # [L, 1, C] f32
      "gamma": jnp.ones((n_layers, 1, n_chans), jnp.float32),
      "beta": jnp.zeros((n_layers, 1, n_chans), jnp.float32),
      "lin_w": (lscale * jax.random.normal(keys[-2], (n_chans, odim),
                                           jnp.float32)).astype(jnp.bfloat16),
      "lin_b": lscale * jax.random.normal(keys[-1], (1, odim), jnp.float32),
  }


if __name__ == "__main__":
  key = jax.random.PRNGKey(0)
  pkey, xkey = jax.random.split(key)

  B, T = 2, 16
  idim, n_layers, n_chans, odim, kernel_size = 32, 5, 32, 2, 5

  params = init_pitch_predictor_params(
      pkey, idim, n_layers=n_layers, n_chans=n_chans, odim=odim,
      kernel_size=kernel_size)
  x = jax.random.normal(xkey, (B, T, idim), jnp.float32)

  out = pitch_predictor_forward(x, params)
  out = jax.block_until_ready(out)

  assert out.shape == (B, T, odim), out.shape
  assert bool(jnp.all(jnp.isfinite(out)))

  # Correctness check against an f32 reference (kernel uses bf16 activations
  # on the MXU, so allow a loose absolute tolerance).
  ref = pitch_predictor_reference(x, params)
  max_err = float(jnp.max(jnp.abs(out - ref)))
  assert max_err < 0.15, max_err

  print("KERNEL_OK")
</pallas_src>

<mosaic_0001>
module attributes {stable_mosaic.version = 11 : i64} {
  func.func @_fused_pitch_kernel(%arg0: i32, %arg1: i32, %arg2: memref<1x36x32xbf16, #tpu.memory_space<vmem>>, %arg3: memref<5x32x32xbf16, #tpu.memory_space<vmem>>, %arg4: memref<20x32x32xbf16, #tpu.memory_space<vmem>>, %arg5: memref<5x1x32xf32, #tpu.memory_space<vmem>>, %arg6: memref<5x1x32xf32, #tpu.memory_space<vmem>>, %arg7: memref<5x1x32xf32, #tpu.memory_space<vmem>>, %arg8: memref<32x2xbf16, #tpu.memory_space<vmem>>, %arg9: memref<1x2xf32, #tpu.memory_space<vmem>>, %arg10: memref<1x16x2xf32, #tpu.memory_space<vmem>>) attributes {dimension_semantics = [#tpu.dimension_semantics<parallel>, #tpu.dimension_semantics<parallel>], iteration_bounds = array<i64: 2, 1>, scalar_prefetch = 0 : i64, scratch_operands = 0 : i64, tpu.core_type = #tpu.core_type<tc>, window_params = [{transform_indices = @transform_0, window_bounds = array<i64: 1, 36, 32>}, {pipeline_mode = #tpu.pipeline_mode<synchronous>, transform_indices = @transform_1, window_bounds = array<i64: 5, 32, 32>}, {pipeline_mode = #tpu.pipeline_mode<synchronous>, transform_indices = @transform_2, window_bounds = array<i64: 20, 32, 32>}, {pipeline_mode = #tpu.pipeline_mode<synchronous>, transform_indices = @transform_3, window_bounds = array<i64: 5, 1, 32>}, {pipeline_mode = #tpu.pipeline_mode<synchronous>, transform_indices = @transform_4, window_bounds = array<i64: 5, 1, 32>}, {pipeline_mode = #tpu.pipeline_mode<synchronous>, transform_indices = @transform_5, window_bounds = array<i64: 5, 1, 32>}, {pipeline_mode = #tpu.pipeline_mode<synchronous>, transform_indices = @transform_6, window_bounds = array<i64: 32, 2>}, {pipeline_mode = #tpu.pipeline_mode<synchronous>, transform_indices = @transform_7, window_bounds = array<i64: 1, 2>}, {transform_indices = @transform_8, window_bounds = array<i64: 1, 16, 2>}]} {
    %c16_i32 = arith.constant 16 : i32
    %0 = arith.muli %arg1, %c16_i32 : i32
    %c16_i32_0 = arith.constant 16 : i32
    %1 = arith.muli %arg1, %c16_i32_0 : i32
    %2 = tpu.assume_multiple %1, 8 : i32
    %c0 = arith.constant 0 : index
    %3 = arith.index_cast %2 : i32 to index
    %c0_1 = arith.constant 0 : index
    %4 = vector.load %arg2[%c0, %3, %c0_1] : memref<1x36x32xbf16, #tpu.memory_space<vmem>>, vector<1x36x32xbf16>
    %5 = vector.shape_cast %4 : vector<1x36x32xbf16> to vector<36x32xbf16>
    %cst = arith.constant 0.000000e+00 : f32
    %6 = vector.broadcast %cst : f32 to vector<32x32xf32>
    %c0_2 = arith.constant 0 : index
    %c0_3 = arith.constant 0 : index
    %c0_4 = arith.constant 0 : index
    %7 = vector.load %arg3[%c0_2, %c0_3, %c0_4] : memref<5x32x32xbf16, #tpu.memory_space<vmem>>, vector<1x32x32xbf16>
    %8 = vector.shape_cast %7 : vector<1x32x32xbf16> to vector<32x32xbf16>
    %9 = vector.extract_strided_slice %5 {offsets = [0, 0], sizes = [32, 32], strides = [1, 1]} : vector<36x32xbf16> to vector<32x32xbf16>
    %cst_5 = arith.constant dense<0.000000e+00> : vector<32x32xf32>
    %10 = tpu.matmul %9, %8, %cst_5 {dimension_numbers = #tpu.dot_dimension_numbers<[1], [0], [0], [1], [0, 0, 1, 1], [], []>} : vector<32x32xbf16>, vector<32x32xbf16>, vector<32x32xf32> -> vector<32x32xf32>
    %11 = arith.addf %6, %10 : vector<32x32xf32>
    %c1 = arith.constant 1 : index
    %c0_6 = arith.constant 0 : index
    %c0_7 = arith.constant 0 : index
    %12 = vector.load %arg3[%c1, %c0_6, %c0_7] : memref<5x32x32xbf16, #tpu.memory_space<vmem>>, vector<1x32x32xbf16>
    %13 = vector.shape_cast %12 : vector<1x32x32xbf16> to vector<32x32xbf16>
    %14 = vector.extract_strided_slice %5 {offsets = [1, 0], sizes = [32, 32], strides = [1, 1]} : vector<36x32xbf16> to vector<32x32xbf16>
    %cst_8 = arith.constant dense<0.000000e+00> : vector<32x32xf32>
    %15 = tpu.matmul %14, %13, %cst_8 {dimension_numbers = #tpu.dot_dimension_numbers<[1], [0], [0], [1], [0, 0, 1, 1], [], []>} : vector<32x32xbf16>, vector<32x32xbf16>, vector<32x32xf32> -> vector<32x32xf32>
    %16 = arith.addf %11, %15 : vector<32x32xf32>
    %c2 = arith.constant 2 : index
    %c0_9 = arith.constant 0 : index
    %c0_10 = arith.constant 0 : index
    %17 = vector.load %arg3[%c2, %c0_9, %c0_10] : memref<5x32x32xbf16, #tpu.memory_space<vmem>>, vector<1x32x32xbf16>
    %18 = vector.shape_cast %17 : vector<1x32x32xbf16> to vector<32x32xbf16>
    %19 = vector.extract_strided_slice %5 {offsets = [2, 0], sizes = [32, 32], strides = [1, 1]} : vector<36x32xbf16> to vector<32x32xbf16>
    %cst_11 = arith.constant dense<0.000000e+00> : vector<32x32xf32>
    %20 = tpu.matmul %19, %18, %cst_11 {dimension_numbers = #tpu.dot_dimension_numbers<[1], [0], [0], [1], [0, 0, 1, 1], [], []>} : vector<32x32xbf16>, vector<32x32xbf16>, vector<32x32xf32> -> vector<32x32xf32>
    %21 = arith.addf %16, %20 : vector<32x32xf32>
    %c3 = arith.constant 3 : index
    %c0_12 = arith.constant 0 : index
    %c0_13 = arith.constant 0 : index
    %22 = vector.load %arg3[%c3, %c0_12, %c0_13] : memref<5x32x32xbf16, #tpu.memory_space<vmem>>, vector<1x32x32xbf16>
    %23 = vector.shape_cast %22 : vector<1x32x32xbf16> to vector<32x32xbf16>
    %24 = vector.extract_strided_slice %5 {offsets = [3, 0], sizes = [32, 32], strides = [1, 1]} : vector<36x32xbf16> to vector<32x32xbf16>
    %cst_14 = arith.constant dense<0.000000e+00> : vector<32x32xf32>
    %25 = tpu.matmul %24, %23, %cst_14 {dimension_numbers = #tpu.dot_dimension_numbers<[1], [0], [0], [1], [0, 0, 1, 1], [], []>} : vector<32x32xbf16>, vector<32x32xbf16>, vector<32x32xf32> -> vector<32x32xf32>
    %26 = arith.addf %21, %25 : vector<32x32xf32>
    %c4 = arith.constant 4 : index
    %c0_15 = arith.constant 0 : index
    %c0_16 = arith.constant 0 : index
    %27 = vector.load %arg3[%c4, %c0_15, %c0_16] : memref<5x32x32xbf16, #tpu.memory_space<vmem>>, vector<1x32x32xbf16>
    %28 = vector.shape_cast %27 : vector<1x32x32xbf16> to vector<32x32xbf16>
    %29 = vector.extract_strided_slice %5 {offsets = [4, 0], sizes = [32, 32], strides = [1, 1]} : vector<36x32xbf16> to vector<32x32xbf16>
    %cst_17 = arith.constant dense<0.000000e+00> : vector<32x32xf32>
    %30 = tpu.matmul %29, %28, %cst_17 {dimension_numbers = #tpu.dot_dimension_numbers<[1], [0], [0], [1], [0, 0, 1, 1], [], []>} : vector<32x32xbf16>, vector<32x32xbf16>, vector<32x32xf32> -> vector<32x32xf32>
    %31 = arith.addf %26, %30 : vector<32x32xf32>
    %c0_18 = arith.constant 0 : index
    %c0_19 = arith.constant 0 : index
    %c0_20 = arith.constant 0 : index
    %32 = vector.load %arg5[%c0_18, %c0_19, %c0_20] : memref<5x1x32xf32, #tpu.memory_space<vmem>>, vector<1x1x32xf32>
    %33 = vector.shape_cast %32 : vector<1x1x32xf32> to vector<1x32xf32>
    %34 = vector.broadcast %33 : vector<1x32xf32> to vector<32x32xf32>
    %35 = arith.addf %31, %34 : vector<32x32xf32>
    %cst_21 = arith.constant 0.000000e+00 : f32
    %36 = vector.broadcast %cst_21 : f32 to vector<32x32xf32>
    %37 = arith.maximumf %35, %36 : vector<32x32xf32>
    %cst_22 = arith.constant dense<0.000000e+00> : vector<32xf32>
    %38 = vector.multi_reduction <add>, %37, %cst_22 [1] : vector<32x32xf32> to vector<32xf32>
    %39 = vector.shape_cast %38 : vector<32xf32> to vector<32x1xf32>
    %cst_23 = arith.constant 3.125000e-02 : f32
    %40 = vector.broadcast %cst_23 : f32 to vector<32x1xf32>
    %41 = arith.mulf %39, %40 : vector<32x1xf32>
    %42 = arith.mulf %37, %37 : vector<32x32xf32>
    %cst_24 = arith.constant dense<0.000000e+00> : vector<32xf32>
    %43 = vector.multi_reduction <add>, %42, %cst_24 [1] : vector<32x32xf32> to vector<32xf32>
    %44 = vector.shape_cast %43 : vector<32xf32> to vector<32x1xf32>
    %cst_25 = arith.constant 3.125000e-02 : f32
    %45 = vector.broadcast %cst_25 : f32 to vector<32x1xf32>
    %46 = arith.mulf %44, %45 : vector<32x1xf32>
    %47 = arith.mulf %41, %41 : vector<32x1xf32>
    %48 = arith.subf %46, %47 : vector<32x1xf32>
    %cst_26 = arith.constant 0.000000e+00 : f32
    %49 = vector.broadcast %cst_26 : f32 to vector<32x1xf32>
    %50 = arith.maximumf %48, %49 : vector<32x1xf32>
    %51 = vector.broadcast %41 : vector<32x1xf32> to vector<32x32xf32>
    %52 = arith.subf %37, %51 : vector<32x32xf32>
    %cst_27 = arith.constant 9.99999974E-6 : f32
    %53 = vector.broadcast %cst_27 : f32 to vector<32x1xf32>
    %54 = arith.addf %50, %53 : vector<32x1xf32>
    %55 = math.rsqrt %54 : vector<32x1xf32>
    %56 = vector.broadcast %55 : vector<32x1xf32> to vector<32x32xf32>
    %57 = arith.mulf %52, %56 : vector<32x32xf32>
    %c0_28 = arith.constant 0 : index
    %c0_29 = arith.constant 0 : index
    %c0_30 = arith.constant 0 : index
    %58 = vector.load %arg6[%c0_28, %c0_29, %c0_30] : memref<5x1x32xf32, #tpu.memory_space<vmem>>, vector<1x1x32xf32>
    %59 = vector.shape_cast %58 : vector<1x1x32xf32> to vector<1x32xf32>
    %60 = vector.broadcast %59 : vector<1x32xf32> to vector<32x32xf32>
    %61 = arith.mulf %57, %60 : vector<32x32xf32>
    %c0_31 = arith.constant 0 : index
    %c0_32 = arith.constant 0 : index
    %c0_33 = arith.constant 0 : index
    %62 = vector.load %arg7[%c0_31, %c0_32, %c0_33] : memref<5x1x32xf32, #tpu.memory_space<vmem>>, vector<1x1x32xf32>
    %63 = vector.shape_cast %62 : vector<1x1x32xf32> to vector<1x32xf32>
    %64 = vector.broadcast %63 : vector<1x32xf32> to vector<32x32xf32>
    %65 = arith.addf %61, %64 : vector<32x32xf32>
    %c8_i32 = arith.constant 8 : i32
    %66 = arith.subi %0, %c8_i32 : i32
    %67 = tpu.iota {dimensions = array<i32: 0>} : vector<32x1xi32>
    %68 = vector.broadcast %66 : i32 to vector<32x1xi32>
    %69 = arith.addi %67, %68 : vector<32x1xi32>
    %c0_i32 = arith.constant 0 : i32
    %70 = vector.broadcast %c0_i32 : i32 to vector<32x1xi32>
    %71 = arith.cmpi sge, %69, %70 : vector<32x1xi32>
    %c16_i32_34 = arith.constant 16 : i32
    %72 = vector.broadcast %c16_i32_34 : i32 to vector<32x1xi32>
    %73 = arith.cmpi slt, %69, %72 : vector<32x1xi32>
    %74 = arith.andi %71, %73 : vector<32x1xi1>
    %75 = arith.extui %74 : vector<32x1xi1> to vector<32x1xi32>
    %76 = arith.sitofp %75 : vector<32x1xi32> to vector<32x1xf32>
    %77 = vector.broadcast %76 : vector<32x1xf32> to vector<32x32xf32>
    %78 = arith.mulf %65, %77 : vector<32x32xf32>
    %79 = arith.truncf %78 : vector<32x32xf32> to vector<32x32xbf16>
    %cst_35 = arith.constant 0.000000e+00 : f32
    %80 = vector.broadcast %cst_35 : f32 to vector<28x32xf32>
    %c0_36 = arith.constant 0 : index
    %c0_37 = arith.constant 0 : index
    %c0_38 = arith.constant 0 : index
    %81 = vector.load %arg4[%c0_36, %c0_37, %c0_38] : memref<20x32x32xbf16, #tpu.memory_space<vmem>>, vector<1x32x32xbf16>
    %82 = vector.shape_cast %81 : vector<1x32x32xbf16> to vector<32x32xbf16>
    %83 = vector.extract_strided_slice %79 {offsets = [0, 0], sizes = [28, 32], strides = [1, 1]} : vector<32x32xbf16> to vector<28x32xbf16>
    %cst_39 = arith.constant dense<0.000000e+00> : vector<28x32xf32>
    %84 = tpu.matmul %83, %82, %cst_39 {dimension_numbers = #tpu.dot_dimension_numbers<[1], [0], [0], [1], [0, 0, 1, 1], [], []>} : vector<28x32xbf16>, vector<32x32xbf16>, vector<28x32xf32> -> vector<28x32xf32>
    %85 = arith.addf %80, %84 : vector<28x32xf32>
    %c1_40 = arith.constant 1 : index
    %c0_41 = arith.constant 0 : index
    %c0_42 = arith.constant 0 : index
    %86 = vector.load %arg4[%c1_40, %c0_41, %c0_42] : memref<20x32x32xbf16, #tpu.memory_space<vmem>>, vector<1x32x32xbf16>
    %87 = vector.shape_cast %86 : vector<1x32x32xbf16> to vector<32x32xbf16>
    %88 = vector.extract_strided_slice %79 {offsets = [1, 0], sizes = [28, 32], strides = [1, 1]} : vector<32x32xbf16> to vector<28x32xbf16>
    %cst_43 = arith.constant dense<0.000000e+00> : vector<28x32xf32>
    %89 = tpu.matmul %88, %87, %cst_43 {dimension_numbers = #tpu.dot_dimension_numbers<[1], [0], [0], [1], [0, 0, 1, 1], [], []>} : vector<28x32xbf16>, vector<32x32xbf16>, vector<28x32xf32> -> vector<28x32xf32>
    %90 = arith.addf %85, %89 : vector<28x32xf32>
    %c2_44 = arith.constant 2 : index
    %c0_45 = arith.constant 0 : index
    %c0_46 = arith.constant 0 : index
    %91 = vector.load %arg4[%c2_44, %c0_45, %c0_46] : memref<20x32x32xbf16, #tpu.memory_space<vmem>>, vector<1x32x32xbf16>
    %92 = vector.shape_cast %91 : vector<1x32x32xbf16> to vector<32x32xbf16>
    %93 = vector.extract_strided_slice %79 {offsets = [2, 0], sizes = [28, 32], strides = [1, 1]} : vector<32x32xbf16> to vector<28x32xbf16>
    %cst_47 = arith.constant dense<0.000000e+00> : vector<28x32xf32>
    %94 = tpu.matmul %93, %92, %cst_47 {dimension_numbers = #tpu.dot_dimension_numbers<[1], [0], [0], [1], [0, 0, 1, 1], [], []>} : vector<28x32xbf16>, vector<32x32xbf16>, vector<28x32xf32> -> vector<28x32xf32>
    %95 = arith.addf %90, %94 : vector<28x32xf32>
    %c3_48 = arith.constant 3 : index
    %c0_49 = arith.constant 0 : index
    %c0_50 = arith.constant 0 : index
    %96 = vector.load %arg4[%c3_48, %c0_49, %c0_50] : memref<20x32x32xbf16, #tpu.memory_space<vmem>>, vector<1x32x32xbf16>
    %97 = vector.shape_cast %96 : vector<1x32x32xbf16> to vector<32x32xbf16>
    %98 = vector.extract_strided_slice %79 {offsets = [3, 0], sizes = [28, 32], strides = [1, 1]} : vector<32x32xbf16> to vector<28x32xbf16>
    %cst_51 = arith.constant dense<0.000000e+00> : vector<28x32xf32>
    %99 = tpu.matmul %98, %97, %cst_51 {dimension_numbers = #tpu.dot_dimension_numbers<[1], [0], [0], [1], [0, 0, 1, 1], [], []>} : vector<28x32xbf16>, vector<32x32xbf16>, vector<28x32xf32> -> vector<28x32xf32>
    %100 = arith.addf %95, %99 : vector<28x32xf32>
    %c4_52 = arith.constant 4 : index
    %c0_53 = arith.constant 0 : index
    %c0_54 = arith.constant 0 : index
    %101 = vector.load %arg4[%c4_52, %c0_53, %c0_54] : memref<20x32x32xbf16, #tpu.memory_space<vmem>>, vector<1x32x32xbf16>
    %102 = vector.shape_cast %101 : vector<1x32x32xbf16> to vector<32x32xbf16>
    %103 = vector.extract_strided_slice %79 {offsets = [4, 0], sizes = [28, 32], strides = [1, 1]} : vector<32x32xbf16> to vector<28x32xbf16>
    %cst_55 = arith.constant dense<0.000000e+00> : vector<28x32xf32>
    %104 = tpu.matmul %103, %102, %cst_55 {dimension_numbers = #tpu.dot_dimension_numbers<[1], [0], [0], [1], [0, 0, 1, 1], [], []>} : vector<28x32xbf16>, vector<32x32xbf16>, vector<28x32xf32> -> vector<28x32xf32>
    %105 = arith.addf %100, %104 : vector<28x32xf32>
    %c1_56 = arith.constant 1 : index
    %c0_57 = arith.constant 0 : index
    %c0_58 = arith.constant 0 : index
    %106 = vector.load %arg5[%c1_56, %c0_57, %c0_58] : memref<5x1x32xf32, #tpu.memory_space<vmem>>, vector<1x1x32xf32>
    %107 = vector.shape_cast %106 : vector<1x1x32xf32> to vector<1x32xf32>
    %108 = vector.broadcast %107 : vector<1x32xf32> to vector<28x32xf32>
    %109 = arith.addf %105, %108 : vector<28x32xf32>
    %cst_59 = arith.constant 0.000000e+00 : f32
    %110 = vector.broadcast %cst_59 : f32 to vector<28x32xf32>
    %111 = arith.maximumf %109, %110 : vector<28x32xf32>
    %cst_60 = arith.constant dense<0.000000e+00> : vector<28xf32>
    %112 = vector.multi_reduction <add>, %111, %cst_60 [1] : vector<28x32xf32> to vector<28xf32>
    %113 = vector.shape_cast %112 : vector<28xf32> to vector<28x1xf32>
    %cst_61 = arith.constant 3.125000e-02 : f32
    %114 = vector.broadcast %cst_61 : f32 to vector<28x1xf32>
    %115 = arith.mulf %113, %114 : vector<28x1xf32>
    %116 = arith.mulf %111, %111 : vector<28x32xf32>
    %cst_62 = arith.constant dense<0.000000e+00> : vector<28xf32>
    %117 = vector.multi_reduction <add>, %116, %cst_62 [1] : vector<28x32xf32> to vector<28xf32>
    %118 = vector.shape_cast %117 : vector<28xf32> to vector<28x1xf32>
    %cst_63 = arith.constant 3.125000e-02 : f32
    %119 = vector.broadcast %cst_63 : f32 to vector<28x1xf32>
    %120 = arith.mulf %118, %119 : vector<28x1xf32>
    %121 = arith.mulf %115, %115 : vector<28x1xf32>
    %122 = arith.subf %120, %121 : vector<28x1xf32>
    %cst_64 = arith.constant 0.000000e+00 : f32
    %123 = vector.broadcast %cst_64 : f32 to vector<28x1xf32>
    %124 = arith.maximumf %122, %123 : vector<28x1xf32>
    %125 = vector.broadcast %115 : vector<28x1xf32> to vector<28x32xf32>
    %126 = arith.subf %111, %125 : vector<28x32xf32>
    %cst_65 = arith.constant 9.99999974E-6 : f32
    %127 = vector.broadcast %cst_65 : f32 to vector<28x1xf32>
    %128 = arith.addf %124, %127 : vector<28x1xf32>
    %129 = math.rsqrt %128 : vector<28x1xf32>
    %130 = vector.broadcast %129 : vector<28x1xf32> to vector<28x32xf32>
    %131 = arith.mulf %126, %130 : vector<28x32xf32>
    %c1_66 = arith.constant 1 : index
    %c0_67 = arith.constant 0 : index
    %c0_68 = arith.constant 0 : index
    %132 = vector.load %arg6[%c1_66, %c0_67, %c0_68] : memref<5x1x32xf32, #tpu.memory_space<vmem>>, vector<1x1x32xf32>
    %133 = vector.shape_cast %132 : vector<1x1x32xf32> to vector<1x32xf32>
    %134 = vector.broadcast %133 : vector<1x32xf32> to vector<28x32xf32>
    %135 = arith.mulf %131, %134 : vector<28x32xf32>
    %c1_69 = arith.constant 1 : index
    %c0_70 = arith.constant 0 : index
    %c0_71 = arith.constant 0 : index
    %136 = vector.load %arg7[%c1_69, %c0_70, %c0_71] : memref<5x1x32xf32, #tpu.memory_space<vmem>>, vector<1x1x32xf32>
    %137 = vector.shape_cast %136 : vector<1x1x32xf32> to vector<1x32xf32>
    %138 = vector.broadcast %137 : vector<1x32xf32> to vector<28x32xf32>
    %139 = arith.addf %135, %138 : vector<28x32xf32>
    %c6_i32 = arith.constant 6 : i32
    %140 = arith.subi %0, %c6_i32 : i32
    %141 = tpu.iota {dimensions = array<i32: 0>} : vector<28x1xi32>
    %142 = vector.broadcast %140 : i32 to vector<28x1xi32>
    %143 = arith.addi %141, %142 : vector<28x1xi32>
    %c0_i32_72 = arith.constant 0 : i32
    %144 = vector.broadcast %c0_i32_72 : i32 to vector<28x1xi32>
    %145 = arith.cmpi sge, %143, %144 : vector<28x1xi32>
    %c16_i32_73 = arith.constant 16 : i32
    %146 = vector.broadcast %c16_i32_73 : i32 to vector<28x1xi32>
    %147 = arith.cmpi slt, %143, %146 : vector<28x1xi32>
    %148 = arith.andi %145, %147 : vector<28x1xi1>
    %149 = arith.extui %148 : vector<28x1xi1> to vector<28x1xi32>
    %150 = arith.sitofp %149 : vector<28x1xi32> to vector<28x1xf32>
    %151 = vector.broadcast %150 : vector<28x1xf32> to vector<28x32xf32>
    %152 = arith.mulf %139, %151 : vector<28x32xf32>
    %153 = arith.truncf %152 : vector<28x32xf32> to vector<28x32xbf16>
    %cst_74 = arith.constant 0.000000e+00 : f32
    %154 = vector.broadcast %cst_74 : f32 to vector<24x32xf32>
    %c5 = arith.constant 5 : index
    %c0_75 = arith.constant 0 : index
    %c0_76 = arith.constant 0 : index
    %155 = vector.load %arg4[%c5, %c0_75, %c0_76] : memref<20x32x32xbf16, #tpu.memory_space<vmem>>, vector<1x32x32xbf16>
    %156 = vector.shape_cast %155 : vector<1x32x32xbf16> to vector<32x32xbf16>
    %157 = vector.extract_strided_slice %153 {offsets = [0, 0], sizes = [24, 32], strides = [1, 1]} : vector<28x32xbf16> to vector<24x32xbf16>
    %cst_77 = arith.constant dense<0.000000e+00> : vector<24x32xf32>
    %158 = tpu.matmul %157, %156, %cst_77 {dimension_numbers = #tpu.dot_dimension_numbers<[1], [0], [0], [1], [0, 0, 1, 1], [], []>} : vector<24x32xbf16>, vector<32x32xbf16>, vector<24x32xf32> -> vector<24x32xf32>
    %159 = arith.addf %154, %158 : vector<24x32xf32>
    %c6 = arith.constant 6 : index
    %c0_78 = arith.constant 0 : index
    %c0_79 = arith.constant 0 : index
    %160 = vector.load %arg4[%c6, %c0_78, %c0_79] : memref<20x32x32xbf16, #tpu.memory_space<vmem>>, vector<1x32x32xbf16>
    %161 = vector.shape_cast %160 : vector<1x32x32xbf16> to vector<32x32xbf16>
    %162 = vector.extract_strided_slice %153 {offsets = [1, 0], sizes = [24, 32], strides = [1, 1]} : vector<28x32xbf16> to vector<24x32xbf16>
    %cst_80 = arith.constant dense<0.000000e+00> : vector<24x32xf32>
    %163 = tpu.matmul %162, %161, %cst_80 {dimension_numbers = #tpu.dot_dimension_numbers<[1], [0], [0], [1], [0, 0, 1, 1], [], []>} : vector<24x32xbf16>, vector<32x32xbf16>, vector<24x32xf32> -> vector<24x32xf32>
    %164 = arith.addf %159, %163 : vector<24x32xf32>
    %c7 = arith.constant 7 : index
    %c0_81 = arith.constant 0 : index
    %c0_82 = arith.constant 0 : index
    %165 = vector.load %arg4[%c7, %c0_81, %c0_82] : memref<20x32x32xbf16, #tpu.memory_space<vmem>>, vector<1x32x32xbf16>
    %166 = vector.shape_cast %165 : vector<1x32x32xbf16> to vector<32x32xbf16>
    %167 = vector.extract_strided_slice %153 {offsets = [2, 0], sizes = [24, 32], strides = [1, 1]} : vector<28x32xbf16> to vector<24x32xbf16>
    %cst_83 = arith.constant dense<0.000000e+00> : vector<24x32xf32>
    %168 = tpu.matmul %167, %166, %cst_83 {dimension_numbers = #tpu.dot_dimension_numbers<[1], [0], [0], [1], [0, 0, 1, 1], [], []>} : vector<24x32xbf16>, vector<32x32xbf16>, vector<24x32xf32> -> vector<24x32xf32>
    %169 = arith.addf %164, %168 : vector<24x32xf32>
    %c8 = arith.constant 8 : index
    %c0_84 = arith.constant 0 : index
    %c0_85 = arith.constant 0 : index
    %170 = vector.load %arg4[%c8, %c0_84, %c0_85] : memref<20x32x32xbf16, #tpu.memory_space<vmem>>, vector<1x32x32xbf16>
    %171 = vector.shape_cast %170 : vector<1x32x32xbf16> to vector<32x32xbf16>
    %172 = vector.extract_strided_slice %153 {offsets = [3, 0], sizes = [24, 32], strides = [1, 1]} : vector<28x32xbf16> to vector<24x32xbf16>
    %cst_86 = arith.constant dense<0.000000e+00> : vector<24x32xf32>
    %173 = tpu.matmul %172, %171, %cst_86 {dimension_numbers = #tpu.dot_dimension_numbers<[1], [0], [0], [1], [0, 0, 1, 1], [], []>} : vector<24x32xbf16>, vector<32x32xbf16>, vector<24x32xf32> -> vector<24x32xf32>
    %174 = arith.addf %169, %173 : vector<24x32xf32>
    %c9 = arith.constant 9 : index
    %c0_87 = arith.constant 0 : index
    %c0_88 = arith.constant 0 : index
    %175 = vector.load %arg4[%c9, %c0_87, %c0_88] : memref<20x32x32xbf16, #tpu.memory_space<vmem>>, vector<1x32x32xbf16>
    %176 = vector.shape_cast %175 : vector<1x32x32xbf16> to vector<32x32xbf16>
    %177 = vector.extract_strided_slice %153 {offsets = [4, 0], sizes = [24, 32], strides = [1, 1]} : vector<28x32xbf16> to vector<24x32xbf16>
    %cst_89 = arith.constant dense<0.000000e+00> : vector<24x32xf32>
    %178 = tpu.matmul %177, %176, %cst_89 {dimension_numbers = #tpu.dot_dimension_numbers<[1], [0], [0], [1], [0, 0, 1, 1], [], []>} : vector<24x32xbf16>, vector<32x32xbf16>, vector<24x32xf32> -> vector<24x32xf32>
    %179 = arith.addf %174, %178 : vector<24x32xf32>
    %c2_90 = arith.constant 2 : index
    %c0_91 = arith.constant 0 : index
    %c0_92 = arith.constant 0 : index
    %180 = vector.load %arg5[%c2_90, %c0_91, %c0_92] : memref<5x1x32xf32, #tpu.memory_space<vmem>>, vector<1x1x32xf32>
    %181 = vector.shape_cast %180 : vector<1x1x32xf32> to vector<1x32xf32>
    %182 = vector.broadcast %181 : vector<1x32xf32> to vector<24x32xf32>
    %183 = arith.addf %179, %182 : vector<24x32xf32>
    %cst_93 = arith.constant 0.000000e+00 : f32
    %184 = vector.broadcast %cst_93 : f32 to vector<24x32xf32>
    %185 = arith.maximumf %183, %184 : vector<24x32xf32>
    %cst_94 = arith.constant dense<0.000000e+00> : vector<24xf32>
    %186 = vector.multi_reduction <add>, %185, %cst_94 [1] : vector<24x32xf32> to vector<24xf32>
    %187 = vector.shape_cast %186 : vector<24xf32> to vector<24x1xf32>
    %cst_95 = arith.constant 3.125000e-02 : f32
    %188 = vector.broadcast %cst_95 : f32 to vector<24x1xf32>
    %189 = arith.mulf %187, %188 : vector<24x1xf32>
    %190 = arith.mulf %185, %185 : vector<24x32xf32>
    %cst_96 = arith.constant dense<0.000000e+00> : vector<24xf32>
    %191 = vector.multi_reduction <add>, %190, %cst_96 [1] : vector<24x32xf32> to vector<24xf32>
    %192 = vector.shape_cast %191 : vector<24xf32> to vector<24x1xf32>
    %cst_97 = arith.constant 3.125000e-02 : f32
    %193 = vector.broadcast %cst_97 : f32 to vector<24x1xf32>
    %194 = arith.mulf %192, %193 : vector<24x1xf32>
    %195 = arith.mulf %189, %189 : vector<24x1xf32>
    %196 = arith.subf %194, %195 : vector<24x1xf32>
    %cst_98 = arith.constant 0.000000e+00 : f32
    %197 = vector.broadcast %cst_98 : f32 to vector<24x1xf32>
    %198 = arith.maximumf %196, %197 : vector<24x1xf32>
    %199 = vector.broadcast %189 : vector<24x1xf32> to vector<24x32xf32>
    %200 = arith.subf %185, %199 : vector<24x32xf32>
    %cst_99 = arith.constant 9.99999974E-6 : f32
    %201 = vector.broadcast %cst_99 : f32 to vector<24x1xf32>
    %202 = arith.addf %198, %201 : vector<24x1xf32>
    %203 = math.rsqrt %202 : vector<24x1xf32>
    %204 = vector.broadcast %203 : vector<24x1xf32> to vector<24x32xf32>
    %205 = arith.mulf %200, %204 : vector<24x32xf32>
    %c2_100 = arith.constant 2 : index
    %c0_101 = arith.constant 0 : index
    %c0_102 = arith.constant 0 : index
    %206 = vector.load %arg6[%c2_100, %c0_101, %c0_102] : memref<5x1x32xf32, #tpu.memory_space<vmem>>, vector<1x1x32xf32>
    %207 = vector.shape_cast %206 : vector<1x1x32xf32> to vector<1x32xf32>
    %208 = vector.broadcast %207 : vector<1x32xf32> to vector<24x32xf32>
    %209 = arith.mulf %205, %208 : vector<24x32xf32>
    %c2_103 = arith.constant 2 : index
    %c0_104 = arith.constant 0 : index
    %c0_105 = arith.constant 0 : index
    %210 = vector.load %arg7[%c2_103, %c0_104, %c0_105] : memref<5x1x32xf32, #tpu.memory_space<vmem>>, vector<1x1x32xf32>
    %211 = vector.shape_cast %210 : vector<1x1x32xf32> to vector<1x32xf32>
    %212 = vector.broadcast %211 : vector<1x32xf32> to vector<24x32xf32>
    %213 = arith.addf %209, %212 : vector<24x32xf32>
    %c4_i32 = arith.constant 4 : i32
    %214 = arith.subi %0, %c4_i32 : i32
    %215 = tpu.iota {dimensions = array<i32: 0>} : vector<24x1xi32>
    %216 = vector.broadcast %214 : i32 to vector<24x1xi32>
    %217 = arith.addi %215, %216 : vector<24x1xi32>
    %c0_i32_106 = arith.constant 0 : i32
    %218 = vector.broadcast %c0_i32_106 : i32 to vector<24x1xi32>
    %219 = arith.cmpi sge, %217, %218 : vector<24x1xi32>
    %c16_i32_107 = arith.constant 16 : i32
    %220 = vector.broadcast %c16_i32_107 : i32 to vector<24x1xi32>
    %221 = arith.cmpi slt, %217, %220 : vector<24x1xi32>
    %222 = arith.andi %219, %221 : vector<24x1xi1>
    %223 = arith.extui %222 : vector<24x1xi1> to vector<24x1xi32>
    %224 = arith.sitofp %223 : vector<24x1xi32> to vector<24x1xf32>
    %225 = vector.broadcast %224 : vector<24x1xf32> to vector<24x32xf32>
    %226 = arith.mulf %213, %225 : vector<24x32xf32>
    %227 = arith.truncf %226 : vector<24x32xf32> to vector<24x32xbf16>
    %cst_108 = arith.constant 0.000000e+00 : f32
    %228 = vector.broadcast %cst_108 : f32 to vector<20x32xf32>
    %c10 = arith.constant 10 : index
    %c0_109 = arith.constant 0 : index
    %c0_110 = arith.constant 0 : index
    %229 = vector.load %arg4[%c10, %c0_109, %c0_110] : memref<20x32x32xbf16, #tpu.memory_space<vmem>>, vector<1x32x32xbf16>
    %230 = vector.shape_cast %229 : vector<1x32x32xbf16> to vector<32x32xbf16>
    %231 = vector.extract_strided_slice %227 {offsets = [0, 0], sizes = [20, 32], strides = [1, 1]} : vector<24x32xbf16> to vector<20x32xbf16>
    %cst_111 = arith.constant dense<0.000000e+00> : vector<20x32xf32>
    %232 = tpu.matmul %231, %230, %cst_111 {dimension_numbers = #tpu.dot_dimension_numbers<[1], [0], [0], [1], [0, 0, 1, 1], [], []>} : vector<20x32xbf16>, vector<32x32xbf16>, vector<20x32xf32> -> vector<20x32xf32>
    %233 = arith.addf %228, %232 : vector<20x32xf32>
    %c11 = arith.constant 11 : index
    %c0_112 = arith.constant 0 : index
    %c0_113 = arith.constant 0 : index
    %234 = vector.load %arg4[%c11, %c0_112, %c0_113] : memref<20x32x32xbf16, #tpu.memory_space<vmem>>, vector<1x32x32xbf16>
    %235 = vector.shape_cast %234 : vector<1x32x32xbf16> to vector<32x32xbf16>
    %236 = vector.extract_strided_slice %227 {offsets = [1, 0], sizes = [20, 32], strides = [1, 1]} : vector<24x32xbf16> to vector<20x32xbf16>
    %cst_114 = arith.constant dense<0.000000e+00> : vector<20x32xf32>
    %237 = tpu.matmul %236, %235, %cst_114 {dimension_numbers = #tpu.dot_dimension_numbers<[1], [0], [0], [1], [0, 0, 1, 1], [], []>} : vector<20x32xbf16>, vector<32x32xbf16>, vector<20x32xf32> -> vector<20x32xf32>
    %238 = arith.addf %233, %237 : vector<20x32xf32>
    %c12 = arith.constant 12 : index
    %c0_115 = arith.constant 0 : index
    %c0_116 = arith.constant 0 : index
    %239 = vector.load %arg4[%c12, %c0_115, %c0_116] : memref<20x32x32xbf16, #tpu.memory_space<vmem>>, vector<1x32x32xbf16>
    %240 = vector.shape_cast %239 : vector<1x32x32xbf16> to vector<32x32xbf16>
    %241 = vector.extract_strided_slice %227 {offsets = [2, 0], sizes = [20, 32], strides = [1, 1]} : vector<24x32xbf16> to vector<20x32xbf16>
    %cst_117 = arith.constant dense<0.000000e+00> : vector<20x32xf32>
    %242 = tpu.matmul %241, %240, %cst_117 {dimension_numbers = #tpu.dot_dimension_numbers<[1], [0], [0], [1], [0, 0, 1, 1], [], []>} : vector<20x32xbf16>, vector<32x32xbf16>, vector<20x32xf32> -> vector<20x32xf32>
    %243 = arith.addf %238, %242 : vector<20x32xf32>
    %c13 = arith.constant 13 : index
    %c0_118 = arith.constant 0 : index
    %c0_119 = arith.constant 0 : index
    %244 = vector.load %arg4[%c13, %c0_118, %c0_119] : memref<20x32x32xbf16, #tpu.memory_space<vmem>>, vector<1x32x32xbf16>
    %245 = vector.shape_cast %244 : vector<1x32x32xbf16> to vector<32x32xbf16>
    %246 = vector.extract_strided_slice %227 {offsets = [3, 0], sizes = [20, 32], strides = [1, 1]} : vector<24x32xbf16> to vector<20x32xbf16>
    %cst_120 = arith.constant dense<0.000000e+00> : vector<20x32xf32>
    %247 = tpu.matmul %246, %245, %cst_120 {dimension_numbers = #tpu.dot_dimension_numbers<[1], [0], [0], [1], [0, 0, 1, 1], [], []>} : vector<20x32xbf16>, vector<32x32xbf16>, vector<20x32xf32> -> vector<20x32xf32>
    %248 = arith.addf %243, %247 : vector<20x32xf32>
    %c14 = arith.constant 14 : index
    %c0_121 = arith.constant 0 : index
    %c0_122 = arith.constant 0 : index
    %249 = vector.load %arg4[%c14, %c0_121, %c0_122] : memref<20x32x32xbf16, #tpu.memory_space<vmem>>, vector<1x32x32xbf16>
    %250 = vector.shape_cast %249 : vector<1x32x32xbf16> to vector<32x32xbf16>
    %251 = vector.extract_strided_slice %227 {offsets = [4, 0], sizes = [20, 32], strides = [1, 1]} : vector<24x32xbf16> to vector<20x32xbf16>
    %cst_123 = arith.constant dense<0.000000e+00> : vector<20x32xf32>
    %252 = tpu.matmul %251, %250, %cst_123 {dimension_numbers = #tpu.dot_dimension_numbers<[1], [0], [0], [1], [0, 0, 1, 1], [], []>} : vector<20x32xbf16>, vector<32x32xbf16>, vector<20x32xf32> -> vector<20x32xf32>
    %253 = arith.addf %248, %252 : vector<20x32xf32>
    %c3_124 = arith.constant 3 : index
    %c0_125 = arith.constant 0 : index
    %c0_126 = arith.constant 0 : index
    %254 = vector.load %arg5[%c3_124, %c0_125, %c0_126] : memref<5x1x32xf32, #tpu.memory_space<vmem>>, vector<1x1x32xf32>
    %255 = vector.shape_cast %254 : vector<1x1x32xf32> to vector<1x32xf32>
    %256 = vector.broadcast %255 : vector<1x32xf32> to vector<20x32xf32>
    %257 = arith.addf %253, %256 : vector<20x32xf32>
    %cst_127 = arith.constant 0.000000e+00 : f32
    %258 = vector.broadcast %cst_127 : f32 to vector<20x32xf32>
    %259 = arith.maximumf %257, %258 : vector<20x32xf32>
    %cst_128 = arith.constant dense<0.000000e+00> : vector<20xf32>
    %260 = vector.multi_reduction <add>, %259, %cst_128 [1] : vector<20x32xf32> to vector<20xf32>
    %261 = vector.shape_cast %260 : vector<20xf32> to vector<20x1xf32>
    %cst_129 = arith.constant 3.125000e-02 : f32
    %262 = vector.broadcast %cst_129 : f32 to vector<20x1xf32>
    %263 = arith.mulf %261, %262 : vector<20x1xf32>
    %264 = arith.mulf %259, %259 : vector<20x32xf32>
    %cst_130 = arith.constant dense<0.000000e+00> : vector<20xf32>
    %265 = vector.multi_reduction <add>, %264, %cst_130 [1] : vector<20x32xf32> to vector<20xf32>
    %266 = vector.shape_cast %265 : vector<20xf32> to vector<20x1xf32>
    %cst_131 = arith.constant 3.125000e-02 : f32
    %267 = vector.broadcast %cst_131 : f32 to vector<20x1xf32>
    %268 = arith.mulf %266, %267 : vector<20x1xf32>
    %269 = arith.mulf %263, %263 : vector<20x1xf32>
    %270 = arith.subf %268, %269 : vector<20x1xf32>
    %cst_132 = arith.constant 0.000000e+00 : f32
    %271 = vector.broadcast %cst_132 : f32 to vector<20x1xf32>
    %272 = arith.maximumf %270, %271 : vector<20x1xf32>
    %273 = vector.broadcast %263 : vector<20x1xf32> to vector<20x32xf32>
    %274 = arith.subf %259, %273 : vector<20x32xf32>
    %cst_133 = arith.constant 9.99999974E-6 : f32
    %275 = vector.broadcast %cst_133 : f32 to vector<20x1xf32>
    %276 = arith.addf %272, %275 : vector<20x1xf32>
    %277 = math.rsqrt %276 : vector<20x1xf32>
    %278 = vector.broadcast %277 : vector<20x1xf32> to vector<20x32xf32>
    %279 = arith.mulf %274, %278 : vector<20x32xf32>
    %c3_134 = arith.constant 3 : index
    %c0_135 = arith.constant 0 : index
    %c0_136 = arith.constant 0 : index
    %280 = vector.load %arg6[%c3_134, %c0_135, %c0_136] : memref<5x1x32xf32, #tpu.memory_space<vmem>>, vector<1x1x32xf32>
    %281 = vector.shape_cast %280 : vector<1x1x32xf32> to vector<1x32xf32>
    %282 = vector.broadcast %281 : vector<1x32xf32> to vector<20x32xf32>
    %283 = arith.mulf %279, %282 : vector<20x32xf32>
    %c3_137 = arith.constant 3 : index
    %c0_138 = arith.constant 0 : index
    %c0_139 = arith.constant 0 : index
    %284 = vector.load %arg7[%c3_137, %c0_138, %c0_139] : memref<5x1x32xf32, #tpu.memory_space<vmem>>, vector<1x1x32xf32>
    %285 = vector.shape_cast %284 : vector<1x1x32xf32> to vector<1x32xf32>
    %286 = vector.broadcast %285 : vector<1x32xf32> to vector<20x32xf32>
    %287 = arith.addf %283, %286 : vector<20x32xf32>
    %c2_i32 = arith.constant 2 : i32
    %288 = arith.subi %0, %c2_i32 : i32
    %289 = tpu.iota {dimensions = array<i32: 0>} : vector<20x1xi32>
    %290 = vector.broadcast %288 : i32 to vector<20x1xi32>
    %291 = arith.addi %289, %290 : vector<20x1xi32>
    %c0_i32_140 = arith.constant 0 : i32
    %292 = vector.broadcast %c0_i32_140 : i32 to vector<20x1xi32>
    %293 = arith.cmpi sge, %291, %292 : vector<20x1xi32>
    %c16_i32_141 = arith.constant 16 : i32
    %294 = vector.broadcast %c16_i32_141 : i32 to vector<20x1xi32>
    %295 = arith.cmpi slt, %291, %294 : vector<20x1xi32>
    %296 = arith.andi %293, %295 : vector<20x1xi1>
    %297 = arith.extui %296 : vector<20x1xi1> to vector<20x1xi32>
    %298 = arith.sitofp %297 : vector<20x1xi32> to vector<20x1xf32>
    %299 = vector.broadcast %298 : vector<20x1xf32> to vector<20x32xf32>
    %300 = arith.mulf %287, %299 : vector<20x32xf32>
    %301 = arith.truncf %300 : vector<20x32xf32> to vector<20x32xbf16>
    %cst_142 = arith.constant 0.000000e+00 : f32
    %302 = vector.broadcast %cst_142 : f32 to vector<16x32xf32>
    %c15 = arith.constant 15 : index
    %c0_143 = arith.constant 0 : index
    %c0_144 = arith.constant 0 : index
    %303 = vector.load %arg4[%c15, %c0_143, %c0_144] : memref<20x32x32xbf16, #tpu.memory_space<vmem>>, vector<1x32x32xbf16>
    %304 = vector.shape_cast %303 : vector<1x32x32xbf16> to vector<32x32xbf16>
    %305 = vector.extract_strided_slice %301 {offsets = [0, 0], sizes = [16, 32], strides = [1, 1]} : vector<20x32xbf16> to vector<16x32xbf16>
    %cst_145 = arith.constant dense<0.000000e+00> : vector<16x32xf32>
    %306 = tpu.matmul %305, %304, %cst_145 {dimension_numbers = #tpu.dot_dimension_numbers<[1], [0], [0], [1], [0, 0, 1, 1], [], []>} : vector<16x32xbf16>, vector<32x32xbf16>, vector<16x32xf32> -> vector<16x32xf32>
    %307 = arith.addf %302, %306 : vector<16x32xf32>
    %c16 = arith.constant 16 : index
    %c0_146 = arith.constant 0 : index
    %c0_147 = arith.constant 0 : index
    %308 = vector.load %arg4[%c16, %c0_146, %c0_147] : memref<20x32x32xbf16, #tpu.memory_space<vmem>>, vector<1x32x32xbf16>
    %309 = vector.shape_cast %308 : vector<1x32x32xbf16> to vector<32x32xbf16>
    %310 = vector.extract_strided_slice %301 {offsets = [1, 0], sizes = [16, 32], strides = [1, 1]} : vector<20x32xbf16> to vector<16x32xbf16>
    %cst_148 = arith.constant dense<0.000000e+00> : vector<16x32xf32>
    %311 = tpu.matmul %310, %309, %cst_148 {dimension_numbers = #tpu.dot_dimension_numbers<[1], [0], [0], [1], [0, 0, 1, 1], [], []>} : vector<16x32xbf16>, vector<32x32xbf16>, vector<16x32xf32> -> vector<16x32xf32>
    %312 = arith.addf %307, %311 : vector<16x32xf32>
    %c17 = arith.constant 17 : index
    %c0_149 = arith.constant 0 : index
    %c0_150 = arith.constant 0 : index
    %313 = vector.load %arg4[%c17, %c0_149, %c0_150] : memref<20x32x32xbf16, #tpu.memory_space<vmem>>, vector<1x32x32xbf16>
    %314 = vector.shape_cast %313 : vector<1x32x32xbf16> to vector<32x32xbf16>
    %315 = vector.extract_strided_slice %301 {offsets = [2, 0], sizes = [16, 32], strides = [1, 1]} : vector<20x32xbf16> to vector<16x32xbf16>
    %cst_151 = arith.constant dense<0.000000e+00> : vector<16x32xf32>
    %316 = tpu.matmul %315, %314, %cst_151 {dimension_numbers = #tpu.dot_dimension_numbers<[1], [0], [0], [1], [0, 0, 1, 1], [], []>} : vector<16x32xbf16>, vector<32x32xbf16>, vector<16x32xf32> -> vector<16x32xf32>
    %317 = arith.addf %312, %316 : vector<16x32xf32>
    %c18 = arith.constant 18 : index
    %c0_152 = arith.constant 0 : index
    %c0_153 = arith.constant 0 : index
    %318 = vector.load %arg4[%c18, %c0_152, %c0_153] : memref<20x32x32xbf16, #tpu.memory_space<vmem>>, vector<1x32x32xbf16>
    %319 = vector.shape_cast %318 : vector<1x32x32xbf16> to vector<32x32xbf16>
    %320 = vector.extract_strided_slice %301 {offsets = [3, 0], sizes = [16, 32], strides = [1, 1]} : vector<20x32xbf16> to vector<16x32xbf16>
    %cst_154 = arith.constant dense<0.000000e+00> : vector<16x32xf32>
    %321 = tpu.matmul %320, %319, %cst_154 {dimension_numbers = #tpu.dot_dimension_numbers<[1], [0], [0], [1], [0, 0, 1, 1], [], []>} : vector<16x32xbf16>, vector<32x32xbf16>, vector<16x32xf32> -> vector<16x32xf32>
    %322 = arith.addf %317, %321 : vector<16x32xf32>
    %c19 = arith.constant 19 : index
    %c0_155 = arith.constant 0 : index
    %c0_156 = arith.constant 0 : index
    %323 = vector.load %arg4[%c19, %c0_155, %c0_156] : memref<20x32x32xbf16, #tpu.memory_space<vmem>>, vector<1x32x32xbf16>
    %324 = vector.shape_cast %323 : vector<1x32x32xbf16> to vector<32x32xbf16>
    %325 = vector.extract_strided_slice %301 {offsets = [4, 0], sizes = [16, 32], strides = [1, 1]} : vector<20x32xbf16> to vector<16x32xbf16>
    %cst_157 = arith.constant dense<0.000000e+00> : vector<16x32xf32>
    %326 = tpu.matmul %325, %324, %cst_157 {dimension_numbers = #tpu.dot_dimension_numbers<[1], [0], [0], [1], [0, 0, 1, 1], [], []>} : vector<16x32xbf16>, vector<32x32xbf16>, vector<16x32xf32> -> vector<16x32xf32>
    %327 = arith.addf %322, %326 : vector<16x32xf32>
    %c4_158 = arith.constant 4 : index
    %c0_159 = arith.constant 0 : index
    %c0_160 = arith.constant 0 : index
    %328 = vector.load %arg5[%c4_158, %c0_159, %c0_160] : memref<5x1x32xf32, #tpu.memory_space<vmem>>, vector<1x1x32xf32>
    %329 = vector.shape_cast %328 : vector<1x1x32xf32> to vector<1x32xf32>
    %330 = vector.broadcast %329 : vector<1x32xf32> to vector<16x32xf32>
    %331 = arith.addf %327, %330 : vector<16x32xf32>
    %cst_161 = arith.constant 0.000000e+00 : f32
    %332 = vector.broadcast %cst_161 : f32 to vector<16x32xf32>
    %333 = arith.maximumf %331, %332 : vector<16x32xf32>
    %cst_162 = arith.constant dense<0.000000e+00> : vector<16xf32>
    %334 = vector.multi_reduction <add>, %333, %cst_162 [1] : vector<16x32xf32> to vector<16xf32>
    %335 = vector.shape_cast %334 : vector<16xf32> to vector<16x1xf32>
    %cst_163 = arith.constant 3.125000e-02 : f32
    %336 = vector.broadcast %cst_163 : f32 to vector<16x1xf32>
    %337 = arith.mulf %335, %336 : vector<16x1xf32>
    %338 = arith.mulf %333, %333 : vector<16x32xf32>
    %cst_164 = arith.constant dense<0.000000e+00> : vector<16xf32>
    %339 = vector.multi_reduction <add>, %338, %cst_164 [1] : vector<16x32xf32> to vector<16xf32>
    %340 = vector.shape_cast %339 : vector<16xf32> to vector<16x1xf32>
    %cst_165 = arith.constant 3.125000e-02 : f32
    %341 = vector.broadcast %cst_165 : f32 to vector<16x1xf32>
    %342 = arith.mulf %340, %341 : vector<16x1xf32>
    %343 = arith.mulf %337, %337 : vector<16x1xf32>
    %344 = arith.subf %342, %343 : vector<16x1xf32>
    %cst_166 = arith.constant 0.000000e+00 : f32
    %345 = vector.broadcast %cst_166 : f32 to vector<16x1xf32>
    %346 = arith.maximumf %344, %345 : vector<16x1xf32>
    %347 = vector.broadcast %337 : vector<16x1xf32> to vector<16x32xf32>
    %348 = arith.subf %333, %347 : vector<16x32xf32>
    %cst_167 = arith.constant 9.99999974E-6 : f32
    %349 = vector.broadcast %cst_167 : f32 to vector<16x1xf32>
    %350 = arith.addf %346, %349 : vector<16x1xf32>
    %351 = math.rsqrt %350 : vector<16x1xf32>
    %352 = vector.broadcast %351 : vector<16x1xf32> to vector<16x32xf32>
    %353 = arith.mulf %348, %352 : vector<16x32xf32>
    %c4_168 = arith.constant 4 : index
    %c0_169 = arith.constant 0 : index
    %c0_170 = arith.constant 0 : index
    %354 = vector.load %arg6[%c4_168, %c0_169, %c0_170] : memref<5x1x32xf32, #tpu.memory_space<vmem>>, vector<1x1x32xf32>
    %355 = vector.shape_cast %354 : vector<1x1x32xf32> to vector<1x32xf32>
    %356 = vector.broadcast %355 : vector<1x32xf32> to vector<16x32xf32>
    %357 = arith.mulf %353, %356 : vector<16x32xf32>
    %c4_171 = arith.constant 4 : index
    %c0_172 = arith.constant 0 : index
    %c0_173 = arith.constant 0 : index
    %358 = vector.load %arg7[%c4_171, %c0_172, %c0_173] : memref<5x1x32xf32, #tpu.memory_space<vmem>>, vector<1x1x32xf32>
    %359 = vector.shape_cast %358 : vector<1x1x32xf32> to vector<1x32xf32>
    %360 = vector.broadcast %359 : vector<1x32xf32> to vector<16x32xf32>
    %361 = arith.addf %357, %360 : vector<16x32xf32>
    %c0_i32_174 = arith.constant 0 : i32
    %362 = arith.subi %0, %c0_i32_174 : i32
    %363 = tpu.iota {dimensions = array<i32: 0>} : vector<16x1xi32>
    %364 = vector.broadcast %362 : i32 to vector<16x1xi32>
    %365 = arith.addi %363, %364 : vector<16x1xi32>
    %c0_i32_175 = arith.constant 0 : i32
    %366 = vector.broadcast %c0_i32_175 : i32 to vector<16x1xi32>
    %367 = arith.cmpi sge, %365, %366 : vector<16x1xi32>
    %c16_i32_176 = arith.constant 16 : i32
    %368 = vector.broadcast %c16_i32_176 : i32 to vector<16x1xi32>
    %369 = arith.cmpi slt, %365, %368 : vector<16x1xi32>
    %370 = arith.andi %367, %369 : vector<16x1xi1>
    %371 = arith.extui %370 : vector<16x1xi1> to vector<16x1xi32>
    %372 = arith.sitofp %371 : vector<16x1xi32> to vector<16x1xf32>
    %373 = vector.broadcast %372 : vector<16x1xf32> to vector<16x32xf32>
    %374 = arith.mulf %361, %373 : vector<16x32xf32>
    %375 = arith.truncf %374 : vector<16x32xf32> to vector<16x32xbf16>
    %c0_177 = arith.constant 0 : index
    %c0_178 = arith.constant 0 : index
    %376 = vector.load %arg8[%c0_177, %c0_178] : memref<32x2xbf16, #tpu.memory_space<vmem>>, vector<32x2xbf16>
    %cst_179 = arith.constant dense<0.000000e+00> : vector<16x2xf32>
    %377 = tpu.matmul %375, %376, %cst_179 {dimension_numbers = #tpu.dot_dimension_numbers<[1], [0], [0], [1], [0, 0, 1, 1], [], []>} : vector<16x32xbf16>, vector<32x2xbf16>, vector<16x2xf32> -> vector<16x2xf32>
    %c0_180 = arith.constant 0 : index
    %c0_181 = arith.constant 0 : index
    %378 = vector.load %arg9[%c0_180, %c0_181] : memref<1x2xf32, #tpu.memory_space<vmem>>, vector<1x2xf32>
    %379 = vector.broadcast %378 : vector<1x2xf32> to vector<16x2xf32>
    %380 = arith.addf %377, %379 : vector<16x2xf32>
    %c0_182 = arith.constant 0 : index
    %c0_183 = arith.constant 0 : index
    %c0_184 = arith.constant 0 : index
    %381 = vector.load %arg10[%c0_182, %c0_183, %c0_184] : memref<1x16x2xf32, #tpu.memory_space<vmem>>, vector<1x16x2xf32>
    %382 = vector.shape_cast %381 : vector<1x16x2xf32> to vector<16x2xf32>
    %383 = vector.shape_cast %380 : vector<16x2xf32> to vector<1x16x2xf32>
    tpu.vector_store %arg10[%c0_182, %c0_183, %c0_184], %383 {strides = array<i32>} : memref<1x16x2xf32, #tpu.memory_space<vmem>>, vector<1x16x2xf32>,
    return
  }
  func.func @transform_0(%arg0: i32, %arg1: i32) -> (i32, i32, i32) {
    %c0_i32 = arith.constant 0 : i32
    %c0_i32_0 = arith.constant 0 : i32
    %c0_i32_1 = arith.constant 0 : i32
    return %arg0, %c0_i32, %c0_i32_0 : i32, i32, i32
  }
  func.func @transform_1(%arg0: i32, %arg1: i32) -> (i32, i32, i32) {
    %c0_i32 = arith.constant 0 : i32
    %c0_i32_0 = arith.constant 0 : i32
    %c0_i32_1 = arith.constant 0 : i32
    %c0_i32_2 = arith.constant 0 : i32
    return %c0_i32, %c0_i32_0, %c0_i32_1 : i32, i32, i32
  }
  func.func @transform_2(%arg0: i32, %arg1: i32) -> (i32, i32, i32) {
    %c0_i32 = arith.constant 0 : i32
    %c0_i32_0 = arith.constant 0 : i32
    %c0_i32_1 = arith.constant 0 : i32
    %c0_i32_2 = arith.constant 0 : i32
    return %c0_i32, %c0_i32_0, %c0_i32_1 : i32, i32, i32
  }
  func.func @transform_3(%arg0: i32, %arg1: i32) -> (i32, i32, i32) {
    %c0_i32 = arith.constant 0 : i32
    %c0_i32_0 = arith.constant 0 : i32
    %c0_i32_1 = arith.constant 0 : i32
    %c0_i32_2 = arith.constant 0 : i32
    return %c0_i32, %c0_i32_0, %c0_i32_1 : i32, i32, i32
  }
  func.func @transform_4(%arg0: i32, %arg1: i32) -> (i32, i32, i32) {
    %c0_i32 = arith.constant 0 : i32
    %c0_i32_0 = arith.constant 0 : i32
    %c0_i32_1 = arith.constant 0 : i32
    %c0_i32_2 = arith.constant 0 : i32
    return %c0_i32, %c0_i32_0, %c0_i32_1 : i32, i32, i32
  }
  func.func @transform_5(%arg0: i32, %arg1: i32) -> (i32, i32, i32) {
    %c0_i32 = arith.constant 0 : i32
    %c0_i32_0 = arith.constant 0 : i32
    %c0_i32_1 = arith.constant 0 : i32
    %c0_i32_2 = arith.constant 0 : i32
    return %c0_i32, %c0_i32_0, %c0_i32_1 : i32, i32, i32
  }
  func.func @transform_6(%arg0: i32, %arg1: i32) -> (i32, i32) {
    %c0_i32 = arith.constant 0 : i32
    %c0_i32_0 = arith.constant 0 : i32
    %c0_i32_1 = arith.constant 0 : i32
    return %c0_i32, %c0_i32_0 : i32, i32
  }
  func.func @transform_7(%arg0: i32, %arg1: i32) -> (i32, i32) {
    %c0_i32 = arith.constant 0 : i32
    %c0_i32_0 = arith.constant 0 : i32
    %c0_i32_1 = arith.constant 0 : i32
    return %c0_i32, %c0_i32_0 : i32, i32
  }
  func.func @transform_8(%arg0: i32, %arg1: i32) -> (i32, i32, i32) {
    %c0_i32 = arith.constant 0 : i32
    %c0_i32_0 = arith.constant 0 : i32
    return %arg0, %arg1, %c0_i32 : i32, i32, i32
  }
}

</mosaic_0001>

<llo_original>
// kernel: tpu_custom_call.1
$region0: #{tpu_custom_call.1}
  #allocation0 [shape = 'u32[]', space=smem, size = 0x4, offset = 0x4, fixed_abs, tag = 'smem constant byte address 0x4 - core index']
  #allocation1 [shape = 'u32[144,128]{1,0:T(1,128)}', space=vmem, size = 0x12000, scoped, tag = 'internal scratch']
  %s0 = inlined_call_operand.vmem [shape: bf16[2,36,32], index: 0, kind: input, shape index: {}]
  %s1 = inlined_call_operand.vmem [shape: bf16[5,32,32], index: 1, kind: input, shape index: {}]
  %s2 = inlined_call_operand.hbm [shape: bf16[20,32,32], index: 2, kind: input, shape index: {}]
  %s3 = inlined_call_operand.vmem [shape: f32[5,1,32], index: 3, kind: input, shape index: {}]
  %s4 = inlined_call_operand.vmem [shape: f32[5,1,32], index: 4, kind: input, shape index: {}]
  %s5 = inlined_call_operand.vmem [shape: f32[5,1,32], index: 5, kind: input, shape index: {}]
  %s6 = inlined_call_operand.vmem [shape: bf16[32,2], index: 6, kind: input, shape index: {}]
  %s7 = inlined_call_operand.vmem [shape: f32[1,2], index: 7, kind: input, shape index: {}]
  %s8 = inlined_call_operand.vmem [shape: f32[2,16,2], index: 8, kind: output, shape index: {}]
  %s9 = sld [smem:[#allocation0]]
  $region69: #{tpu_custom_call.1} parent=0
    _
  %s11 = ssub.s32 1, %s9
  %s12 = scalar_select 0, %s11, %s9
  $region1: #{tpu_custom_call.1} parent=0
    #allocation2 [shape = 'u8[163840]{0}', space=vmem, size = 0x28000, scoped, tag = 'input window, operand 2, single buffered']
    #allocation3 [shape = 's32[2]{0}', space=sflag, size = 0x8, scoped, tag = 'scoped memory for tpu_custom_call.1']
    %13 = vsyncpa [#allocation3], 0
    loop: start=0, step=1, limit=4
    $region2: #{tpu_custom_call.1} parent=1 // loop_pre_header
      _
    $region3: #{tpu_custom_call.1} parent=1 // loop_header
      %s15 = sphi 0, %s19
      %p16 = scmp.ge.s32.totalorder %s15, 4
      %s22 = sphi 0, %s34
      %s23 = sphi 0, %s30
      %s24 = sphi 0, %s22
      %s25 = sphi 0, %s23
      %s26 = sphi 0, %s24
      %s27 = sphi 0, %s25
      %s37 = sphi 0, %s39
      %s40 = sphi 0, %s37
      %s41 = sphi 0, %s40
      %s57 = sphi 0, %s41
      %s61 = sphi 0, %s61
      %s63 = sphi 0, %s61
      %s64 = sphi 0, %s63
      %s78 = sphi 0, %s64
      %s82 = sphi 0, %s82
      %s84 = sphi 0, %s82
      %s85 = sphi 0, %s84
      %s99 = sphi 0, %s85
      %s103 = sphi 0, %s103
      %s105 = sphi 0, %s103
      %s106 = sphi 0, %s105
      %s120 = sphi 0, %s106
      %s124 = sphi 0, %s124
      %s126 = sphi 0, %s124
      %s127 = sphi 0, %s126
      %s141 = sphi 0, %s127
      %s145 = sphi 0, %s145
      %s147 = sphi 0, %s145
      %s148 = sphi 0, %s147
      %s162 = sphi 0, %s148
      %s166 = sphi 0, %s166
      %s168 = sphi 0, %s166
      %s169 = sphi 0, %s168
      %s183 = sphi 0, %s169
      %s187 = sphi 0, %s187
      %s189 = sphi 0, %s187
      %s190 = sphi 0, %s189
      %s204 = sphi 0, %s190
      %s212 = sphi 0, %s214
      %s215 = sphi 0, %s212
      %s216 = sphi 0, %s215
      %s232 = sphi 0, %s216
    $region4: #{tpu_custom_call.1} parent=1 // loop_header_branch
      %18 = sbr.rel (%p16) target = $region8
    $region5: #{tpu_custom_call.1} parent=1 // loop_body
      %s20 = ssub.s32 %s15, 1
      %s21 = ssub.s32 %s15, 2
      %s28 = sadd.s32 1, %s23
      %p29 = scmp.ge.s32.totalorder %s28, 1
      %s30 = scalar_select %p29, 0, %s28
      %s31 = sadd.s32 1, %s22
      %s32 = scalar_select %p29, %s31, %s22
      %p33 = scmp.ge.s32.totalorder %s32, 2
      %s34 = scalar_select %p33, 0, %s32
      %s35 = ssub.s32 %s22, %s34
      %p36 = scmp.eq.s32.totalorder %s35, 0
      %s38 = sadd.s32 %s37, 1
      %s39 = scalar_select %p36, %s37, %s38
      %p42 = pneg %p36
      %p43 = scmp.eq.s32.totalorder %s15, 1
      %p44 = por %p42, %p43
      %p45 = scmp.ne.s32.totalorder %s37, %s40
      %p46 = scmp.eq.s32.totalorder %s15, 0
      %p47 = por %p45, %p46
      %p48 = scmp.ne.s32.totalorder %s37, %s40
      %p49 = scmp.eq.s32.totalorder %s20, 1
      %p50 = por %p48, %p49
      %p51 = scmp.ne.s32.totalorder %s40, %s41
      %p52 = scmp.eq.s32.totalorder %s20, 0
      %p53 = por %p51, %p52
      %p54 = scmp.ne.s32.totalorder %s40, %s41
      %p55 = scmp.eq.s32.totalorder %s21, 1
      %p56 = por %p54, %p55
      %p58 = scmp.ne.s32.totalorder %s41, %s57
      %p59 = scmp.eq.s32.totalorder %s21, 0
      %p60 = por %p58, %p59
      %s62 = sadd.s32 %s61, 1
      %p65 = scmp.eq.s32.totalorder %s15, 1
      %p66 = scmp.ne.s32.totalorder %s61, %s63
      %p67 = scmp.eq.s32.totalorder %s15, 0
      %p68 = por %p66, %p67
      %p69 = scmp.ne.s32.totalorder %s61, %s63
      %p70 = scmp.eq.s32.totalorder %s20, 1
      %p71 = por %p69, %p70
      %p72 = scmp.ne.s32.totalorder %s63, %s64
      %p73 = scmp.eq.s32.totalorder %s20, 0
      %p74 = por %p72, %p73
      %p75 = scmp.ne.s32.totalorder %s63, %s64
      %p76 = scmp.eq.s32.totalorder %s21, 1
      %p77 = por %p75, %p76
      %p79 = scmp.ne.s32.totalorder %s64, %s78
      %p80 = scmp.eq.s32.totalorder %s21, 0
      %p81 = por %p79, %p80
      %s83 = sadd.s32 %s82, 1
      %p86 = scmp.eq.s32.totalorder %s15, 1
      %p87 = scmp.ne.s32.totalorder %s82, %s84
      %p88 = scmp.eq.s32.totalorder %s15, 0
      %p89 = por %p87, %p88
      %p90 = scmp.ne.s32.totalorder %s82, %s84
      %p91 = scmp.eq.s32.totalorder %s20, 1
      %p92 = por %p90, %p91
      %p93 = scmp.ne.s32.totalorder %s84, %s85
      %p94 = scmp.eq.s32.totalorder %s20, 0
      %p95 = por %p93, %p94
      %p96 = scmp.ne.s32.totalorder %s84, %s85
      %p97 = scmp.eq.s32.totalorder %s21, 1
      %p98 = por %p96, %p97
      %p100 = scmp.ne.s32.totalorder %s85, %s99
      %p101 = scmp.eq.s32.totalorder %s21, 0
      %p102 = por %p100, %p101
      %s104 = sadd.s32 %s103, 1
      %p107 = scmp.eq.s32.totalorder %s15, 1
      %p108 = scmp.ne.s32.totalorder %s103, %s105
      %p109 = scmp.eq.s32.totalorder %s15, 0
      %p110 = por %p108, %p109
      %p111 = scmp.ne.s32.totalorder %s103, %s105
      %p112 = scmp.eq.s32.totalorder %s20, 1
      %p113 = por %p111, %p112
      %p114 = scmp.ne.s32.totalorder %s105, %s106
      %p115 = scmp.eq.s32.totalorder %s20, 0
      %p116 = por %p114, %p115
      %p117 = scmp.ne.s32.totalorder %s105, %s106
      %p118 = scmp.eq.s32.totalorder %s21, 1
      %p119 = por %p117, %p118
      %p121 = scmp.ne.s32.totalorder %s106, %s120
      %p122 = scmp.eq.s32.totalorder %s21, 0
      %p123 = por %p121, %p122
      %s125 = sadd.s32 %s124, 1
      %p128 = scmp.eq.s32.totalorder %s15, 1
      %p129 = scmp.ne.s32.totalorder %s124, %s126
      %p130 = scmp.eq.s32.totalorder %s15, 0
      %p131 = por %p129, %p130
      %p132 = scmp.ne.s32.totalorder %s124, %s126
      %p133 = scmp.eq.s32.totalorder %s20, 1
      %p134 = por %p132, %p133
      %p135 = scmp.ne.s32.totalorder %s126, %s127
      %p136 = scmp.eq.s32.totalorder %s20, 0
      %p137 = por %p135, %p136
      %p138 = scmp.ne.s32.totalorder %s126, %s127
      %p139 = scmp.eq.s32.totalorder %s21, 1
      %p140 = por %p138, %p139
      %p142 = scmp.ne.s32.totalorder %s127, %s141
      %p143 = scmp.eq.s32.totalorder %s21, 0
      %p144 = por %p142, %p143
      %s146 = sadd.s32 %s145, 1
      %p149 = scmp.eq.s32.totalorder %s15, 1
      %p150 = scmp.ne.s32.totalorder %s145, %s147
      %p151 = scmp.eq.s32.totalorder %s15, 0
      %p152 = por %p150, %p151
      %p153 = scmp.ne.s32.totalorder %s145, %s147
      %p154 = scmp.eq.s32.totalorder %s20, 1
      %p155 = por %p153, %p154
      %p156 = scmp.ne.s32.totalorder %s147, %s148
      %p157 = scmp.eq.s32.totalorder %s20, 0
      %p158 = por %p156, %p157
      %p159 = scmp.ne.s32.totalorder %s147, %s148
      %p160 = scmp.eq.s32.totalorder %s21, 1
      %p161 = por %p159, %p160
      %p163 = scmp.ne.s32.totalorder %s148, %s162
      %p164 = scmp.eq.s32.totalorder %s21, 0
      %p165 = por %p163, %p164
      %s167 = sadd.s32 %s166, 1
      %p170 = scmp.eq.s32.totalorder %s15, 1
      %p171 = scmp.ne.s32.totalorder %s166, %s168
      %p172 = scmp.eq.s32.totalorder %s15, 0
      %p173 = por %p171, %p172
      %p174 = scmp.ne.s32.totalorder %s166, %s168
      %p175 = scmp.eq.s32.totalorder %s20, 1
      %p176 = por %p174, %p175
      %p177 = scmp.ne.s32.totalorder %s168, %s169
      %p178 = scmp.eq.s32.totalorder %s20, 0
      %p179 = por %p177, %p178
      %p180 = scmp.ne.s32.totalorder %s168, %s169
      %p181 = scmp.eq.s32.totalorder %s21, 1
      %p182 = por %p180, %p181
      %p184 = scmp.ne.s32.totalorder %s169, %s183
      %p185 = scmp.eq.s32.totalorder %s21, 0
      %p186 = por %p184, %p185
      %s188 = sadd.s32 %s187, 1
      %p191 = scmp.eq.s32.totalorder %s15, 1
      %p192 = scmp.ne.s32.totalorder %s187, %s189
      %p193 = scmp.eq.s32.totalorder %s15, 0
      %p194 = por %p192, %p193
      %p195 = scmp.ne.s32.totalorder %s187, %s189
      %p196 = scmp.eq.s32.totalorder %s20, 1
      %p197 = por %p195, %p196
      %p198 = scmp.ne.s32.totalorder %s189, %s190
      %p199 = scmp.eq.s32.totalorder %s20, 0
      %p200 = por %p198, %p199
      %p201 = scmp.ne.s32.totalorder %s189, %s190
      %p202 = scmp.eq.s32.totalorder %s21, 1
      %p203 = por %p201, %p202
      %p205 = scmp.ne.s32.totalorder %s190, %s204
      %p206 = scmp.eq.s32.totalorder %s21, 0
      %p207 = por %p205, %p206
      %s208 = ssub.s32 %s22, %s34
      %s209 = ssub.s32 %s23, %s30
      %s210 = sor.u32 %s208, %s209
      %p211 = scmp.eq.s32.totalorder %s210, 0
      %s213 = sadd.s32 %s212, 1
      %s214 = scalar_select %p211, %s212, %s213
      %p217 = pneg %p211
      %p218 = scmp.eq.s32.totalorder %s15, 1
      %p219 = por %p217, %p218
      %p220 = scmp.ne.s32.totalorder %s212, %s215
      %p221 = scmp.eq.s32.totalorder %s15, 0
      %p222 = por %p220, %p221
      %p223 = scmp.ne.s32.totalorder %s212, %s215
      %p224 = scmp.eq.s32.totalorder %s20, 1
      %p225 = por %p223, %p224
      %p226 = scmp.ne.s32.totalorder %s215, %s216
      %p227 = scmp.eq.s32.totalorder %s20, 0
      %p228 = por %p226, %p227
      %p229 = scmp.ne.s32.totalorder %s215, %s216
      %p230 = scmp.eq.s32.totalorder %s21, 1
      %p231 = por %p229, %p230
      %p233 = scmp.ne.s32.totalorder %s216, %s232
      %p234 = scmp.eq.s32.totalorder %s21, 0
      %p235 = por %p233, %p234
      %p236 = scmp.le.s32.totalorder 1, %s15
      %p237 = scmp.lt.s32.totalorder %s15, 3
      %p238 = pnand %p236, %p237
      %p239 = pneg %p238
      // Predicated region
      $region9: #{tpu_custom_call.1} parent=5 // pred_check
        _
      $region10: #{tpu_custom_call.1} parent=5 // pred_check_branch
        %241 = sbr.rel (%p238) target = $region12
      $region11: #{tpu_custom_call.1} parent=5 // pred_region
        %s242 = ssub.s32 %s15, 1
        // Predicated region
        $region13: #{tpu_custom_call.1} parent=11 // pred_check
          %p243 = pneg %p74
        $region14: #{tpu_custom_call.1} parent=11 // pred_check_branch
          %245 = sbr.rel (%p243) target = $region16
        $region15: #{tpu_custom_call.1} parent=11 // pred_region
          _
        $region16: #{tpu_custom_call.1} parent=11 // pred_fallthru
          _
        // Predicated region
        $region17: #{tpu_custom_call.1} parent=11 // pred_check
          %p246 = pneg %p95
        $region18: #{tpu_custom_call.1} parent=11 // pred_check_branch
          %248 = sbr.rel (%p246) target = $region20
        $region19: #{tpu_custom_call.1} parent=11 // pred_region
          %s250 = ssub.s32 5120, 5120
          %251 = vsyncadd [#allocation3], %s250
          %s252 = sshll.u32 [#allocation2], 4
          %s253 = int_to_ptr.vmem [resolvable:$true] %s252
          %258 = dma.hbm_to_vmem [thread:$0]  %s2, 5120, %s253, [#allocation3], 64, 64, 4
        $region20: #{tpu_custom_call.1} parent=11 // pred_fallthru
          _
        // Predicated region
        $region21: #{tpu_custom_call.1} parent=11 // pred_check
          %p259 = pneg %p116
        $region22: #{tpu_custom_call.1} parent=11 // pred_check_branch
          %261 = sbr.rel (%p259) target = $region24
        $region23: #{tpu_custom_call.1} parent=11 // pred_region
          _
        $region24: #{tpu_custom_call.1} parent=11 // pred_fallthru
          _
        // Predicated region
        $region25: #{tpu_custom_call.1} parent=11 // pred_check
          %p262 = pneg %p137
        $region26: #{tpu_custom_call.1} parent=11 // pred_check_branch
          %264 = sbr.rel (%p262) target = $region28
        $region27: #{tpu_custom_call.1} parent=11 // pred_region
          _
        $region28: #{tpu_custom_call.1} parent=11 // pred_fallthru
          _
        // Predicated region
        $region29: #{tpu_custom_call.1} parent=11 // pred_check
          %p265 = pneg %p158
        $region30: #{tpu_custom_call.1} parent=11 // pred_check_branch
          %267 = sbr.rel (%p265) target = $region32
        $region31: #{tpu_custom_call.1} parent=11 // pred_region
          _
        $region32: #{tpu_custom_call.1} parent=11 // pred_fallthru
          _
        // Predicated region
        $region33: #{tpu_custom_call.1} parent=11 // pred_check
          %p268 = pneg %p179
        $region34: #{tpu_custom_call.1} parent=11 // pred_check_branch
          %270 = sbr.rel (%p268) target = $region36
        $region35: #{tpu_custom_call.1} parent=11 // pred_region
          _
        $region36: #{tpu_custom_call.1} parent=11 // pred_fallthru
          _
        // Predicated region
        $region37: #{tpu_custom_call.1} parent=11 // pred_check
          %p271 = pneg %p200
        $region38: #{tpu_custom_call.1} parent=11 // pred_check_branch
          %273 = sbr.rel (%p271) target = $region40
        $region39: #{tpu_custom_call.1} parent=11 // pred_region
          _
        $region40: #{tpu_custom_call.1} parent=11 // pred_fallthru
          _
      $region12: #{tpu_custom_call.1} parent=5 // pred_fallthru
        _
      %p274 = scmp.lt.s32.totalorder %s15, 2
      // Predicated region
      $region41: #{tpu_custom_call.1} parent=5 // pred_check
        %p275 = pneg %p274
      $region42: #{tpu_custom_call.1} parent=5 // pred_check_branch
        %277 = sbr.rel (%p275) target = $region44
      $region43: #{tpu_custom_call.1} parent=5 // pred_region
        // Predicated region
        $region45: #{tpu_custom_call.1} parent=43 // pred_check
          %p278 = pneg %p47
        $region46: #{tpu_custom_call.1} parent=43 // pred_check_branch
          %280 = sbr.rel (%p278) target = $region48
        $region47: #{tpu_custom_call.1} parent=43 // pred_region
          %p281 = scmp.lt.s32.totalorder %s22, 1
          %s282 = scalar_select %p281, %s22, 1
          %s283 = smul.addr %s282, 5
          %s284 = smul.addr %s283, 4
          %s285 = scalar_lea.vmem %s0, %s284
        $region48: #{tpu_custom_call.1} parent=43 // pred_fallthru
          _
      $region44: #{tpu_custom_call.1} parent=5 // pred_fallthru
        _
      %p286 = scmp.le.s32.totalorder 1, %s15
      %p287 = scmp.lt.s32.totalorder %s15, 3
      %p288 = pnand %p286, %p287
      %p289 = pneg %p288
      // Predicated region
      $region49: #{tpu_custom_call.1} parent=5 // pred_check
        _
      $region50: #{tpu_custom_call.1} parent=5 // pred_check_branch
        %291 = sbr.rel (%p288) target = $region52
      $region51: #{tpu_custom_call.1} parent=5 // pred_region
        %s292 = ssub.s32 %s15, 1
        // Predicated region
        $region53: #{tpu_custom_call.1} parent=51 // pred_check
          %p293 = pneg %p95
        $region54: #{tpu_custom_call.1} parent=51 // pred_check_branch
          %295 = sbr.rel (%p293) target = $region56
        $region55: #{tpu_custom_call.1} parent=51 // pred_region
          %296 = dma.done [#allocation3], 5120
        $region56: #{tpu_custom_call.1} parent=51 // pred_fallthru
          _
        %p297 = scmp.lt.s32.totalorder %s24, 1
        %s298 = scalar_select %p297, %s24, 1
        %s299 = smul.addr %s298, 5
        %s300 = smul.addr %s299, 4
        %s301 = scalar_lea.vmem %s0, %s300
        %p302 = pneg %p53
        %p303 = pneg %p50
        %p304 = pneg %p74
        %p305 = pneg %p71
        %p306 = pneg %p95
        %p307 = pneg %p92
        %p308 = pneg %p116
        %p309 = pneg %p113
        %p310 = pneg %p137
        %p311 = pneg %p134
        %p312 = pneg %p158
        %p313 = pneg %p155
        %p314 = pneg %p179
        %p315 = pneg %p176
        %p316 = pneg %p200
        %p317 = pneg %p197
        %p318 = pneg %p228
        %p319 = pneg %p225
        %s320 = smul.u32 2, %s25
        %p321 = scmp.lt.s32.totalorder %s24, 1
        %s322 = scalar_select %p321, %s24, 1
        %p323 = scmp.lt.s32.totalorder %s320, 1
        %s324 = scalar_select %p323, %s320, 1
        %s325 = smul.addr %s322, 2
        %s326 = sadd.s32 %s324, %s325
        %s327 = smul.addr %s326, 8
        %s328 = scalar_lea.vmem %s8, %s327
        %p329 = scmp.lt.s32.totalorder %s24, 1
        %s330 = scalar_select %p329, %s24, 1
        %s331 = smul.addr %s330, 5
        %s332 = smul.addr %s331, 4
        %s333 = scalar_lea.vmem %s0, %s332
        %s334 = smul.u32 2, %s25
        %p335 = scmp.lt.s32.totalorder %s24, 1
        %s336 = scalar_select %p335, %s24, 1
        %p337 = scmp.lt.s32.totalorder %s334, 1
        %s338 = scalar_select %p337, %s334, 1
        %s339 = smul.addr %s336, 2
        %s340 = sadd.s32 %s338, %s339
        %s341 = smul.addr %s340, 8
        %s342 = scalar_lea.vmem %s8, %s341
        %s343 = smul.u32 2, %s25
        %s345 = smul.u32 %s25, 16
        %s346 = sshra.s32 %s345, 3
        %s347 = sand.u32 %s345, 7
        %s348 = smul.addr %s346, 4
        %s349 = scalar_lea.vmem %s333, %s348
        %v350 = vld [vmem:[%s349] sm:$0xf]
        %v351 = vld [vmem:[%s349 + $0x4] sm:$0xf]
        %v352 = vld [vmem:[%s349 + $0x8] sm:$0xf]
        %v353 = vld [vmem:[%s349 + $0xc] sm:$0xf]
        %v354 = vld [vmem:[%s349 + $0x10] sm:$0x3]
        %v355 = vld [vmem:[%s1] sm:$0xf]
        %v356 = vld [vmem:[%s1 + $0x4] sm:$0xf]
        %v357 = vld [vmem:[%s1 + $0x8] sm:$0xf]
        %v358 = vld [vmem:[%s1 + $0xc] sm:$0xf]
        %s359 = scalar_lea.vmem %s1, 16
        %v360 = vld [vmem:[%s359] sm:$0xf]
        %v361 = vld [vmem:[%s359 + $0x4] sm:$0xf]
        %v362 = vld [vmem:[%s359 + $0x8] sm:$0xf]
        %v363 = vld [vmem:[%s359 + $0xc] sm:$0xf]
        %v369 = vunpack.c.l.b16 %v350
        %v370 = vunpack.c.l.b16 %v351
        %v371 = vunpack.c.l.b16 %v352
        %v372 = vunpack.c.l.b16 %v353
        %v373 = vunpack.c.l.b16 %v354
        %v374 = vpack.c.b16 %v370, %v369
        %v375 = vpack.c.b16 %v372, %v371
        %v376 = vpack.c.b16 %v373, %v373
        %vm377 = vsmask.f32 7424
        %v379 = vshrl.u32 %v374, 16
        %v381 = vshll.u32 %v374, 16
        %v383 = vrot.slane %v381, 1
        %v384 = vor.u32 %v379, %v383
        %v386 = vshll.u32 %v375, 16
        %v388 = vrot.slane %v386, 1
        %v389 = vsel %vm377, %v384, %v388
        %v390 = vshrl.u32 %v375, 16
        %v392 = vor.u32 %v390, %v388
        %v394 = vshll.u32 %v376, 16
        %v396 = vrot.slane %v394, 1
        %v397 = vsel %vm377, %v392, %v396
        %v402 = vunpack.c.l.b16 %v360
        %v403 = vunpack.c.l.b16 %v361
        %v404 = vunpack.c.l.b16 %v362
        %v405 = vunpack.c.l.b16 %v363
        %v406 = vpack.c.b16 %v403, %v402
        %v407 = vpack.c.b16 %v405, %v404
        %vm410 = vcmask 261120
        %v412 = vsel %vm410, %v389, 0
        %v415 = vsel %vm410, %v397, 0
        %417 = vmatprep.subr.bf16.mxu0 0
        %418 = vmatpush1.bf16.msra.mxu0 %v406
        %419 = vmatprep.subr.bf16.mxu0 0
        %420 = vmatpush1.bf16.msra.mxu0 %v407
        %421 = vmatprep.subr.bf16.mxu0 0
        %422 = vmatpush1.bf16.msra.mxu0 0
        %423 = vmatprep.subr.bf16.mxu0 0
        %424 = vmatpush1.bf16.msra.mxu0 0
        %425 = vmatprep.subr.bf16.mxu0 0
        %426 = vmatpush1.bf16.msra.mxu0 0
        %427 = vmatprep.subr.bf16.mxu0 0
        %428 = vmatpush1.bf16.msra.mxu0 0
        %429 = vmatprep.subr.bf16.mxu0 0
        %430 = vmatpush1.bf16.msra.mxu0 0
        %431 = vmatprep.subr.bf16.mxu0 0
        %432 = vmatpush1.bf16.msra.mxu0 0
        %433 = vmatprep.subr.bf16.mxu0 0
        %434 = vmatpush1.bf16.msra.mxu0 0
        %435 = vmatprep.subr.bf16.mxu0 0
        %436 = vmatpush1.bf16.msra.mxu0 0
        %437 = vmatprep.subr.bf16.mxu0 0
        %438 = vmatpush1.bf16.msra.mxu0 0
        %439 = vmatprep.subr.bf16.mxu0 0
        %440 = vmatpush1.bf16.msra.mxu0 0
        %441 = vmatprep.subr.bf16.mxu0 0
        %442 = vmatpush1.bf16.msra.mxu0 0
        %443 = vmatprep.subr.bf16.mxu0 0
        %444 = vmatpush1.bf16.msra.mxu0 0
        %445 = vmatprep.subr.bf16.mxu0 0
        %446 = vmatpush1.bf16.msra.mxu0 0
        %447 = vmatprep.subr.bf16.mxu0 0
        %448 = vmatpush1.bf16.msra.mxu0 0
        %449 = vmatprep.mubr.bf16.mxu0 0
        %450 = vmatmul.mubr.bf16.gmra.mrb[0].mxu0 %v412
        %v451 = vpop.f32.mrb[0].mxu0
        %v452 = vadd.f32 0.0, %v451
        %v453 = vpop.f32.mrb[0].mxu0
        %v454 = vpop.f32.mrb[0].mxu0
        %v455 = vadd.f32 0.0, %v454
        %v456 = vpop.f32.mrb[0].mxu0
        %457 = vmatprep.mubr.bf16.mxu0 0
        %458 = vmatmul.mubr.bf16.gmra.mrb[0].mxu0 %v415
        %v459 = vpop.f32.mrb[0].mxu0
        %v460 = vadd.f32 0.0, %v459
        %v461 = vpop.f32.mrb[0].mxu0
        %v462 = vpop.f32.mrb[0].mxu0
        %v463 = vadd.f32 0.0, %v462
        %v464 = vpop.f32.mrb[0].mxu0
        %465 = vdwg.mxu0
        %v470 = vunpack.c.l.b16 %v355
        %v471 = vunpack.c.l.b16 %v356
        %v472 = vunpack.c.l.b16 %v357
        %v473 = vunpack.c.l.b16 %v358
        %v474 = vpack.c.b16 %v471, %v470
        %v475 = vpack.c.b16 %v473, %v472
        %v478 = vsel %vm410, %v374, 0
        %v480 = vsel %vm410, %v375, 0
        %482 = vmatprep.subr.bf16.mxu0 0
        %483 = vmatpush1.bf16.msra.mxu0 %v474
        %484 = vmatprep.subr.bf16.mxu0 0
        %485 = vmatpush1.bf16.msra.mxu0 %v475
        %486 = vmatprep.subr.bf16.mxu0 0
        %487 = vmatpush1.bf16.msra.mxu0 0
        %488 = vmatprep.subr.bf16.mxu0 0
        %489 = vmatpush1.bf16.msra.mxu0 0
        %490 = vmatprep.subr.bf16.mxu0 0
        %491 = vmatpush1.bf16.msra.mxu0 0
        %492 = vmatprep.subr.bf16.mxu0 0
        %493 = vmatpush1.bf16.msra.mxu0 0
        %494 = vmatprep.subr.bf16.mxu0 0
        %495 = vmatpush1.bf16.msra.mxu0 0
        %496 = vmatprep.subr.bf16.mxu0 0
        %497 = vmatpush1.bf16.msra.mxu0 0
        %498 = vmatprep.subr.bf16.mxu0 0
        %499 = vmatpush1.bf16.msra.mxu0 0
        %500 = vmatprep.subr.bf16.mxu0 0
        %501 = vmatpush1.bf16.msra.mxu0 0
        %502 = vmatprep.subr.bf16.mxu0 0
        %503 = vmatpush1.bf16.msra.mxu0 0
        %504 = vmatprep.subr.bf16.mxu0 0
        %505 = vmatpush1.bf16.msra.mxu0 0
        %506 = vmatprep.subr.bf16.mxu0 0
        %507 = vmatpush1.bf16.msra.mxu0 0
        %508 = vmatprep.subr.bf16.mxu0 0
        %509 = vmatpush1.bf16.msra.mxu0 0
        %510 = vmatprep.subr.bf16.mxu0 0
        %511 = vmatpush1.bf16.msra.mxu0 0
        %512 = vmatprep.subr.bf16.mxu0 0
        %513 = vmatpush1.bf16.msra.mxu0 0
        %514 = vmatprep.mubr.bf16.mxu0 0
        %515 = vmatmul.mubr.bf16.gmra.mrb[0].mxu0 %v478
        %v516 = vpop.f32.mrb[0].mxu0
        %v517 = vadd.f32 %v452, %v516
        %v518 = vpop.f32.mrb[0].mxu0
        %v519 = vpop.f32.mrb[0].mxu0
        %v520 = vadd.f32 %v455, %v519
        %v521 = vpop.f32.mrb[0].mxu0
        %522 = vmatprep.mubr.bf16.mxu0 0
        %523 = vmatmul.mubr.bf16.gmra.mrb[0].mxu0 %v480
        %v524 = vpop.f32.mrb[0].mxu0
        %v525 = vadd.f32 %v460, %v524
        %v526 = vpop.f32.mrb[0].mxu0
        %v527 = vpop.f32.mrb[0].mxu0
        %v528 = vadd.f32 %v463, %v527
        %v529 = vpop.f32.mrb[0].mxu0
        %530 = vdwg.mxu0
        %s531 = scalar_lea.vmem %s1, 32
        %v532 = vld [vmem:[%s531] sm:$0xf]
        %v533 = vld [vmem:[%s531 + $0x4] sm:$0xf]
        %v534 = vld [vmem:[%s531 + $0x8] sm:$0xf]
        %v535 = vld [vmem:[%s531 + $0xc] sm:$0xf]
        %vm536 = vcmask 1046528
        %v537 = vrot.slane %v374, 1
        %v538 = vrot.slane %v375, 1
        %v539 = vsel %vm536, %v537, %v538
        %v540 = vrot.slane %v376, 1
        %v541 = vsel %vm536, %v538, %v540
        %v546 = vunpack.c.l.b16 %v532
        %v547 = vunpack.c.l.b16 %v533
        %v548 = vunpack.c.l.b16 %v534
        %v549 = vunpack.c.l.b16 %v535
        %v550 = vpack.c.b16 %v547, %v546
        %v551 = vpack.c.b16 %v549, %v548
        %v555 = vsel %vm410, %v539, 0
        %v558 = vsel %vm410, %v541, 0
        %560 = vmatprep.subr.bf16.mxu0 0
        %561 = vmatpush1.bf16.msra.mxu0 %v550
        %562 = vmatprep.subr.bf16.mxu0 0
        %563 = vmatpush1.bf16.msra.mxu0 %v551
        %564 = vmatprep.subr.bf16.mxu0 0
        %565 = vmatpush1.bf16.msra.mxu0 0
        %566 = vmatprep.subr.bf16.mxu0 0
        %567 = vmatpush1.bf16.msra.mxu0 0
        %568 = vmatprep.subr.bf16.mxu0 0
        %569 = vmatpush1.bf16.msra.mxu0 0
        %570 = vmatprep.subr.bf16.mxu0 0
        %571 = vmatpush1.bf16.msra.mxu0 0
        %572 = vmatprep.subr.bf16.mxu0 0
        %573 = vmatpush1.bf16.msra.mxu0 0
        %574 = vmatprep.subr.bf16.mxu0 0
        %575 = vmatpush1.bf16.msra.mxu0 0
        %576 = vmatprep.subr.bf16.mxu0 0
        %577 = vmatpush1.bf16.msra.mxu0 0
        %578 = vmatprep.subr.bf16.mxu0 0
        %579 = vmatpush1.bf16.msra.mxu0 0
        %580 = vmatprep.subr.bf16.mxu0 0
        %581 = vmatpush1.bf16.msra.mxu0 0
        %582 = vmatprep.subr.bf16.mxu0 0
        %583 = vmatpush1.bf16.msra.mxu0 0
        %584 = vmatprep.subr.bf16.mxu0 0
        %585 = vmatpush1.bf16.msra.mxu0 0
        %586 = vmatprep.subr.bf16.mxu0 0
        %587 = vmatpush1.bf16.msra.mxu0 0
        %588 = vmatprep.subr.bf16.mxu0 0
        %589 = vmatpush1.bf16.msra.mxu0 0
        %590 = vmatprep.subr.bf16.mxu0 0
        %591 = vmatpush1.bf16.msra.mxu0 0
        %592 = vmatprep.mubr.bf16.mxu0 0
        %593 = vmatmul.mubr.bf16.gmra.mrb[0].mxu0 %v555
        %v594 = vpop.f32.mrb[0].mxu0
        %v595 = vadd.f32 0.0, %v594
        %v596 = vpop.f32.mrb[0].mxu0
        %v597 = vpop.f32.mrb[0].mxu0
        %v598 = vadd.f32 0.0, %v597
        %v599 = vpop.f32.mrb[0].mxu0
        %600 = vmatprep.mubr.bf16.mxu0 0
        %601 = vmatmul.mubr.bf16.gmra.mrb[0].mxu0 %v558
        %v602 = vpop.f32.mrb[0].mxu0
        %v603 = vadd.f32 0.0, %v602
        %v604 = vpop.f32.mrb[0].mxu0
        %v605 = vpop.f32.mrb[0].mxu0
        %v606 = vadd.f32 0.0, %v605
        %v607 = vpop.f32.mrb[0].mxu0
        %608 = vdwg.mxu0
        %v609 = vadd.f32 %v517, %v595
        %v610 = vadd.f32 %v520, %v598
        %v611 = vadd.f32 %v525, %v603
        %v612 = vadd.f32 %v528, %v606
        %s613 = scalar_lea.vmem %s1, 48
        %v614 = vld [vmem:[%s613] sm:$0xf]
        %v615 = vld [vmem:[%s613 + $0x4] sm:$0xf]
        %v616 = vld [vmem:[%s613 + $0x8] sm:$0xf]
        %v617 = vld [vmem:[%s613 + $0xc] sm:$0xf]
        %vm618 = vsmask.f32 6400
        %v619 = vrot.slane %v379, 1
        %v620 = vrot.slane %v381, 2
        %v621 = vor.u32 %v619, %v620
        %v622 = vrot.slane %v390, 1
        %v623 = vrot.slane %v386, 2
        %v624 = vor.u32 %v622, %v623
        %v625 = vsel %vm618, %v621, %v624
        %v626 = vshrl.u32 %v376, 16
        %v628 = vrot.slane %v626, 1
        %v629 = vrot.slane %v394, 2
        %v630 = vor.u32 %v628, %v629
        %v631 = vsel %vm618, %v624, %v630
        %v636 = vunpack.c.l.b16 %v614
        %v637 = vunpack.c.l.b16 %v615
        %v638 = vunpack.c.l.b16 %v616
        %v639 = vunpack.c.l.b16 %v617
        %v640 = vpack.c.b16 %v637, %v636
        %v641 = vpack.c.b16 %v639, %v638
        %v645 = vsel %vm410, %v625, 0
        %v648 = vsel %vm410, %v631, 0
        %650 = vmatprep.subr.bf16.mxu0 0
        %651 = vmatpush1.bf16.msra.mxu0 %v640
        %652 = vmatprep.subr.bf16.mxu0 0
        %653 = vmatpush1.bf16.msra.mxu0 %v641
        %654 = vmatprep.subr.bf16.mxu0 0
        %655 = vmatpush1.bf16.msra.mxu0 0
        %656 = vmatprep.subr.bf16.mxu0 0
        %657 = vmatpush1.bf16.msra.mxu0 0
        %658 = vmatprep.subr.bf16.mxu0 0
        %659 = vmatpush1.bf16.msra.mxu0 0
        %660 = vmatprep.subr.bf16.mxu0 0
        %661 = vmatpush1.bf16.msra.mxu0 0
        %662 = vmatprep.subr.bf16.mxu0 0
        %663 = vmatpush1.bf16.msra.mxu0 0
        %664 = vmatprep.subr.bf16.mxu0 0
        %665 = vmatpush1.bf16.msra.mxu0 0
        %666 = vmatprep.subr.bf16.mxu0 0
        %667 = vmatpush1.bf16.msra.mxu0 0
        %668 = vmatprep.subr.bf16.mxu0 0
        %669 = vmatpush1.bf16.msra.mxu0 0
        %670 = vmatprep.subr.bf16.mxu0 0
        %671 = vmatpush1.bf16.msra.mxu0 0
        %672 = vmatprep.subr.bf16.mxu0 0
        %673 = vmatpush1.bf16.msra.mxu0 0
        %674 = vmatprep.subr.bf16.mxu0 0
        %675 = vmatpush1.bf16.msra.mxu0 0
        %676 = vmatprep.subr.bf16.mxu0 0
        %677 = vmatpush1.bf16.msra.mxu0 0
        %678 = vmatprep.subr.bf16.mxu0 0
        %679 = vmatpush1.bf16.msra.mxu0 0
        %680 = vmatprep.subr.bf16.mxu0 0
        %681 = vmatpush1.bf16.msra.mxu0 0
        %682 = vmatprep.mubr.bf16.mxu0 0
        %683 = vmatmul.mubr.bf16.gmra.mrb[0].mxu0 %v645
        %v684 = vpop.f32.mrb[0].mxu0
        %v685 = vadd.f32 0.0, %v684
        %v686 = vpop.f32.mrb[0].mxu0
        %v687 = vpop.f32.mrb[0].mxu0
        %v688 = vadd.f32 0.0, %v687
        %v689 = vpop.f32.mrb[0].mxu0
        %690 = vmatprep.mubr.bf16.mxu0 0
        %691 = vmatmul.mubr.bf16.gmra.mrb[0].mxu0 %v648
        %v692 = vpop.f32.mrb[0].mxu0
        %v693 = vadd.f32 0.0, %v692
        %v694 = vpop.f32.mrb[0].mxu0
        %v695 = vpop.f32.mrb[0].mxu0
        %v696 = vadd.f32 0.0, %v695
        %v697 = vpop.f32.mrb[0].mxu0
        %698 = vdwg.mxu0
        %v699 = vadd.f32 %v609, %v685
        %v700 = vadd.f32 %v610, %v688
        %v701 = vadd.f32 %v611, %v693
        %v702 = vadd.f32 %v612, %v696
        %s703 = scalar_lea.vmem %s1, 64
        %v704 = vld [vmem:[%s703] sm:$0xf]
        %v705 = vld [vmem:[%s703 + $0x4] sm:$0xf]
        %v706 = vld [vmem:[%s703 + $0x8] sm:$0xf]
        %v707 = vld [vmem:[%s703 + $0xc] sm:$0xf]
        %vm708 = vcmask 1045504
        %v709 = vrot.slane %v374, 2
        %v710 = vrot.slane %v375, 2
        %v711 = vsel %vm708, %v709, %v710
        %v712 = vrot.slane %v376, 2
        %v713 = vsel %vm708, %v710, %v712
        %v718 = vunpack.c.l.b16 %v704
        %v719 = vunpack.c.l.b16 %v705
        %v720 = vunpack.c.l.b16 %v706
        %v721 = vunpack.c.l.b16 %v707
        %v722 = vpack.c.b16 %v719, %v718
        %v723 = vpack.c.b16 %v721, %v720
        %v727 = vsel %vm410, %v711, 0
        %v730 = vsel %vm410, %v713, 0
        %732 = vmatprep.subr.bf16.mxu0 0
        %733 = vmatpush1.bf16.msra.mxu0 %v722
        %734 = vmatprep.subr.bf16.mxu0 0
        %735 = vmatpush1.bf16.msra.mxu0 %v723
        %736 = vmatprep.subr.bf16.mxu0 0
        %737 = vmatpush1.bf16.msra.mxu0 0
        %738 = vmatprep.subr.bf16.mxu0 0
        %739 = vmatpush1.bf16.msra.mxu0 0
        %740 = vmatprep.subr.bf16.mxu0 0
        %741 = vmatpush1.bf16.msra.mxu0 0
        %742 = vmatprep.subr.bf16.mxu0 0
        %743 = vmatpush1.bf16.msra.mxu0 0
        %744 = vmatprep.subr.bf16.mxu0 0
        %745 = vmatpush1.bf16.msra.mxu0 0
        %746 = vmatprep.subr.bf16.mxu0 0
        %747 = vmatpush1.bf16.msra.mxu0 0
        %748 = vmatprep.subr.bf16.mxu0 0
        %749 = vmatpush1.bf16.msra.mxu0 0
        %750 = vmatprep.subr.bf16.mxu0 0
        %751 = vmatpush1.bf16.msra.mxu0 0
        %752 = vmatprep.subr.bf16.mxu0 0
        %753 = vmatpush1.bf16.msra.mxu0 0
        %754 = vmatprep.subr.bf16.mxu0 0
        %755 = vmatpush1.bf16.msra.mxu0 0
        %756 = vmatprep.subr.bf16.mxu0 0
        %757 = vmatpush1.bf16.msra.mxu0 0
        %758 = vmatprep.subr.bf16.mxu0 0
        %759 = vmatpush1.bf16.msra.mxu0 0
        %760 = vmatprep.subr.bf16.mxu0 0
        %761 = vmatpush1.bf16.msra.mxu0 0
        %762 = vmatprep.subr.bf16.mxu0 0
        %763 = vmatpush1.bf16.msra.mxu0 0
        %764 = vmatprep.mubr.bf16.mxu0 0
        %765 = vmatmul.mubr.bf16.gmra.mrb[0].mxu0 %v727
        %v766 = vpop.f32.mrb[0].mxu0
        %v767 = vadd.f32 0.0, %v766
        %v768 = vpop.f32.mrb[0].mxu0
        %v769 = vpop.f32.mrb[0].mxu0
        %v770 = vadd.f32 0.0, %v769
        %v771 = vpop.f32.mrb[0].mxu0
        %772 = vmatprep.mubr.bf16.mxu0 0
        %773 = vmatmul.mubr.bf16.gmra.mrb[0].mxu0 %v730
        %v774 = vpop.f32.mrb[0].mxu0
        %v775 = vadd.f32 0.0, %v774
        %v776 = vpop.f32.mrb[0].mxu0
        %v777 = vpop.f32.mrb[0].mxu0
        %v778 = vadd.f32 0.0, %v777
        %v779 = vpop.f32.mrb[0].mxu0
        %780 = vdwg.mxu0
        %v781 = vadd.f32 %v699, %v767
        %v782 = vadd.f32 %v700, %v770
        %v783 = vadd.f32 %v701, %v775
        %v784 = vadd.f32 %v702, %v778
        %v785 = vld [vmem:[%s3] sm:$0x1]
        %v787 = vlaneseq
        %v788 = vshrl.u32 %v787, 7
        %v789 = vsub.s32 0, %v788
        %v790 = vrot.slane %v785, %v789
        %v792 = vadd.f32 %v781, %v790
        %v793 = vadd.f32 %v782, %v790
        %v794 = vadd.f32 %v783, %v790
        %v795 = vadd.f32 %v784, %v790
        %v796 = vmax.f32 %v792, 0.0
        %v797 = vmax.f32 %v793, 0.0
        %v798 = vmax.f32 %v794, 0.0
        %v799 = vmax.f32 %v795, 0.0
        %v800 = vsel %vm410, %v796, 0.0
        %801 = vadd.xlane.f32.xlu0 %v800
        %v802 = vpop.xlane.xlu0 %801
        %v803 = vsel %vm410, %v797, 0.0
        %804 = vadd.xlane.f32.xlu0 %v803
        %v805 = vpop.xlane.xlu0 %804
        %v806 = vsel %vm410, %v798, 0.0
        %807 = vadd.xlane.f32.xlu0 %v806
        %v808 = vpop.xlane.xlu0 %807
        %v809 = vsel %vm410, %v799, 0.0
        %810 = vadd.xlane.f32.xlu0 %v809
        %v811 = vpop.xlane.xlu0 %810
        %v812 = vmul.f32 %v802, 0.03125
        %v813 = vmul.f32 %v805, 0.03125
        %v814 = vmul.f32 %v808, 0.03125
        %v815 = vmul.f32 %v811, 0.03125
        %v816 = vmul.f32 %v796, %v796
        %v817 = vmul.f32 %v797, %v797
        %v818 = vmul.f32 %v798, %v798
        %v819 = vmul.f32 %v799, %v799
        %v820 = vsel %vm410, %v816, 0.0
        %821 = vadd.xlane.f32.xlu0 %v820
        %v822 = vpop.xlane.xlu0 %821
        %v823 = vsel %vm410, %v817, 0.0
        %824 = vadd.xlane.f32.xlu0 %v823
        %v825 = vpop.xlane.xlu0 %824
        %v826 = vsel %vm410, %v818, 0.0
        %827 = vadd.xlane.f32.xlu0 %v826
        %v828 = vpop.xlane.xlu0 %827
        %v829 = vsel %vm410, %v819, 0.0
        %830 = vadd.xlane.f32.xlu0 %v829
        %v831 = vpop.xlane.xlu0 %830
        %v832 = vmul.f32 %v822, 0.03125
        %v833 = vmul.f32 %v825, 0.03125
        %v834 = vmul.f32 %v828, 0.03125
        %v835 = vmul.f32 %v831, 0.03125
        %v836 = vmul.f32 %v812, %v812
        %v837 = vmul.f32 %v813, %v813
        %v838 = vmul.f32 %v814, %v814
        %v839 = vmul.f32 %v815, %v815
        %v840 = vsub.f32 %v832, %v836
        %v841 = vsub.f32 %v833, %v837
        %v842 = vsub.f32 %v834, %v838
        %v843 = vsub.f32 %v835, %v839
        %v844 = vmax.f32 %v840, 0.0
        %v845 = vmax.f32 %v841, 0.0
        %v846 = vmax.f32 %v842, 0.0
        %v847 = vmax.f32 %v843, 0.0
        %v848 = vsub.f32 %v796, %v812
        %v849 = vsub.f32 %v797, %v813
        %v850 = vsub.f32 %v798, %v814
        %v851 = vsub.f32 %v799, %v815
        %v852 = vadd.f32 %v844, 1e-05
        %v853 = vadd.f32 %v845, 1e-05
        %v854 = vadd.f32 %v846, 1e-05
        %v855 = vadd.f32 %v847, 1e-05
        %v856 = vrsqrt.pop %v852
        %v857 = vrsqrt.pop %v853
        %v858 = vrsqrt.pop %v854
        %v859 = vrsqrt.pop %v855
        %v860 = vmul.f32 %v848, %v856
        %v861 = vmul.f32 %v849, %v857
        %v862 = vmul.f32 %v850, %v858
        %v863 = vmul.f32 %v851, %v859
        %v864 = vld [vmem:[%s4] sm:$0x1]
        %v866 = vlaneseq
        %v867 = vshrl.u32 %v866, 7
        %v868 = vsub.s32 0, %v867
        %v869 = vrot.slane %v864, %v868
        %v871 = vmul.f32 %v860, %v869
        %v872 = vmul.f32 %v861, %v869
        %v873 = vmul.f32 %v862, %v869
        %v874 = vmul.f32 %v863, %v869
        %v875 = vld [vmem:[%s5] sm:$0x1]
        %v877 = vlaneseq
        %v878 = vshrl.u32 %v877, 7
        %v879 = vsub.s32 0, %v878
        %v880 = vrot.slane %v875, %v879
        %v882 = vadd.f32 %v871, %v880
        %v883 = vadd.f32 %v872, %v880
        %v884 = vadd.f32 %v873, %v880
        %v885 = vadd.f32 %v874, %v880
        %s886 = ssub.s32 %s345, 8
        %v887 = vlaneseq
        %v888 = vshrl.u32 %v887, 7
        %v889 = vadd.s32 %v888, 8
        %v890 = vadd.s32 %v888, 16
        %v891 = vadd.s32 %v888, 24
        %v892 = vstv %s886
        %v893 = vadd.s32 %v888, %v892
        %v894 = vadd.s32 %v889, %v892
        %v895 = vadd.s32 %v890, %v892
        %v896 = vadd.s32 %v891, %v892
        %vm897 = vcmp.ge.s32.totalorder %v893, 0
        %vm898 = vcmp.ge.s32.totalorder %v894, 0
        %vm899 = vcmp.ge.s32.totalorder %v895, 0
        %vm900 = vcmp.ge.s32.totalorder %v896, 0
        %vm901 = vcmp.lt.s32.totalorder %v893, 16
        %vm902 = vcmp.lt.s32.totalorder %v894, 16
        %vm903 = vcmp.lt.s32.totalorder %v895, 16
        %vm904 = vcmp.lt.s32.totalorder %v896, 16
        %vm905 = vmand %vm897, %vm901
        %vm906 = vmand %vm898, %vm902
        %vm907 = vmand %vm899, %vm903
        %vm908 = vmand %vm900, %vm904
        %v909 = vsel %vm905, 1, 0
        %v910 = vsel %vm906, 1, 0
        %v911 = vsel %vm907, 1, 0
        %v912 = vsel %vm908, 1, 0
        %v913 = vcvt.s32.f32 %v909
        %v914 = vcvt.s32.f32 %v910
        %v915 = vcvt.s32.f32 %v911
        %v916 = vcvt.s32.f32 %v912
        %v917 = vmul.f32 %v882, %v913
        %v918 = vmul.f32 %v883, %v914
        %v919 = vmul.f32 %v884, %v915
        %v920 = vmul.f32 %v885, %v916
        %v921 = vpack.c.bf16 %v918, %v917
        %v922 = vpack.c.bf16 %v920, %v919
        %v923 = vld [vmem:[#allocation2] sm:$0xf]
        %v924 = vld [vmem:[#allocation2 + $0x4] sm:$0xf]
        %v925 = vld [vmem:[#allocation2 + $0x8] sm:$0xf]
        %v926 = vld [vmem:[#allocation2 + $0xc] sm:$0xf]
        %s927 = scalar_lea.vmem [#allocation2], 16
        %v928 = vld [vmem:[%s927] sm:$0xf]
        %v929 = vld [vmem:[%s927 + $0x4] sm:$0xf]
        %v930 = vld [vmem:[%s927 + $0x8] sm:$0xf]
        %v931 = vld [vmem:[%s927 + $0xc] sm:$0xf]
        %v933 = vshrl.u32 %v921, 16
        %v935 = vshll.u32 %v921, 16
        %v937 = vrot.slane %v935, 1
        %v938 = vor.u32 %v933, %v937
        %v940 = vshll.u32 %v922, 16
        %v942 = vrot.slane %v940, 1
        %v943 = vsel %vm377, %v938, %v942
        %v944 = vshrl.u32 %v922, 16
        %v946 = vor.u32 %v944, %v942
        %v951 = vunpack.c.l.b16 %v928
        %v952 = vunpack.c.l.b16 %v929
        %v953 = vunpack.c.l.b16 %v930
        %v954 = vunpack.c.l.b16 %v931
        %v955 = vpack.c.b16 %v952, %v951
        %v956 = vpack.c.b16 %v954, %v953
        %v960 = vsel %vm410, %v943, 0
        %v963 = vsel %vm410, %v946, 0
        %965 = vmatprep.subr.bf16.mxu0 0
        %966 = vmatpush1.bf16.msra.mxu0 %v955
        %967 = vmatprep.subr.bf16.mxu0 0
        %968 = vmatpush1.bf16.msra.mxu0 %v956
        %969 = vmatprep.subr.bf16.mxu0 0
        %970 = vmatpush1.bf16.msra.mxu0 0
        %971 = vmatprep.subr.bf16.mxu0 0
        %972 = vmatpush1.bf16.msra.mxu0 0
        %973 = vmatprep.subr.bf16.mxu0 0
        %974 = vmatpush1.bf16.msra.mxu0 0
        %975 = vmatprep.subr.bf16.mxu0 0
        %976 = vmatpush1.bf16.msra.mxu0 0
        %977 = vmatprep.subr.bf16.mxu0 0
        %978 = vmatpush1.bf16.msra.mxu0 0
        %979 = vmatprep.subr.bf16.mxu0 0
        %980 = vmatpush1.bf16.msra.mxu0 0
        %981 = vmatprep.subr.bf16.mxu0 0
        %982 = vmatpush1.bf16.msra.mxu0 0
        %983 = vmatprep.subr.bf16.mxu0 0
        %984 = vmatpush1.bf16.msra.mxu0 0
        %985 = vmatprep.subr.bf16.mxu0 0
        %986 = vmatpush1.bf16.msra.mxu0 0
        %987 = vmatprep.subr.bf16.mxu0 0
        %988 = vmatpush1.bf16.msra.mxu0 0
        %989 = vmatprep.subr.bf16.mxu0 0
        %990 = vmatpush1.bf16.msra.mxu0 0
        %991 = vmatprep.subr.bf16.mxu0 0
        %992 = vmatpush1.bf16.msra.mxu0 0
        %993 = vmatprep.subr.bf16.mxu0 0
        %994 = vmatpush1.bf16.msra.mxu0 0
        %995 = vmatprep.subr.bf16.mxu0 0
        %996 = vmatpush1.bf16.msra.mxu0 0
        %997 = vmatprep.mubr.bf16.mxu0 0
        %998 = vmatmul.mubr.bf16.gmra.mrb[0].mxu0 %v960
        %v999 = vpop.f32.mrb[0].mxu0
        %v1000 = vadd.f32 0.0, %v999
        %v1001 = vpop.f32.mrb[0].mxu0
        %v1002 = vpop.f32.mrb[0].mxu0
        %v1003 = vadd.f32 0.0, %v1002
        %v1004 = vpop.f32.mrb[0].mxu0
        %1005 = vmatprep.mubr.bf16.mxu0 0
        %1006 = vmatmul.mubr.bf16.gmra.mrb[0].mxu0 %v963
        %v1007 = vpop.f32.mrb[0].mxu0
        %v1008 = vadd.f32 0.0, %v1007
        %v1009 = vpop.f32.mrb[0].mxu0
        %v1010 = vpop.f32.mrb[0].mxu0
        %v1011 = vadd.f32 0.0, %v1010
        %v1012 = vpop.f32.mrb[0].mxu0
        %1013 = vdwg.mxu0
        %v1018 = vunpack.c.l.b16 %v923
        %v1019 = vunpack.c.l.b16 %v924
        %v1020 = vunpack.c.l.b16 %v925
        %v1021 = vunpack.c.l.b16 %v926
        %v1022 = vpack.c.b16 %v1019, %v1018
        %v1023 = vpack.c.b16 %v1021, %v1020
        %v1026 = vsel %vm410, %v921, 0
        %v1028 = vsel %vm410, %v922, 0
        %1030 = vmatprep.subr.bf16.mxu0 0
        %1031 = vmatpush1.bf16.msra.mxu0 %v1022
        %1032 = vmatprep.subr.bf16.mxu0 0
        %1033 = vmatpush1.bf16.msra.mxu0 %v1023
        %1034 = vmatprep.subr.bf16.mxu0 0
        %1035 = vmatpush1.bf16.msra.mxu0 0
        %1036 = vmatprep.subr.bf16.mxu0 0
        %1037 = vmatpush1.bf16.msra.mxu0 0
        %1038 = vmatprep.subr.bf16.mxu0 0
        %1039 = vmatpush1.bf16.msra.mxu0 0
        %1040 = vmatprep.subr.bf16.mxu0 0
        %1041 = vmatpush1.bf16.msra.mxu0 0
        %1042 = vmatprep.subr.bf16.mxu0 0
        %1043 = vmatpush1.bf16.msra.mxu0 0
        %1044 = vmatprep.subr.bf16.mxu0 0
        %1045 = vmatpush1.bf16.msra.mxu0 0
        %1046 = vmatprep.subr.bf16.mxu0 0
        %1047 = vmatpush1.bf16.msra.mxu0 0
        %1048 = vmatprep.subr.bf16.mxu0 0
        %1049 = vmatpush1.bf16.msra.mxu0 0
        %1050 = vmatprep.subr.bf16.mxu0 0
        %1051 = vmatpush1.bf16.msra.mxu0 0
        %1052 = vmatprep.subr.bf16.mxu0 0
        %1053 = vmatpush1.bf16.msra.mxu0 0
        %1054 = vmatprep.subr.bf16.mxu0 0
        %1055 = vmatpush1.bf16.msra.mxu0 0
        %1056 = vmatprep.subr.bf16.mxu0 0
        %1057 = vmatpush1.bf16.msra.mxu0 0
        %1058 = vmatprep.subr.bf16.mxu0 0
        %1059 = vmatpush1.bf16.msra.mxu0 0
        %1060 = vmatprep.subr.bf16.mxu0 0
        %1061 = vmatpush1.bf16.msra.mxu0 0
        %1062 = vmatprep.mubr.bf16.mxu0 0
        %1063 = vmatmul.mubr.bf16.gmra.mrb[0].mxu0 %v1026
        %v1064 = vpop.f32.mrb[0].mxu0
        %v1065 = vadd.f32 %v1000, %v1064
        %v1066 = vpop.f32.mrb[0].mxu0
        %v1067 = vpop.f32.mrb[0].mxu0
        %v1068 = vadd.f32 %v1003, %v1067
        %v1069 = vpop.f32.mrb[0].mxu0
        %1070 = vmatprep.mubr.bf16.mxu0 0
        %1071 = vmatmul.mubr.bf16.gmra.mrb[0].mxu0 %v1028
        %v1072 = vpop.f32.mrb[0].mxu0
        %v1073 = vadd.f32 %v1008, %v1072
        %v1074 = vpop.f32.mrb[0].mxu0
        %v1075 = vpop.f32.mrb[0].mxu0
        %v1076 = vadd.f32 %v1011, %v1075
        %v1077 = vpop.f32.mrb[0].mxu0
        %1078 = vdwg.mxu0
        %s1079 = scalar_lea.vmem [#allocation2], 32
        %v1080 = vld [vmem:[%s1079] sm:$0xf]
        %v1081 = vld [vmem:[%s1079 + $0x4] sm:$0xf]
        %v1082 = vld [vmem:[%s1079 + $0x8] sm:$0xf]
        %v1083 = vld [vmem:[%s1079 + $0xc] sm:$0xf]
        %v1086 = vrot.slane %v921, 1
        %v1087 = vrot.slane %v922, 1
        %v1088 = vsel %vm536, %v1086, %v1087
        %v1093 = vunpack.c.l.b16 %v1080
        %v1094 = vunpack.c.l.b16 %v1081
        %v1095 = vunpack.c.l.b16 %v1082
        %v1096 = vunpack.c.l.b16 %v1083
        %v1097 = vpack.c.b16 %v1094, %v1093
        %v1098 = vpack.c.b16 %v1096, %v1095
        %v1102 = vsel %vm410, %v1088, 0
        %v1105 = vsel %vm410, %v1087, 0
        %1107 = vmatprep.subr.bf16.mxu0 0
        %1108 = vmatpush1.bf16.msra.mxu0 %v1097
        %1109 = vmatprep.subr.bf16.mxu0 0
        %1110 = vmatpush1.bf16.msra.mxu0 %v1098
        %1111 = vmatprep.subr.bf16.mxu0 0
        %1112 = vmatpush1.bf16.msra.mxu0 0
        %1113 = vmatprep.subr.bf16.mxu0 0
        %1114 = vmatpush1.bf16.msra.mxu0 0
        %1115 = vmatprep.subr.bf16.mxu0 0
        %1116 = vmatpush1.bf16.msra.mxu0 0
        %1117 = vmatprep.subr.bf16.mxu0 0
        %1118 = vmatpush1.bf16.msra.mxu0 0
        %1119 = vmatprep.subr.bf16.mxu0 0
        %1120 = vmatpush1.bf16.msra.mxu0 0
        %1121 = vmatprep.subr.bf16.mxu0 0
        %1122 = vmatpush1.bf16.msra.mxu0 0
        %1123 = vmatprep.subr.bf16.mxu0 0
        %1124 = vmatpush1.bf16.msra.mxu0 0
        %1125 = vmatprep.subr.bf16.mxu0 0
        %1126 = vmatpush1.bf16.msra.mxu0 0
        %1127 = vmatprep.subr.bf16.mxu0 0
        %1128 = vmatpush1.bf16.msra.mxu0 0
        %1129 = vmatprep.subr.bf16.mxu0 0
        %1130 = vmatpush1.bf16.msra.mxu0 0
        %1131 = vmatprep.subr.bf16.mxu0 0
        %1132 = vmatpush1.bf16.msra.mxu0 0
        %1133 = vmatprep.subr.bf16.mxu0 0
        %1134 = vmatpush1.bf16.msra.mxu0 0
        %1135 = vmatprep.subr.bf16.mxu0 0
        %1136 = vmatpush1.bf16.msra.mxu0 0
        %1137 = vmatprep.subr.bf16.mxu0 0
        %1138 = vmatpush1.bf16.msra.mxu0 0
        %1139 = vmatprep.mubr.bf16.mxu0 0
        %1140 = vmatmul.mubr.bf16.gmra.mrb[0].mxu0 %v1102
        %v1141 = vpop.f32.mrb[0].mxu0
        %v1142 = vadd.f32 0.0, %v1141
        %v1143 = vpop.f32.mrb[0].mxu0
        %v1144 = vpop.f32.mrb[0].mxu0
        %v1145 = vadd.f32 0.0, %v1144
        %v1146 = vpop.f32.mrb[0].mxu0
        %1147 = vmatprep.mubr.bf16.mxu0 0
        %1148 = vmatmul.mubr.bf16.gmra.mrb[0].mxu0 %v1105
        %v1149 = vpop.f32.mrb[0].mxu0
        %v1150 = vadd.f32 0.0, %v1149
        %v1151 = vpop.f32.mrb[0].mxu0
        %v1152 = vpop.f32.mrb[0].mxu0
        %v1153 = vadd.f32 0.0, %v1152
        %v1154 = vpop.f32.mrb[0].mxu0
        %1155 = vdwg.mxu0
        %v1156 = vadd.f32 %v1065, %v1142
        %v1157 = vadd.f32 %v1068, %v1145
        %v1158 = vadd.f32 %v1073, %v1150
        %v1159 = vadd.f32 %v1076, %v1153
        %s1160 = scalar_lea.vmem [#allocation2], 48
        %v1161 = vld [vmem:[%s1160] sm:$0xf]
        %v1162 = vld [vmem:[%s1160 + $0x4] sm:$0xf]
        %v1163 = vld [vmem:[%s1160 + $0x8] sm:$0xf]
        %v1164 = vld [vmem:[%s1160 + $0xc] sm:$0xf]
        %v1165 = vrot.slane %v933, 1
        %v1166 = vrot.slane %v935, 2
        %v1167 = vor.u32 %v1165, %v1166
        %v1168 = vrot.slane %v944, 1
        %v1169 = vrot.slane %v940, 2
        %v1170 = vor.u32 %v1168, %v1169
        %v1171 = vsel %vm618, %v1167, %v1170
        %v1176 = vunpack.c.l.b16 %v1161
        %v1177 = vunpack.c.l.b16 %v1162
        %v1178 = vunpack.c.l.b16 %v1163
        %v1179 = vunpack.c.l.b16 %v1164
        %v1180 = vpack.c.b16 %v1177, %v1176
        %v1181 = vpack.c.b16 %v1179, %v1178
        %v1185 = vsel %vm410, %v1171, 0
        %v1188 = vsel %vm410, %v1170, 0
        %1190 = vmatprep.subr.bf16.mxu0 0
        %1191 = vmatpush1.bf16.msra.mxu0 %v1180
        %1192 = vmatprep.subr.bf16.mxu0 0
        %1193 = vmatpush1.bf16.msra.mxu0 %v1181
        %1194 = vmatprep.subr.bf16.mxu0 0
        %1195 = vmatpush1.bf16.msra.mxu0 0
        %1196 = vmatprep.subr.bf16.mxu0 0
        %1197 = vmatpush1.bf16.msra.mxu0 0
        %1198 = vmatprep.subr.bf16.mxu0 0
        %1199 = vmatpush1.bf16.msra.mxu0 0
        %1200 = vmatprep.subr.bf16.mxu0 0
        %1201 = vmatpush1.bf16.msra.mxu0 0
        %1202 = vmatprep.subr.bf16.mxu0 0
        %1203 = vmatpush1.bf16.msra.mxu0 0
        %1204 = vmatprep.subr.bf16.mxu0 0
        %1205 = vmatpush1.bf16.msra.mxu0 0
        %1206 = vmatprep.subr.bf16.mxu0 0
        %1207 = vmatpush1.bf16.msra.mxu0 0
        %1208 = vmatprep.subr.bf16.mxu0 0
        %1209 = vmatpush1.bf16.msra.mxu0 0
        %1210 = vmatprep.subr.bf16.mxu0 0
        %1211 = vmatpush1.bf16.msra.mxu0 0
        %1212 = vmatprep.subr.bf16.mxu0 0
        %1213 = vmatpush1.bf16.msra.mxu0 0
        %1214 = vmatprep.subr.bf16.mxu0 0
        %1215 = vmatpush1.bf16.msra.mxu0 0
        %1216 = vmatprep.subr.bf16.mxu0 0
        %1217 = vmatpush1.bf16.msra.mxu0 0
        %1218 = vmatprep.subr.bf16.mxu0 0
        %1219 = vmatpush1.bf16.msra.mxu0 0
        %1220 = vmatprep.subr.bf16.mxu0 0
        %1221 = vmatpush1.bf16.msra.mxu0 0
        %1222 = vmatprep.mubr.bf16.mxu0 0
        %1223 = vmatmul.mubr.bf16.gmra.mrb[0].mxu0 %v1185
        %v1224 = vpop.f32.mrb[0].mxu0
        %v1225 = vadd.f32 0.0, %v1224
        %v1226 = vpop.f32.mrb[0].mxu0
        %v1227 = vpop.f32.mrb[0].mxu0
        %v1228 = vadd.f32 0.0, %v1227
        %v1229 = vpop.f32.mrb[0].mxu0
        %1230 = vmatprep.mubr.bf16.mxu0 0
        %1231 = vmatmul.mubr.bf16.gmra.mrb[0].mxu0 %v1188
        %v1232 = vpop.f32.mrb[0].mxu0
        %v1233 = vadd.f32 0.0, %v1232
        %v1234 = vpop.f32.mrb[0].mxu0
        %v1235 = vpop.f32.mrb[0].mxu0
        %v1236 = vadd.f32 0.0, %v1235
        %v1237 = vpop.f32.mrb[0].mxu0
        %1238 = vdwg.mxu0
        %v1239 = vadd.f32 %v1156, %v1225
        %v1240 = vadd.f32 %v1157, %v1228
        %v1241 = vadd.f32 %v1158, %v1233
        %v1242 = vadd.f32 %v1159, %v1236
        %s1243 = scalar_lea.vmem [#allocation2], 64
        %v1244 = vld [vmem:[%s1243] sm:$0xf]
        %v1245 = vld [vmem:[%s1243 + $0x4] sm:$0xf]
        %v1246 = vld [vmem:[%s1243 + $0x8] sm:$0xf]
        %v1247 = vld [vmem:[%s1243 + $0xc] sm:$0xf]
        %v1248 = vrot.slane %v921, 2
        %v1249 = vrot.slane %v922, 2
        %v1250 = vsel %vm708, %v1248, %v1249
        %v1255 = vunpack.c.l.b16 %v1244
        %v1256 = vunpack.c.l.b16 %v1245
        %v1257 = vunpack.c.l.b16 %v1246
        %v1258 = vunpack.c.l.b16 %v1247
        %v1259 = vpack.c.b16 %v1256, %v1255
        %v1260 = vpack.c.b16 %v1258, %v1257
        %v1264 = vsel %vm410, %v1250, 0
        %v1267 = vsel %vm410, %v1249, 0
        %1269 = vmatprep.subr.bf16.mxu0 0
        %1270 = vmatpush1.bf16.msra.mxu0 %v1259
        %1271 = vmatprep.subr.bf16.mxu0 0
        %1272 = vmatpush1.bf16.msra.mxu0 %v1260
        %1273 = vmatprep.subr.bf16.mxu0 0
        %1274 = vmatpush1.bf16.msra.mxu0 0
        %1275 = vmatprep.subr.bf16.mxu0 0
        %1276 = vmatpush1.bf16.msra.mxu0 0
        %1277 = vmatprep.subr.bf16.mxu0 0
        %1278 = vmatpush1.bf16.msra.mxu0 0
        %1279 = vmatprep.subr.bf16.mxu0 0
        %1280 = vmatpush1.bf16.msra.mxu0 0
        %1281 = vmatprep.subr.bf16.mxu0 0
        %1282 = vmatpush1.bf16.msra.mxu0 0
        %1283 = vmatprep.subr.bf16.mxu0 0
        %1284 = vmatpush1.bf16.msra.mxu0 0
        %1285 = vmatprep.subr.bf16.mxu0 0
        %1286 = vmatpush1.bf16.msra.mxu0 0
        %1287 = vmatprep.subr.bf16.mxu0 0
        %1288 = vmatpush1.bf16.msra.mxu0 0
        %1289 = vmatprep.subr.bf16.mxu0 0
        %1290 = vmatpush1.bf16.msra.mxu0 0
        %1291 = vmatprep.subr.bf16.mxu0 0
        %1292 = vmatpush1.bf16.msra.mxu0 0
        %1293 = vmatprep.subr.bf16.mxu0 0
        %1294 = vmatpush1.bf16.msra.mxu0 0
        %1295 = vmatprep.subr.bf16.mxu0 0
        %1296 = vmatpush1.bf16.msra.mxu0 0
        %1297 = vmatprep.subr.bf16.mxu0 0
        %1298 = vmatpush1.bf16.msra.mxu0 0
        %1299 = vmatprep.subr.bf16.mxu0 0
        %1300 = vmatpush1.bf16.msra.mxu0 0
        %1301 = vmatprep.mubr.bf16.mxu0 0
        %1302 = vmatmul.mubr.bf16.gmra.mrb[0].mxu0 %v1264
        %v1303 = vpop.f32.mrb[0].mxu0
        %v1304 = vadd.f32 0.0, %v1303
        %v1305 = vpop.f32.mrb[0].mxu0
        %v1306 = vpop.f32.mrb[0].mxu0
        %v1307 = vadd.f32 0.0, %v1306
        %v1308 = vpop.f32.mrb[0].mxu0
        %1309 = vmatprep.mubr.bf16.mxu0 0
        %1310 = vmatmul.mubr.bf16.gmra.mrb[0].mxu0 %v1267
        %v1311 = vpop.f32.mrb[0].mxu0
        %v1312 = vadd.f32 0.0, %v1311
        %v1313 = vpop.f32.mrb[0].mxu0
        %v1314 = vpop.f32.mrb[0].mxu0
        %v1315 = vadd.f32 0.0, %v1314
        %v1316 = vpop.f32.mrb[0].mxu0
        %1317 = vdwg.mxu0
        %v1318 = vadd.f32 %v1239, %v1304
        %v1319 = vadd.f32 %v1240, %v1307
        %v1320 = vadd.f32 %v1241, %v1312
        %v1321 = vadd.f32 %v1242, %v1315
        %s1322 = scalar_lea.vmem %s3, 1
        %v1323 = vld [vmem:[%s1322] sm:$0x1]
        %v1325 = vlaneseq
        %v1326 = vshrl.u32 %v1325, 7
        %v1327 = vsub.s32 0, %v1326
        %v1328 = vrot.slane %v1323, %v1327
        %v1330 = vadd.f32 %v1318, %v1328
        %v1331 = vadd.f32 %v1319, %v1328
        %v1332 = vadd.f32 %v1320, %v1328
        %v1333 = vadd.f32 %v1321, %v1328
        %v1334 = vmax.f32 %v1330, 0.0
        %v1335 = vmax.f32 %v1331, 0.0
        %v1336 = vmax.f32 %v1332, 0.0
        %v1337 = vmax.f32 %v1333, 0.0
        %v1338 = vsel %vm410, %v1334, 0.0
        %1339 = vadd.xlane.f32.xlu0 %v1338
        %v1340 = vpop.xlane.xlu0 %1339
        %v1341 = vsel %vm410, %v1335, 0.0
        %1342 = vadd.xlane.f32.xlu0 %v1341
        %v1343 = vpop.xlane.xlu0 %1342
        %v1344 = vsel %vm410, %v1336, 0.0
        %1345 = vadd.xlane.f32.xlu0 %v1344
        %v1346 = vpop.xlane.xlu0 %1345
        %vm1347 = vcmask 257024
        %v1348 = vsel %vm1347, %v1337, 0.0
        %1349 = vadd.xlane.f32.xlu0 %v1348
        %v1350 = vpop.xlane.xlu0 %1349
        %v1351 = vmul.f32 %v1340, 0.03125
        %v1352 = vmul.f32 %v1343, 0.03125
        %v1353 = vmul.f32 %v1346, 0.03125
        %v1354 = vmul.f32 %v1350, 0.03125
        %v1355 = vmul.f32 %v1334, %v1334
        %v1356 = vmul.f32 %v1335, %v1335
        %v1357 = vmul.f32 %v1336, %v1336
        %v1358 = vmul.f32 %v1337, %v1337
        %v1359 = vsel %vm410, %v1355, 0.0
        %1360 = vadd.xlane.f32.xlu0 %v1359
        %v1361 = vpop.xlane.xlu0 %1360
        %v1362 = vsel %vm410, %v1356, 0.0
        %1363 = vadd.xlane.f32.xlu0 %v1362
        %v1364 = vpop.xlane.xlu0 %1363
        %v1365 = vsel %vm410, %v1357, 0.0
        %1366 = vadd.xlane.f32.xlu0 %v1365
        %v1367 = vpop.xlane.xlu0 %1366
        %v1368 = vsel %vm1347, %v1358, 0.0
        %1369 = vadd.xlane.f32.xlu0 %v1368
        %v1370 = vpop.xlane.xlu0 %1369
        %v1371 = vmul.f32 %v1361, 0.03125
        %v1372 = vmul.f32 %v1364, 0.03125
        %v1373 = vmul.f32 %v1367, 0.03125
        %v1374 = vmul.f32 %v1370, 0.03125
        %v1375 = vmul.f32 %v1351, %v1351
        %v1376 = vmul.f32 %v1352, %v1352
        %v1377 = vmul.f32 %v1353, %v1353
        %v1378 = vmul.f32 %v1354, %v1354
        %v1379 = vsub.f32 %v1371, %v1375
        %v1380 = vsub.f32 %v1372, %v1376
        %v1381 = vsub.f32 %v1373, %v1377
        %v1382 = vsub.f32 %v1374, %v1378
        %v1383 = vmax.f32 %v1379, 0.0
        %v1384 = vmax.f32 %v1380, 0.0
        %v1385 = vmax.f32 %v1381, 0.0
        %v1386 = vmax.f32 %v1382, 0.0
        %v1387 = vsub.f32 %v1334, %v1351
        %v1388 = vsub.f32 %v1335, %v1352
        %v1389 = vsub.f32 %v1336, %v1353
        %v1390 = vsub.f32 %v1337, %v1354
        %v1391 = vadd.f32 %v1383, 1e-05
        %v1392 = vadd.f32 %v1384, 1e-05
        %v1393 = vadd.f32 %v1385, 1e-05
        %v1394 = vadd.f32 %v1386, 1e-05
        %v1395 = vrsqrt.pop %v1391
        %v1396 = vrsqrt.pop %v1392
        %v1397 = vrsqrt.pop %v1393
        %v1398 = vrsqrt.pop %v1394
        %v1399 = vmul.f32 %v1387, %v1395
        %v1400 = vmul.f32 %v1388, %v1396
        %v1401 = vmul.f32 %v1389, %v1397
        %v1402 = vmul.f32 %v1390, %v1398
        %s1403 = scalar_lea.vmem %s4, 1
        %v1404 = vld [vmem:[%s1403] sm:$0x1]
        %v1406 = vlaneseq
        %v1407 = vshrl.u32 %v1406, 7
        %v1408 = vsub.s32 0, %v1407
        %v1409 = vrot.slane %v1404, %v1408
        %v1411 = vmul.f32 %v1399, %v1409
        %v1412 = vmul.f32 %v1400, %v1409
        %v1413 = vmul.f32 %v1401, %v1409
        %v1414 = vmul.f32 %v1402, %v1409
        %s1415 = scalar_lea.vmem %s5, 1
        %v1416 = vld [vmem:[%s1415] sm:$0x1]
        %v1418 = vlaneseq
        %v1419 = vshrl.u32 %v1418, 7
        %v1420 = vsub.s32 0, %v1419
        %v1421 = vrot.slane %v1416, %v1420
        %v1423 = vadd.f32 %v1411, %v1421
        %v1424 = vadd.f32 %v1412, %v1421
        %v1425 = vadd.f32 %v1413, %v1421
        %v1426 = vadd.f32 %v1414, %v1421
        %s1427 = ssub.s32 %s345, 6
        %v1428 = vstv %s1427
        %v1429 = vadd.s32 %v888, %v1428
        %v1430 = vadd.s32 %v889, %v1428
        %v1431 = vadd.s32 %v890, %v1428
        %v1432 = vadd.s32 %v891, %v1428
        %vm1433 = vcmp.ge.s32.totalorder %v1429, 0
        %vm1434 = vcmp.ge.s32.totalorder %v1430, 0
        %vm1435 = vcmp.ge.s32.totalorder %v1431, 0
        %vm1436 = vcmp.ge.s32.totalorder %v1432, 0
        %vm1437 = vcmp.lt.s32.totalorder %v1429, 16
        %vm1438 = vcmp.lt.s32.totalorder %v1430, 16
        %vm1439 = vcmp.lt.s32.totalorder %v1431, 16
        %vm1440 = vcmp.lt.s32.totalorder %v1432, 16
        %vm1441 = vmand %vm1433, %vm1437
        %vm1442 = vmand %vm1434, %vm1438
        %vm1443 = vmand %vm1435, %vm1439
        %vm1444 = vmand %vm1436, %vm1440
        %v1445 = vsel %vm1441, 1, 0
        %v1446 = vsel %vm1442, 1, 0
        %v1447 = vsel %vm1443, 1, 0
        %v1448 = vsel %vm1444, 1, 0
        %v1449 = vcvt.s32.f32 %v1445
        %v1450 = vcvt.s32.f32 %v1446
        %v1451 = vcvt.s32.f32 %v1447
        %v1452 = vcvt.s32.f32 %v1448
        %v1453 = vmul.f32 %v1423, %v1449
        %v1454 = vmul.f32 %v1424, %v1450
        %v1455 = vmul.f32 %v1425, %v1451
        %v1456 = vmul.f32 %v1426, %v1452
        %v1457 = vpack.c.bf16 %v1454, %v1453
        %v1458 = vpack.c.bf16 %v1456, %v1455
        %s1459 = scalar_lea.vmem [#allocation2], 80
        %v1460 = vld [vmem:[%s1459] sm:$0xf]
        %v1461 = vld [vmem:[%s1459 + $0x4] sm:$0xf]
        %v1462 = vld [vmem:[%s1459 + $0x8] sm:$0xf]
        %v1463 = vld [vmem:[%s1459 + $0xc] sm:$0xf]
        %s1464 = scalar_lea.vmem [#allocation2], 96
        %v1465 = vld [vmem:[%s1464] sm:$0xf]
        %v1466 = vld [vmem:[%s1464 + $0x4] sm:$0xf]
        %v1467 = vld [vmem:[%s1464 + $0x8] sm:$0xf]
        %v1468 = vld [vmem:[%s1464 + $0xc] sm:$0xf]
        %v1470 = vshrl.u32 %v1457, 16
        %v1472 = vshll.u32 %v1457, 16
        %v1474 = vrot.slane %v1472, 1
        %v1475 = vor.u32 %v1470, %v1474
        %v1477 = vshll.u32 %v1458, 16
        %v1479 = vrot.slane %v1477, 1
        %v1480 = vsel %vm377, %v1475, %v1479
        %v1481 = vshrl.u32 %v1458, 16
        %v1483 = vor.u32 %v1481, %v1479
        %v1488 = vunpack.c.l.b16 %v1465
        %v1489 = vunpack.c.l.b16 %v1466
        %v1490 = vunpack.c.l.b16 %v1467
        %v1491 = vunpack.c.l.b16 %v1468
        %v1492 = vpack.c.b16 %v1489, %v1488
        %v1493 = vpack.c.b16 %v1491, %v1490
        %v1497 = vsel %vm410, %v1480, 0
        %v1500 = vsel %vm410, %v1483, 0
        %1502 = vmatprep.subr.bf16.mxu0 0
        %1503 = vmatpush1.bf16.msra.mxu0 %v1492
        %1504 = vmatprep.subr.bf16.mxu0 0
        %1505 = vmatpush1.bf16.msra.mxu0 %v1493
        %1506 = vmatprep.subr.bf16.mxu0 0
        %1507 = vmatpush1.bf16.msra.mxu0 0
        %1508 = vmatprep.subr.bf16.mxu0 0
        %1509 = vmatpush1.bf16.msra.mxu0 0
        %1510 = vmatprep.subr.bf16.mxu0 0
        %1511 = vmatpush1.bf16.msra.mxu0 0
        %1512 = vmatprep.subr.bf16.mxu0 0
        %1513 = vmatpush1.bf16.msra.mxu0 0
        %1514 = vmatprep.subr.bf16.mxu0 0
        %1515 = vmatpush1.bf16.msra.mxu0 0
        %1516 = vmatprep.subr.bf16.mxu0 0
        %1517 = vmatpush1.bf16.msra.mxu0 0
        %1518 = vmatprep.subr.bf16.mxu0 0
        %1519 = vmatpush1.bf16.msra.mxu0 0
        %1520 = vmatprep.subr.bf16.mxu0 0
        %1521 = vmatpush1.bf16.msra.mxu0 0
        %1522 = vmatprep.subr.bf16.mxu0 0
        %1523 = vmatpush1.bf16.msra.mxu0 0
        %1524 = vmatprep.subr.bf16.mxu0 0
        %1525 = vmatpush1.bf16.msra.mxu0 0
        %1526 = vmatprep.subr.bf16.mxu0 0
        %1527 = vmatpush1.bf16.msra.mxu0 0
        %1528 = vmatprep.subr.bf16.mxu0 0
        %1529 = vmatpush1.bf16.msra.mxu0 0
        %1530 = vmatprep.subr.bf16.mxu0 0
        %1531 = vmatpush1.bf16.msra.mxu0 0
        %1532 = vmatprep.subr.bf16.mxu0 0
        %1533 = vmatpush1.bf16.msra.mxu0 0
        %1534 = vmatprep.mubr.bf16.mxu0 0
        %1535 = vmatmul.mubr.bf16.gmra.mrb[0].mxu0 %v1497
        %v1536 = vpop.f32.mrb[0].mxu0
        %v1537 = vadd.f32 0.0, %v1536
        %v1538 = vpop.f32.mrb[0].mxu0
        %v1539 = vpop.f32.mrb[0].mxu0
        %v1540 = vadd.f32 0.0, %v1539
        %v1541 = vpop.f32.mrb[0].mxu0
        %1542 = vmatprep.mubr.bf16.mxu0 0
        %1543 = vmatmul.mubr.bf16.gmra.mrb[0].mxu0 %v1500
        %v1544 = vpop.f32.mrb[0].mxu0
        %v1545 = vadd.f32 0.0, %v1544
        %v1546 = vpop.f32.mrb[0].mxu0
        %v1547 = vpop.f32.mrb[0].mxu0
        %v1548 = vpop.f32.mrb[0].mxu0
        %1549 = vdwg.mxu0
        %v1554 = vunpack.c.l.b16 %v1460
        %v1555 = vunpack.c.l.b16 %v1461
        %v1556 = vunpack.c.l.b16 %v1462
        %v1557 = vunpack.c.l.b16 %v1463
        %v1558 = vpack.c.b16 %v1555, %v1554
        %v1559 = vpack.c.b16 %v1557, %v1556
        %v1562 = vsel %vm410, %v1457, 0
        %v1564 = vsel %vm410, %v1458, 0
        %1566 = vmatprep.subr.bf16.mxu0 0
        %1567 = vmatpush1.bf16.msra.mxu0 %v1558
        %1568 = vmatprep.subr.bf16.mxu0 0
        %1569 = vmatpush1.bf16.msra.mxu0 %v1559
        %1570 = vmatprep.subr.bf16.mxu0 0
        %1571 = vmatpush1.bf16.msra.mxu0 0
        %1572 = vmatprep.subr.bf16.mxu0 0
        %1573 = vmatpush1.bf16.msra.mxu0 0
        %1574 = vmatprep.subr.bf16.mxu0 0
        %1575 = vmatpush1.bf16.msra.mxu0 0
        %1576 = vmatprep.subr.bf16.mxu0 0
        %1577 = vmatpush1.bf16.msra.mxu0 0
        %1578 = vmatprep.subr.bf16.mxu0 0
        %1579 = vmatpush1.bf16.msra.mxu0 0
        %1580 = vmatprep.subr.bf16.mxu0 0
        %1581 = vmatpush1.bf16.msra.mxu0 0
        %1582 = vmatprep.subr.bf16.mxu0 0
        %1583 = vmatpush1.bf16.msra.mxu0 0
        %1584 = vmatprep.subr.bf16.mxu0 0
        %1585 = vmatpush1.bf16.msra.mxu0 0
        %1586 = vmatprep.subr.bf16.mxu0 0
        %1587 = vmatpush1.bf16.msra.mxu0 0
        %1588 = vmatprep.subr.bf16.mxu0 0
        %1589 = vmatpush1.bf16.msra.mxu0 0
        %1590 = vmatprep.subr.bf16.mxu0 0
        %1591 = vmatpush1.bf16.msra.mxu0 0
        %1592 = vmatprep.subr.bf16.mxu0 0
        %1593 = vmatpush1.bf16.msra.mxu0 0
        %1594 = vmatprep.subr.bf16.mxu0 0
        %1595 = vmatpush1.bf16.msra.mxu0 0
        %1596 = vmatprep.subr.bf16.mxu0 0
        %1597 = vmatpush1.bf16.msra.mxu0 0
        %1598 = vmatprep.mubr.bf16.mxu0 0
        %1599 = vmatmul.mubr.bf16.gmra.mrb[0].mxu0 %v1562
        %v1600 = vpop.f32.mrb[0].mxu0
        %v1601 = vadd.f32 %v1537, %v1600
        %v1602 = vpop.f32.mrb[0].mxu0
        %v1603 = vpop.f32.mrb[0].mxu0
        %v1604 = vadd.f32 %v1540, %v1603
        %v1605 = vpop.f32.mrb[0].mxu0
        %1606 = vmatprep.mubr.bf16.mxu0 0
        %1607 = vmatmul.mubr.bf16.gmra.mrb[0].mxu0 %v1564
        %v1608 = vpop.f32.mrb[0].mxu0
        %v1609 = vadd.f32 %v1545, %v1608
        %v1610 = vpop.f32.mrb[0].mxu0
        %v1611 = vpop.f32.mrb[0].mxu0
        %v1612 = vpop.f32.mrb[0].mxu0
        %1613 = vdwg.mxu0
        %s1614 = scalar_lea.vmem [#allocation2], 112
        %v1615 = vld [vmem:[%s1614] sm:$0xf]
        %v1616 = vld [vmem:[%s1614 + $0x4] sm:$0xf]
        %v1617 = vld [vmem:[%s1614 + $0x8] sm:$0xf]
        %v1618 = vld [vmem:[%s1614 + $0xc] sm:$0xf]
        %v1621 = vrot.slane %v1457, 1
        %v1622 = vrot.slane %v1458, 1
        %v1623 = vsel %vm536, %v1621, %v1622
        %v1628 = vunpack.c.l.b16 %v1615
        %v1629 = vunpack.c.l.b16 %v1616
        %v1630 = vunpack.c.l.b16 %v1617
        %v1631 = vunpack.c.l.b16 %v1618
        %v1632 = vpack.c.b16 %v1629, %v1628
        %v1633 = vpack.c.b16 %v1631, %v1630
        %v1637 = vsel %vm410, %v1623, 0
        %v1640 = vsel %vm410, %v1622, 0
        %1642 = vmatprep.subr.bf16.mxu0 0
        %1643 = vmatpush1.bf16.msra.mxu0 %v1632
        %1644 = vmatprep.subr.bf16.mxu0 0
        %1645 = vmatpush1.bf16.msra.mxu0 %v1633
        %1646 = vmatprep.subr.bf16.mxu0 0
        %1647 = vmatpush1.bf16.msra.mxu0 0
        %1648 = vmatprep.subr.bf16.mxu0 0
        %1649 = vmatpush1.bf16.msra.mxu0 0
        %1650 = vmatprep.subr.bf16.mxu0 0
        %1651 = vmatpush1.bf16.msra.mxu0 0
        %1652 = vmatprep.subr.bf16.mxu0 0
        %1653 = vmatpush1.bf16.msra.mxu0 0
        %1654 = vmatprep.subr.bf16.mxu0 0
        %1655 = vmatpush1.bf16.msra.mxu0 0
        %1656 = vmatprep.subr.bf16.mxu0 0
        %1657 = vmatpush1.bf16.msra.mxu0 0
        %1658 = vmatprep.subr.bf16.mxu0 0
        %1659 = vmatpush1.bf16.msra.mxu0 0
        %1660 = vmatprep.subr.bf16.mxu0 0
        %1661 = vmatpush1.bf16.msra.mxu0 0
        %1662 = vmatprep.subr.bf16.mxu0 0
        %1663 = vmatpush1.bf16.msra.mxu0 0
        %1664 = vmatprep.subr.bf16.mxu0 0
        %1665 = vmatpush1.bf16.msra.mxu0 0
        %1666 = vmatprep.subr.bf16.mxu0 0
        %1667 = vmatpush1.bf16.msra.mxu0 0
        %1668 = vmatprep.subr.bf16.mxu0 0
        %1669 = vmatpush1.bf16.msra.mxu0 0
        %1670 = vmatprep.subr.bf16.mxu0 0
        %1671 = vmatpush1.bf16.msra.mxu0 0
        %1672 = vmatprep.subr.bf16.mxu0 0
        %1673 = vmatpush1.bf16.msra.mxu0 0
        %1674 = vmatprep.mubr.bf16.mxu0 0
        %1675 = vmatmul.mubr.bf16.gmra.mrb[0].mxu0 %v1637
        %v1676 = vpop.f32.mrb[0].mxu0
        %v1677 = vadd.f32 0.0, %v1676
        %v1678 = vpop.f32.mrb[0].mxu0
        %v1679 = vpop.f32.mrb[0].mxu0
        %v1680 = vadd.f32 0.0, %v1679
        %v1681 = vpop.f32.mrb[0].mxu0
        %1682 = vmatprep.mubr.bf16.mxu0 0
        %1683 = vmatmul.mubr.bf16.gmra.mrb[0].mxu0 %v1640
        %v1684 = vpop.f32.mrb[0].mxu0
        %v1685 = vadd.f32 0.0, %v1684
        %v1686 = vpop.f32.mrb[0].mxu0
        %v1687 = vpop.f32.mrb[0].mxu0
        %v1688 = vpop.f32.mrb[0].mxu0
        %1689 = vdwg.mxu0
        %v1690 = vadd.f32 %v1601, %v1677
        %v1691 = vadd.f32 %v1604, %v1680
        %v1692 = vadd.f32 %v1609, %v1685
        %s1693 = scalar_lea.vmem [#allocation2], 128
        %v1694 = vld [vmem:[%s1693] sm:$0xf]
        %v1695 = vld [vmem:[%s1693 + $0x4] sm:$0xf]
        %v1696 = vld [vmem:[%s1693 + $0x8] sm:$0xf]
        %v1697 = vld [vmem:[%s1693 + $0xc] sm:$0xf]
        %v1698 = vrot.slane %v1470, 1
        %v1699 = vrot.slane %v1472, 2
        %v1700 = vor.u32 %v1698, %v1699
        %v1701 = vrot.slane %v1481, 1
        %v1702 = vrot.slane %v1477, 2
        %v1703 = vor.u32 %v1701, %v1702
        %v1704 = vsel %vm618, %v1700, %v1703
        %v1709 = vunpack.c.l.b16 %v1694
        %v1710 = vunpack.c.l.b16 %v1695
        %v1711 = vunpack.c.l.b16 %v1696
        %v1712 = vunpack.c.l.b16 %v1697
        %v1713 = vpack.c.b16 %v1710, %v1709
        %v1714 = vpack.c.b16 %v1712, %v1711
        %v1718 = vsel %vm410, %v1704, 0
        %v1721 = vsel %vm410, %v1703, 0
        %1723 = vmatprep.subr.bf16.mxu0 0
        %1724 = vmatpush1.bf16.msra.mxu0 %v1713
        %1725 = vmatprep.subr.bf16.mxu0 0
        %1726 = vmatpush1.bf16.msra.mxu0 %v1714
        %1727 = vmatprep.subr.bf16.mxu0 0
        %1728 = vmatpush1.bf16.msra.mxu0 0
        %1729 = vmatprep.subr.bf16.mxu0 0
        %1730 = vmatpush1.bf16.msra.mxu0 0
        %1731 = vmatprep.subr.bf16.mxu0 0
        %1732 = vmatpush1.bf16.msra.mxu0 0
        %1733 = vmatprep.subr.bf16.mxu0 0
        %1734 = vmatpush1.bf16.msra.mxu0 0
        %1735 = vmatprep.subr.bf16.mxu0 0
        %1736 = vmatpush1.bf16.msra.mxu0 0
        %1737 = vmatprep.subr.bf16.mxu0 0
        %1738 = vmatpush1.bf16.msra.mxu0 0
        %1739 = vmatprep.subr.bf16.mxu0 0
        %1740 = vmatpush1.bf16.msra.mxu0 0
        %1741 = vmatprep.subr.bf16.mxu0 0
        %1742 = vmatpush1.bf16.msra.mxu0 0
        %1743 = vmatprep.subr.bf16.mxu0 0
        %1744 = vmatpush1.bf16.msra.mxu0 0
        %1745 = vmatprep.subr.bf16.mxu0 0
        %1746 = vmatpush1.bf16.msra.mxu0 0
        %1747 = vmatprep.subr.bf16.mxu0 0
        %1748 = vmatpush1.bf16.msra.mxu0 0
        %1749 = vmatprep.subr.bf16.mxu0 0
        %1750 = vmatpush1.bf16.msra.mxu0 0
        %1751 = vmatprep.subr.bf16.mxu0 0
        %1752 = vmatpush1.bf16.msra.mxu0 0
        %1753 = vmatprep.subr.bf16.mxu0 0
        %1754 = vmatpush1.bf16.msra.mxu0 0
        %1755 = vmatprep.mubr.bf16.mxu0 0
        %1756 = vmatmul.mubr.bf16.gmra.mrb[0].mxu0 %v1718
        %v1757 = vpop.f32.mrb[0].mxu0
        %v1758 = vadd.f32 0.0, %v1757
        %v1759 = vpop.f32.mrb[0].mxu0
        %v1760 = vpop.f32.mrb[0].mxu0
        %v1761 = vadd.f32 0.0, %v1760
        %v1762 = vpop.f32.mrb[0].mxu0
        %1763 = vmatprep.mubr.bf16.mxu0 0
        %1764 = vmatmul.mubr.bf16.gmra.mrb[0].mxu0 %v1721
        %v1765 = vpop.f32.mrb[0].mxu0
        %v1766 = vadd.f32 0.0, %v1765
        %v1767 = vpop.f32.mrb[0].mxu0
        %v1768 = vpop.f32.mrb[0].mxu0
        %v1769 = vpop.f32.mrb[0].mxu0
        %1770 = vdwg.mxu0
        %v1771 = vadd.f32 %v1690, %v1758
        %v1772 = vadd.f32 %v1691, %v1761
        %v1773 = vadd.f32 %v1692, %v1766
        %s1774 = scalar_lea.vmem [#allocation2], 144
        %v1775 = vld [vmem:[%s1774] sm:$0xf]
        %v1776 = vld [vmem:[%s1774 + $0x4] sm:$0xf]
        %v1777 = vld [vmem:[%s1774 + $0x8] sm:$0xf]
        %v1778 = vld [vmem:[%s1774 + $0xc] sm:$0xf]
        %v1779 = vrot.slane %v1457, 2
        %v1780 = vrot.slane %v1458, 2
        %v1781 = vsel %vm708, %v1779, %v1780
        %v1786 = vunpack.c.l.b16 %v1775
        %v1787 = vunpack.c.l.b16 %v1776
        %v1788 = vunpack.c.l.b16 %v1777
        %v1789 = vunpack.c.l.b16 %v1778
        %v1790 = vpack.c.b16 %v1787, %v1786
        %v1791 = vpack.c.b16 %v1789, %v1788
        %v1795 = vsel %vm410, %v1781, 0
        %v1798 = vsel %vm410, %v1780, 0
        %1800 = vmatprep.subr.bf16.mxu0 0
        %1801 = vmatpush1.bf16.msra.mxu0 %v1790
        %1802 = vmatprep.subr.bf16.mxu0 0
        %1803 = vmatpush1.bf16.msra.mxu0 %v1791
        %1804 = vmatprep.subr.bf16.mxu0 0
        %1805 = vmatpush1.bf16.msra.mxu0 0
        %1806 = vmatprep.subr.bf16.mxu0 0
        %1807 = vmatpush1.bf16.msra.mxu0 0
        %1808 = vmatprep.subr.bf16.mxu0 0
        %1809 = vmatpush1.bf16.msra.mxu0 0
        %1810 = vmatprep.subr.bf16.mxu0 0
        %1811 = vmatpush1.bf16.msra.mxu0 0
        %1812 = vmatprep.subr.bf16.mxu0 0
        %1813 = vmatpush1.bf16.msra.mxu0 0
        %1814 = vmatprep.subr.bf16.mxu0 0
        %1815 = vmatpush1.bf16.msra.mxu0 0
        %1816 = vmatprep.subr.bf16.mxu0 0
        %1817 = vmatpush1.bf16.msra.mxu0 0
        %1818 = vmatprep.subr.bf16.mxu0 0
        %1819 = vmatpush1.bf16.msra.mxu0 0
        %1820 = vmatprep.subr.bf16.mxu0 0
        %1821 = vmatpush1.bf16.msra.mxu0 0
        %1822 = vmatprep.subr.bf16.mxu0 0
        %1823 = vmatpush1.bf16.msra.mxu0 0
        %1824 = vmatprep.subr.bf16.mxu0 0
        %1825 = vmatpush1.bf16.msra.mxu0 0
        %1826 = vmatprep.subr.bf16.mxu0 0
        %1827 = vmatpush1.bf16.msra.mxu0 0
        %1828 = vmatprep.subr.bf16.mxu0 0
        %1829 = vmatpush1.bf16.msra.mxu0 0
        %1830 = vmatprep.subr.bf16.mxu0 0
        %1831 = vmatpush1.bf16.msra.mxu0 0
        %1832 = vmatprep.mubr.bf16.mxu0 0
        %1833 = vmatmul.mubr.bf16.gmra.mrb[0].mxu0 %v1795
        %v1834 = vpop.f32.mrb[0].mxu0
        %v1835 = vadd.f32 0.0, %v1834
        %v1836 = vpop.f32.mrb[0].mxu0
        %v1837 = vpop.f32.mrb[0].mxu0
        %v1838 = vadd.f32 0.0, %v1837
        %v1839 = vpop.f32.mrb[0].mxu0
        %1840 = vmatprep.mubr.bf16.mxu0 0
        %1841 = vmatmul.mubr.bf16.gmra.mrb[0].mxu0 %v1798
        %v1842 = vpop.f32.mrb[0].mxu0
        %v1843 = vadd.f32 0.0, %v1842
        %v1844 = vpop.f32.mrb[0].mxu0
        %v1845 = vpop.f32.mrb[0].mxu0
        %v1846 = vpop.f32.mrb[0].mxu0
        %1847 = vdwg.mxu0
        %v1848 = vadd.f32 %v1771, %v1835
        %v1849 = vadd.f32 %v1772, %v1838
        %v1850 = vadd.f32 %v1773, %v1843
        %s1851 = scalar_lea.vmem %s3, 2
        %v1852 = vld [vmem:[%s1851] sm:$0x1]
        %v1854 = vlaneseq
        %v1855 = vshrl.u32 %v1854, 7
        %v1856 = vsub.s32 0, %v1855
        %v1857 = vrot.slane %v1852, %v1856
        %v1859 = vadd.f32 %v1848, %v1857
        %v1860 = vadd.f32 %v1849, %v1857
        %v1861 = vadd.f32 %v1850, %v1857
        %v1862 = vmax.f32 %v1859, 0.0
        %v1863 = vmax.f32 %v1860, 0.0
        %v1864 = vmax.f32 %v1861, 0.0
        %v1865 = vsel %vm410, %v1862, 0.0
        %1866 = vadd.xlane.f32.xlu0 %v1865
        %v1867 = vpop.xlane.xlu0 %1866
        %v1868 = vsel %vm410, %v1863, 0.0
        %1869 = vadd.xlane.f32.xlu0 %v1868
        %v1870 = vpop.xlane.xlu0 %1869
        %v1871 = vsel %vm410, %v1864, 0.0
        %1872 = vadd.xlane.f32.xlu0 %v1871
        %v1873 = vpop.xlane.xlu0 %1872
        %v1874 = vmul.f32 %v1867, 0.03125
        %v1875 = vmul.f32 %v1870, 0.03125
        %v1876 = vmul.f32 %v1873, 0.03125
        %v1877 = vmul.f32 %v1862, %v1862
        %v1878 = vmul.f32 %v1863, %v1863
        %v1879 = vmul.f32 %v1864, %v1864
        %v1880 = vsel %vm410, %v1877, 0.0
        %1881 = vadd.xlane.f32.xlu0 %v1880
        %v1882 = vpop.xlane.xlu0 %1881
        %v1883 = vsel %vm410, %v1878, 0.0
        %1884 = vadd.xlane.f32.xlu0 %v1883
        %v1885 = vpop.xlane.xlu0 %1884
        %v1886 = vsel %vm410, %v1879, 0.0
        %1887 = vadd.xlane.f32.xlu0 %v1886
        %v1888 = vpop.xlane.xlu0 %1887
        %v1889 = vmul.f32 %v1882, 0.03125
        %v1890 = vmul.f32 %v1885, 0.03125
        %v1891 = vmul.f32 %v1888, 0.03125
        %v1892 = vmul.f32 %v1874, %v1874
        %v1893 = vmul.f32 %v1875, %v1875
        %v1894 = vmul.f32 %v1876, %v1876
        %v1895 = vsub.f32 %v1889, %v1892
        %v1896 = vsub.f32 %v1890, %v1893
        %v1897 = vsub.f32 %v1891, %v1894
        %v1898 = vmax.f32 %v1895, 0.0
        %v1899 = vmax.f32 %v1896, 0.0
        %v1900 = vmax.f32 %v1897, 0.0
        %v1901 = vsub.f32 %v1862, %v1874
        %v1902 = vsub.f32 %v1863, %v1875
        %v1903 = vsub.f32 %v1864, %v1876
        %v1904 = vadd.f32 %v1898, 1e-05
        %v1905 = vadd.f32 %v1899, 1e-05
        %v1906 = vadd.f32 %v1900, 1e-05
        %v1907 = vrsqrt.pop %v1904
        %v1908 = vrsqrt.pop %v1905
        %v1909 = vrsqrt.pop %v1906
        %v1910 = vmul.f32 %v1901, %v1907
        %v1911 = vmul.f32 %v1902, %v1908
        %v1912 = vmul.f32 %v1903, %v1909
        %s1913 = scalar_lea.vmem %s4, 2
        %v1914 = vld [vmem:[%s1913] sm:$0x1]
        %v1916 = vlaneseq
        %v1917 = vshrl.u32 %v1916, 7
        %v1918 = vsub.s32 0, %v1917
        %v1919 = vrot.slane %v1914, %v1918
        %v1921 = vmul.f32 %v1910, %v1919
        %v1922 = vmul.f32 %v1911, %v1919
        %v1923 = vmul.f32 %v1912, %v1919
        %s1924 = scalar_lea.vmem %s5, 2
        %v1925 = vld [vmem:[%s1924] sm:$0x1]
        %v1927 = vlaneseq
        %v1928 = vshrl.u32 %v1927, 7
        %v1929 = vsub.s32 0, %v1928
        %v1930 = vrot.slane %v1925, %v1929
        %v1932 = vadd.f32 %v1921, %v1930
        %v1933 = vadd.f32 %v1922, %v1930
        %v1934 = vadd.f32 %v1923, %v1930
        %s1935 = ssub.s32 %s345, 4
        %v1936 = vstv %s1935
        %v1937 = vadd.s32 %v888, %v1936
        %v1938 = vadd.s32 %v889, %v1936
        %v1939 = vadd.s32 %v890, %v1936
        %vm1940 = vcmp.ge.s32.totalorder %v1937, 0
        %vm1941 = vcmp.ge.s32.totalorder %v1938, 0
        %vm1942 = vcmp.ge.s32.totalorder %v1939, 0
        %vm1943 = vcmp.lt.s32.totalorder %v1937, 16
        %vm1944 = vcmp.lt.s32.totalorder %v1938, 16
        %vm1945 = vcmp.lt.s32.totalorder %v1939, 16
        %vm1946 = vmand %vm1940, %vm1943
        %vm1947 = vmand %vm1941, %vm1944
        %vm1948 = vmand %vm1942, %vm1945
        %v1949 = vsel %vm1946, 1, 0
        %v1950 = vsel %vm1947, 1, 0
        %v1951 = vsel %vm1948, 1, 0
        %v1952 = vcvt.s32.f32 %v1949
        %v1953 = vcvt.s32.f32 %v1950
        %v1954 = vcvt.s32.f32 %v1951
        %v1955 = vmul.f32 %v1932, %v1952
        %v1956 = vmul.f32 %v1933, %v1953
        %v1957 = vmul.f32 %v1934, %v1954
        %v1958 = vpack.c.bf16 %v1956, %v1955
        %v1959 = vpack.c.bf16 %v1957, %v1957
        %s1960 = scalar_lea.vmem [#allocation2], 160
        %v1961 = vld [vmem:[%s1960] sm:$0xf]
        %v1962 = vld [vmem:[%s1960 + $0x4] sm:$0xf]
        %v1963 = vld [vmem:[%s1960 + $0x8] sm:$0xf]
        %v1964 = vld [vmem:[%s1960 + $0xc] sm:$0xf]
        %s1965 = scalar_lea.vmem [#allocation2], 176
        %v1966 = vld [vmem:[%s1965] sm:$0xf]
        %v1967 = vld [vmem:[%s1965 + $0x4] sm:$0xf]
        %v1968 = vld [vmem:[%s1965 + $0x8] sm:$0xf]
        %v1969 = vld [vmem:[%s1965 + $0xc] sm:$0xf]
        %v1971 = vshrl.u32 %v1958, 16
        %v1973 = vshll.u32 %v1958, 16
        %v1975 = vrot.slane %v1973, 1
        %v1976 = vor.u32 %v1971, %v1975
        %v1978 = vshll.u32 %v1959, 16
        %v1980 = vrot.slane %v1978, 1
        %v1981 = vsel %vm377, %v1976, %v1980
        %v1982 = vshrl.u32 %v1959, 16
        %v1984 = vor.u32 %v1982, %v1980
        %v1989 = vunpack.c.l.b16 %v1966
        %v1990 = vunpack.c.l.b16 %v1967
        %v1991 = vunpack.c.l.b16 %v1968
        %v1992 = vunpack.c.l.b16 %v1969
        %v1993 = vpack.c.b16 %v1990, %v1989
        %v1994 = vpack.c.b16 %v1992, %v1991
        %v1998 = vsel %vm410, %v1981, 0
        %v2001 = vsel %vm410, %v1984, 0
        %2003 = vmatprep.subr.bf16.mxu0 0
        %2004 = vmatpush1.bf16.msra.mxu0 %v1993
        %2005 = vmatprep.subr.bf16.mxu0 0
        %2006 = vmatpush1.bf16.msra.mxu0 %v1994
        %2007 = vmatprep.subr.bf16.mxu0 0
        %2008 = vmatpush1.bf16.msra.mxu0 0
        %2009 = vmatprep.subr.bf16.mxu0 0
        %2010 = vmatpush1.bf16.msra.mxu0 0
        %2011 = vmatprep.subr.bf16.mxu0 0
        %2012 = vmatpush1.bf16.msra.mxu0 0
        %2013 = vmatprep.subr.bf16.mxu0 0
        %2014 = vmatpush1.bf16.msra.mxu0 0
        %2015 = vmatprep.subr.bf16.mxu0 0
        %2016 = vmatpush1.bf16.msra.mxu0 0
        %2017 = vmatprep.subr.bf16.mxu0 0
        %2018 = vmatpush1.bf16.msra.mxu0 0
        %2019 = vmatprep.subr.bf16.mxu0 0
        %2020 = vmatpush1.bf16.msra.mxu0 0
        %2021 = vmatprep.subr.bf16.mxu0 0
        %2022 = vmatpush1.bf16.msra.mxu0 0
        %2023 = vmatprep.subr.bf16.mxu0 0
        %2024 = vmatpush1.bf16.msra.mxu0 0
        %2025 = vmatprep.subr.bf16.mxu0 0
        %2026 = vmatpush1.bf16.msra.mxu0 0
        %2027 = vmatprep.subr.bf16.mxu0 0
        %2028 = vmatpush1.bf16.msra.mxu0 0
        %2029 = vmatprep.subr.bf16.mxu0 0
        %2030 = vmatpush1.bf16.msra.mxu0 0
        %2031 = vmatprep.subr.bf16.mxu0 0
        %2032 = vmatpush1.bf16.msra.mxu0 0
        %2033 = vmatprep.subr.bf16.mxu0 0
        %2034 = vmatpush1.bf16.msra.mxu0 0
        %2035 = vmatprep.mubr.bf16.mxu0 0
        %2036 = vmatmul.mubr.bf16.gmra.mrb[0].mxu0 %v1998
        %v2037 = vpop.f32.mrb[0].mxu0
        %v2038 = vadd.f32 0.0, %v2037
        %v2039 = vpop.f32.mrb[0].mxu0
        %v2040 = vpop.f32.mrb[0].mxu0
        %v2041 = vadd.f32 0.0, %v2040
        %v2042 = vpop.f32.mrb[0].mxu0
        %2043 = vmatprep.mubr.bf16.mxu0 0
        %2044 = vmatmul.mubr.bf16.gmra.mrb[0].mxu0 %v2001
        %v2045 = vpop.f32.mrb[0].mxu0
        %v2046 = vadd.f32 0.0, %v2045
        %v2047 = vpop.f32.mrb[0].mxu0
        %v2048 = vpop.f32.mrb[0].mxu0
        %v2049 = vpop.f32.mrb[0].mxu0
        %2050 = vdwg.mxu0
        %v2055 = vunpack.c.l.b16 %v1961
        %v2056 = vunpack.c.l.b16 %v1962
        %v2057 = vunpack.c.l.b16 %v1963
        %v2058 = vunpack.c.l.b16 %v1964
        %v2059 = vpack.c.b16 %v2056, %v2055
        %v2060 = vpack.c.b16 %v2058, %v2057
        %v2063 = vsel %vm410, %v1958, 0
        %v2065 = vsel %vm410, %v1959, 0
        %2067 = vmatprep.subr.bf16.mxu0 0
        %2068 = vmatpush1.bf16.msra.mxu0 %v2059
        %2069 = vmatprep.subr.bf16.mxu0 0
        %2070 = vmatpush1.bf16.msra.mxu0 %v2060
        %2071 = vmatprep.subr.bf16.mxu0 0
        %2072 = vmatpush1.bf16.msra.mxu0 0
        %2073 = vmatprep.subr.bf16.mxu0 0
        %2074 = vmatpush1.bf16.msra.mxu0 0
        %2075 = vmatprep.subr.bf16.mxu0 0
        %2076 = vmatpush1.bf16.msra.mxu0 0
        %2077 = vmatprep.subr.bf16.mxu0 0
        %2078 = vmatpush1.bf16.msra.mxu0 0
        %2079 = vmatprep.subr.bf16.mxu0 0
        %2080 = vmatpush1.bf16.msra.mxu0 0
        %2081 = vmatprep.subr.bf16.mxu0 0
        %2082 = vmatpush1.bf16.msra.mxu0 0
        %2083 = vmatprep.subr.bf16.mxu0 0
        %2084 = vmatpush1.bf16.msra.mxu0 0
        %2085 = vmatprep.subr.bf16.mxu0 0
        %2086 = vmatpush1.bf16.msra.mxu0 0
        %2087 = vmatprep.subr.bf16.mxu0 0
        %2088 = vmatpush1.bf16.msra.mxu0 0
        %2089 = vmatprep.subr.bf16.mxu0 0
        %2090 = vmatpush1.bf16.msra.mxu0 0
        %2091 = vmatprep.subr.bf16.mxu0 0
        %2092 = vmatpush1.bf16.msra.mxu0 0
        %2093 = vmatprep.subr.bf16.mxu0 0
        %2094 = vmatpush1.bf16.msra.mxu0 0
        %2095 = vmatprep.subr.bf16.mxu0 0
        %2096 = vmatpush1.bf16.msra.mxu0 0
        %2097 = vmatprep.subr.bf16.mxu0 0
        %2098 = vmatpush1.bf16.msra.mxu0 0
        %2099 = vmatprep.mubr.bf16.mxu0 0
        %2100 = vmatmul.mubr.bf16.gmra.mrb[0].mxu0 %v2063
        %v2101 = vpop.f32.mrb[0].mxu0
        %v2102 = vadd.f32 %v2038, %v2101
        %v2103 = vpop.f32.mrb[0].mxu0
        %v2104 = vpop.f32.mrb[0].mxu0
        %v2105 = vadd.f32 %v2041, %v2104
        %v2106 = vpop.f32.mrb[0].mxu0
        %2107 = vmatprep.mubr.bf16.mxu0 0
        %2108 = vmatmul.mubr.bf16.gmra.mrb[0].mxu0 %v2065
        %v2109 = vpop.f32.mrb[0].mxu0
        %v2110 = vadd.f32 %v2046, %v2109
        %v2111 = vpop.f32.mrb[0].mxu0
        %v2112 = vpop.f32.mrb[0].mxu0
        %v2113 = vpop.f32.mrb[0].mxu0
        %2114 = vdwg.mxu0
        %s2115 = scalar_lea.vmem [#allocation2], 192
        %v2116 = vld [vmem:[%s2115] sm:$0xf]
        %v2117 = vld [vmem:[%s2115 + $0x4] sm:$0xf]
        %v2118 = vld [vmem:[%s2115 + $0x8] sm:$0xf]
        %v2119 = vld [vmem:[%s2115 + $0xc] sm:$0xf]
        %v2122 = vrot.slane %v1958, 1
        %v2123 = vrot.slane %v1959, 1
        %v2124 = vsel %vm536, %v2122, %v2123
        %v2129 = vunpack.c.l.b16 %v2116
        %v2130 = vunpack.c.l.b16 %v2117
        %v2131 = vunpack.c.l.b16 %v2118
        %v2132 = vunpack.c.l.b16 %v2119
        %v2133 = vpack.c.b16 %v2130, %v2129
        %v2134 = vpack.c.b16 %v2132, %v2131
        %v2138 = vsel %vm410, %v2124, 0
        %v2141 = vsel %vm410, %v2123, 0
        %2143 = vmatprep.subr.bf16.mxu0 0
        %2144 = vmatpush1.bf16.msra.mxu0 %v2133
        %2145 = vmatprep.subr.bf16.mxu0 0
        %2146 = vmatpush1.bf16.msra.mxu0 %v2134
        %2147 = vmatprep.subr.bf16.mxu0 0
        %2148 = vmatpush1.bf16.msra.mxu0 0
        %2149 = vmatprep.subr.bf16.mxu0 0
        %2150 = vmatpush1.bf16.msra.mxu0 0
        %2151 = vmatprep.subr.bf16.mxu0 0
        %2152 = vmatpush1.bf16.msra.mxu0 0
        %2153 = vmatprep.subr.bf16.mxu0 0
        %2154 = vmatpush1.bf16.msra.mxu0 0
        %2155 = vmatprep.subr.bf16.mxu0 0
        %2156 = vmatpush1.bf16.msra.mxu0 0
        %2157 = vmatprep.subr.bf16.mxu0 0
        %2158 = vmatpush1.bf16.msra.mxu0 0
        %2159 = vmatprep.subr.bf16.mxu0 0
        %2160 = vmatpush1.bf16.msra.mxu0 0
        %2161 = vmatprep.subr.bf16.mxu0 0
        %2162 = vmatpush1.bf16.msra.mxu0 0
        %2163 = vmatprep.subr.bf16.mxu0 0
        %2164 = vmatpush1.bf16.msra.mxu0 0
        %2165 = vmatprep.subr.bf16.mxu0 0
        %2166 = vmatpush1.bf16.msra.mxu0 0
        %2167 = vmatprep.subr.bf16.mxu0 0
        %2168 = vmatpush1.bf16.msra.mxu0 0
        %2169 = vmatprep.subr.bf16.mxu0 0
        %2170 = vmatpush1.bf16.msra.mxu0 0
        %2171 = vmatprep.subr.bf16.mxu0 0
        %2172 = vmatpush1.bf16.msra.mxu0 0
        %2173 = vmatprep.subr.bf16.mxu0 0
        %2174 = vmatpush1.bf16.msra.mxu0 0
        %2175 = vmatprep.mubr.bf16.mxu0 0
        %2176 = vmatmul.mubr.bf16.gmra.mrb[0].mxu0 %v2138
        %v2177 = vpop.f32.mrb[0].mxu0
        %v2178 = vadd.f32 0.0, %v2177
        %v2179 = vpop.f32.mrb[0].mxu0
        %v2180 = vpop.f32.mrb[0].mxu0
        %v2181 = vadd.f32 0.0, %v2180
        %v2182 = vpop.f32.mrb[0].mxu0
        %2183 = vmatprep.mubr.bf16.mxu0 0
        %2184 = vmatmul.mubr.bf16.gmra.mrb[0].mxu0 %v2141
        %v2185 = vpop.f32.mrb[0].mxu0
        %v2186 = vadd.f32 0.0, %v2185
        %v2187 = vpop.f32.mrb[0].mxu0
        %v2188 = vpop.f32.mrb[0].mxu0
        %v2189 = vpop.f32.mrb[0].mxu0
        %2190 = vdwg.mxu0
        %v2191 = vadd.f32 %v2102, %v2178
        %v2192 = vadd.f32 %v2105, %v2181
        %v2193 = vadd.f32 %v2110, %v2186
        %s2194 = scalar_lea.vmem [#allocation2], 208
        %v2195 = vld [vmem:[%s2194] sm:$0xf]
        %v2196 = vld [vmem:[%s2194 + $0x4] sm:$0xf]
        %v2197 = vld [vmem:[%s2194 + $0x8] sm:$0xf]
        %v2198 = vld [vmem:[%s2194 + $0xc] sm:$0xf]
        %v2199 = vrot.slane %v1971, 1
        %v2200 = vrot.slane %v1973, 2
        %v2201 = vor.u32 %v2199, %v2200
        %v2202 = vrot.slane %v1982, 1
        %v2203 = vrot.slane %v1978, 2
        %v2204 = vor.u32 %v2202, %v2203
        %v2205 = vsel %vm618, %v2201, %v2204
        %v2210 = vunpack.c.l.b16 %v2195
        %v2211 = vunpack.c.l.b16 %v2196
        %v2212 = vunpack.c.l.b16 %v2197
        %v2213 = vunpack.c.l.b16 %v2198
        %v2214 = vpack.c.b16 %v2211, %v2210
        %v2215 = vpack.c.b16 %v2213, %v2212
        %v2219 = vsel %vm410, %v2205, 0
        %v2222 = vsel %vm410, %v2204, 0
        %2224 = vmatprep.subr.bf16.mxu0 0
        %2225 = vmatpush1.bf16.msra.mxu0 %v2214
        %2226 = vmatprep.subr.bf16.mxu0 0
        %2227 = vmatpush1.bf16.msra.mxu0 %v2215
        %2228 = vmatprep.subr.bf16.mxu0 0
        %2229 = vmatpush1.bf16.msra.mxu0 0
        %2230 = vmatprep.subr.bf16.mxu0 0
        %2231 = vmatpush1.bf16.msra.mxu0 0
        %2232 = vmatprep.subr.bf16.mxu0 0
        %2233 = vmatpush1.bf16.msra.mxu0 0
        %2234 = vmatprep.subr.bf16.mxu0 0
        %2235 = vmatpush1.bf16.msra.mxu0 0
        %2236 = vmatprep.subr.bf16.mxu0 0
        %2237 = vmatpush1.bf16.msra.mxu0 0
        %2238 = vmatprep.subr.bf16.mxu0 0
        %2239 = vmatpush1.bf16.msra.mxu0 0
        %2240 = vmatprep.subr.bf16.mxu0 0
        %2241 = vmatpush1.bf16.msra.mxu0 0
        %2242 = vmatprep.subr.bf16.mxu0 0
        %2243 = vmatpush1.bf16.msra.mxu0 0
        %2244 = vmatprep.subr.bf16.mxu0 0
        %2245 = vmatpush1.bf16.msra.mxu0 0
        %2246 = vmatprep.subr.bf16.mxu0 0
        %2247 = vmatpush1.bf16.msra.mxu0 0
        %2248 = vmatprep.subr.bf16.mxu0 0
        %2249 = vmatpush1.bf16.msra.mxu0 0
        %2250 = vmatprep.subr.bf16.mxu0 0
        %2251 = vmatpush1.bf16.msra.mxu0 0
        %2252 = vmatprep.subr.bf16.mxu0 0
        %2253 = vmatpush1.bf16.msra.mxu0 0
        %2254 = vmatprep.subr.bf16.mxu0 0
        %2255 = vmatpush1.bf16.msra.mxu0 0
        %2256 = vmatprep.mubr.bf16.mxu0 0
        %2257 = vmatmul.mubr.bf16.gmra.mrb[0].mxu0 %v2219
        %v2258 = vpop.f32.mrb[0].mxu0
        %v2259 = vadd.f32 0.0, %v2258
        %v2260 = vpop.f32.mrb[0].mxu0
        %v2261 = vpop.f32.mrb[0].mxu0
        %v2262 = vadd.f32 0.0, %v2261
        %v2263 = vpop.f32.mrb[0].mxu0
        %2264 = vmatprep.mubr.bf16.mxu0 0
        %2265 = vmatmul.mubr.bf16.gmra.mrb[0].mxu0 %v2222
        %v2266 = vpop.f32.mrb[0].mxu0
        %v2267 = vadd.f32 0.0, %v2266
        %v2268 = vpop.f32.mrb[0].mxu0
        %v2269 = vpop.f32.mrb[0].mxu0
        %v2270 = vpop.f32.mrb[0].mxu0
        %2271 = vdwg.mxu0
        %v2272 = vadd.f32 %v2191, %v2259
        %v2273 = vadd.f32 %v2192, %v2262
        %v2274 = vadd.f32 %v2193, %v2267
        %s2275 = scalar_lea.vmem [#allocation2], 224
        %v2276 = vld [vmem:[%s2275] sm:$0xf]
        %v2277 = vld [vmem:[%s2275 + $0x4] sm:$0xf]
        %v2278 = vld [vmem:[%s2275 + $0x8] sm:$0xf]
        %v2279 = vld [vmem:[%s2275 + $0xc] sm:$0xf]
        %v2280 = vrot.slane %v1958, 2
        %v2281 = vrot.slane %v1959, 2
        %v2282 = vsel %vm708, %v2280, %v2281
        %v2287 = vunpack.c.l.b16 %v2276
        %v2288 = vunpack.c.l.b16 %v2277
        %v2289 = vunpack.c.l.b16 %v2278
        %v2290 = vunpack.c.l.b16 %v2279
        %v2291 = vpack.c.b16 %v2288, %v2287
        %v2292 = vpack.c.b16 %v2290, %v2289
        %v2296 = vsel %vm410, %v2282, 0
        %v2299 = vsel %vm410, %v2281, 0
        %2301 = vmatprep.subr.bf16.mxu0 0
        %2302 = vmatpush1.bf16.msra.mxu0 %v2291
        %2303 = vmatprep.subr.bf16.mxu0 0
        %2304 = vmatpush1.bf16.msra.mxu0 %v2292
        %2305 = vmatprep.subr.bf16.mxu0 0
        %2306 = vmatpush1.bf16.msra.mxu0 0
        %2307 = vmatprep.subr.bf16.mxu0 0
        %2308 = vmatpush1.bf16.msra.mxu0 0
        %2309 = vmatprep.subr.bf16.mxu0 0
        %2310 = vmatpush1.bf16.msra.mxu0 0
        %2311 = vmatprep.subr.bf16.mxu0 0
        %2312 = vmatpush1.bf16.msra.mxu0 0
        %2313 = vmatprep.subr.bf16.mxu0 0
        %2314 = vmatpush1.bf16.msra.mxu0 0
        %2315 = vmatprep.subr.bf16.mxu0 0
        %2316 = vmatpush1.bf16.msra.mxu0 0
        %2317 = vmatprep.subr.bf16.mxu0 0
        %2318 = vmatpush1.bf16.msra.mxu0 0
        %2319 = vmatprep.subr.bf16.mxu0 0
        %2320 = vmatpush1.bf16.msra.mxu0 0
        %2321 = vmatprep.subr.bf16.mxu0 0
        %2322 = vmatpush1.bf16.msra.mxu0 0
        %2323 = vmatprep.subr.bf16.mxu0 0
        %2324 = vmatpush1.bf16.msra.mxu0 0
        %2325 = vmatprep.subr.bf16.mxu0 0
        %2326 = vmatpush1.bf16.msra.mxu0 0
        %2327 = vmatprep.subr.bf16.mxu0 0
        %2328 = vmatpush1.bf16.msra.mxu0 0
        %2329 = vmatprep.subr.bf16.mxu0 0
        %2330 = vmatpush1.bf16.msra.mxu0 0
        %2331 = vmatprep.subr.bf16.mxu0 0
        %2332 = vmatpush1.bf16.msra.mxu0 0
        %2333 = vmatprep.mubr.bf16.mxu0 0
        %2334 = vmatmul.mubr.bf16.gmra.mrb[0].mxu0 %v2296
        %v2335 = vpop.f32.mrb[0].mxu0
        %v2336 = vadd.f32 0.0, %v2335
        %v2337 = vpop.f32.mrb[0].mxu0
        %v2338 = vpop.f32.mrb[0].mxu0
        %v2339 = vadd.f32 0.0, %v2338
        %v2340 = vpop.f32.mrb[0].mxu0
        %2341 = vmatprep.mubr.bf16.mxu0 0
        %2342 = vmatmul.mubr.bf16.gmra.mrb[0].mxu0 %v2299
        %v2343 = vpop.f32.mrb[0].mxu0
        %v2344 = vadd.f32 0.0, %v2343
        %v2345 = vpop.f32.mrb[0].mxu0
        %v2346 = vpop.f32.mrb[0].mxu0
        %v2347 = vpop.f32.mrb[0].mxu0
        %2348 = vdwg.mxu0
        %v2349 = vadd.f32 %v2272, %v2336
        %v2350 = vadd.f32 %v2273, %v2339
        %v2351 = vadd.f32 %v2274, %v2344
        %s2352 = scalar_lea.vmem %s3, 3
        %v2353 = vld [vmem:[%s2352] sm:$0x1]
        %v2355 = vlaneseq
        %v2356 = vshrl.u32 %v2355, 7
        %v2357 = vsub.s32 0, %v2356
        %v2358 = vrot.slane %v2353, %v2357
        %v2360 = vadd.f32 %v2349, %v2358
        %v2361 = vadd.f32 %v2350, %v2358
        %v2362 = vadd.f32 %v2351, %v2358
        %v2363 = vmax.f32 %v2360, 0.0
        %v2364 = vmax.f32 %v2361, 0.0
        %v2365 = vmax.f32 %v2362, 0.0
        %v2366 = vsel %vm410, %v2363, 0.0
        %2367 = vadd.xlane.f32.xlu0 %v2366
        %v2368 = vpop.xlane.xlu0 %2367
        %v2369 = vsel %vm410, %v2364, 0.0
        %2370 = vadd.xlane.f32.xlu0 %v2369
        %v2371 = vpop.xlane.xlu0 %2370
        %v2372 = vsel %vm1347, %v2365, 0.0
        %2373 = vadd.xlane.f32.xlu0 %v2372
        %v2374 = vpop.xlane.xlu0 %2373
        %v2375 = vmul.f32 %v2368, 0.03125
        %v2376 = vmul.f32 %v2371, 0.03125
        %v2377 = vmul.f32 %v2374, 0.03125
        %v2378 = vmul.f32 %v2363, %v2363
        %v2379 = vmul.f32 %v2364, %v2364
        %v2380 = vmul.f32 %v2365, %v2365
        %v2381 = vsel %vm410, %v2378, 0.0
        %2382 = vadd.xlane.f32.xlu0 %v2381
        %v2383 = vpop.xlane.xlu0 %2382
        %v2384 = vsel %vm410, %v2379, 0.0
        %2385 = vadd.xlane.f32.xlu0 %v2384
        %v2386 = vpop.xlane.xlu0 %2385
        %v2387 = vsel %vm1347, %v2380, 0.0
        %2388 = vadd.xlane.f32.xlu0 %v2387
        %v2389 = vpop.xlane.xlu0 %2388
        %v2390 = vmul.f32 %v2383, 0.03125
        %v2391 = vmul.f32 %v2386, 0.03125
        %v2392 = vmul.f32 %v2389, 0.03125
        %v2393 = vmul.f32 %v2375, %v2375
        %v2394 = vmul.f32 %v2376, %v2376
        %v2395 = vmul.f32 %v2377, %v2377
        %v2396 = vsub.f32 %v2390, %v2393
        %v2397 = vsub.f32 %v2391, %v2394
        %v2398 = vsub.f32 %v2392, %v2395
        %v2399 = vmax.f32 %v2396, 0.0
        %v2400 = vmax.f32 %v2397, 0.0
        %v2401 = vmax.f32 %v2398, 0.0
        %v2402 = vsub.f32 %v2363, %v2375
        %v2403 = vsub.f32 %v2364, %v2376
        %v2404 = vsub.f32 %v2365, %v2377
        %v2405 = vadd.f32 %v2399, 1e-05
        %v2406 = vadd.f32 %v2400, 1e-05
        %v2407 = vadd.f32 %v2401, 1e-05
        %v2408 = vrsqrt.pop %v2405
        %v2409 = vrsqrt.pop %v2406
        %v2410 = vrsqrt.pop %v2407
        %v2411 = vmul.f32 %v2402, %v2408
        %v2412 = vmul.f32 %v2403, %v2409
        %v2413 = vmul.f32 %v2404, %v2410
        %s2414 = scalar_lea.vmem %s4, 3
        %v2415 = vld [vmem:[%s2414] sm:$0x1]
        %v2417 = vlaneseq
        %v2418 = vshrl.u32 %v2417, 7
        %v2419 = vsub.s32 0, %v2418
        %v2420 = vrot.slane %v2415, %v2419
        %v2422 = vmul.f32 %v2411, %v2420
        %v2423 = vmul.f32 %v2412, %v2420
        %v2424 = vmul.f32 %v2413, %v2420
        %s2425 = scalar_lea.vmem %s5, 3
        %v2426 = vld [vmem:[%s2425] sm:$0x1]
        %v2428 = vlaneseq
        %v2429 = vshrl.u32 %v2428, 7
        %v2430 = vsub.s32 0, %v2429
        %v2431 = vrot.slane %v2426, %v2430
        %v2433 = vadd.f32 %v2422, %v2431
        %v2434 = vadd.f32 %v2423, %v2431
        %v2435 = vadd.f32 %v2424, %v2431
        %s2436 = ssub.s32 %s345, 2
        %v2437 = vstv %s2436
        %v2438 = vadd.s32 %v888, %v2437
        %v2439 = vadd.s32 %v889, %v2437
        %v2440 = vadd.s32 %v890, %v2437
        %vm2441 = vcmp.ge.s32.totalorder %v2438, 0
        %vm2442 = vcmp.ge.s32.totalorder %v2439, 0
        %vm2443 = vcmp.ge.s32.totalorder %v2440, 0
        %vm2444 = vcmp.lt.s32.totalorder %v2438, 16
        %vm2445 = vcmp.lt.s32.totalorder %v2439, 16
        %vm2446 = vcmp.lt.s32.totalorder %v2440, 16
        %vm2447 = vmand %vm2441, %vm2444
        %vm2448 = vmand %vm2442, %vm2445
        %vm2449 = vmand %vm2443, %vm2446
        %v2450 = vsel %vm2447, 1, 0
        %v2451 = vsel %vm2448, 1, 0
        %v2452 = vsel %vm2449, 1, 0
        %v2453 = vcvt.s32.f32 %v2450
        %v2454 = vcvt.s32.f32 %v2451
        %v2455 = vcvt.s32.f32 %v2452
        %v2456 = vmul.f32 %v2433, %v2453
        %v2457 = vmul.f32 %v2434, %v2454
        %v2458 = vmul.f32 %v2435, %v2455
        %v2459 = vpack.c.bf16 %v2457, %v2456
        %v2460 = vpack.c.bf16 %v2458, %v2458
        %s2461 = scalar_lea.vmem [#allocation2], 240
        %v2462 = vld [vmem:[%s2461] sm:$0xf]
        %v2463 = vld [vmem:[%s2461 + $0x4] sm:$0xf]
        %v2464 = vld [vmem:[%s2461 + $0x8] sm:$0xf]
        %v2465 = vld [vmem:[%s2461 + $0xc] sm:$0xf]
        %s2466 = scalar_lea.vmem [#allocation2], 256
        %v2467 = vld [vmem:[%s2466] sm:$0xf]
        %v2468 = vld [vmem:[%s2466 + $0x4] sm:$0xf]
        %v2469 = vld [vmem:[%s2466 + $0x8] sm:$0xf]
        %v2470 = vld [vmem:[%s2466 + $0xc] sm:$0xf]
        %v2472 = vshrl.u32 %v2459, 16
        %v2474 = vshll.u32 %v2459, 16
        %v2476 = vrot.slane %v2474, 1
        %v2477 = vor.u32 %v2472, %v2476
        %v2479 = vshll.u32 %v2460, 16
        %v2481 = vrot.slane %v2479, 1
        %v2482 = vsel %vm377, %v2477, %v2481
        %v2487 = vunpack.c.l.b16 %v2467
        %v2488 = vunpack.c.l.b16 %v2468
        %v2489 = vunpack.c.l.b16 %v2469
        %v2490 = vunpack.c.l.b16 %v2470
        %v2491 = vpack.c.b16 %v2488, %v2487
        %v2492 = vpack.c.b16 %v2490, %v2489
        %v2496 = vsel %vm410, %v2482, 0
        %2498 = vmatprep.subr.bf16.mxu0 0
        %2499 = vmatpush1.bf16.msra.mxu0 %v2491
        %2500 = vmatprep.subr.bf16.mxu0 0
        %2501 = vmatpush1.bf16.msra.mxu0 %v2492
        %2502 = vmatprep.subr.bf16.mxu0 0
        %2503 = vmatpush1.bf16.msra.mxu0 0
        %2504 = vmatprep.subr.bf16.mxu0 0
        %2505 = vmatpush1.bf16.msra.mxu0 0
        %2506 = vmatprep.subr.bf16.mxu0 0
        %2507 = vmatpush1.bf16.msra.mxu0 0
        %2508 = vmatprep.subr.bf16.mxu0 0
        %2509 = vmatpush1.bf16.msra.mxu0 0
        %2510 = vmatprep.subr.bf16.mxu0 0
        %2511 = vmatpush1.bf16.msra.mxu0 0
        %2512 = vmatprep.subr.bf16.mxu0 0
        %2513 = vmatpush1.bf16.msra.mxu0 0
        %2514 = vmatprep.subr.bf16.mxu0 0
        %2515 = vmatpush1.bf16.msra.mxu0 0
        %2516 = vmatprep.subr.bf16.mxu0 0
        %2517 = vmatpush1.bf16.msra.mxu0 0
        %2518 = vmatprep.subr.bf16.mxu0 0
        %2519 = vmatpush1.bf16.msra.mxu0 0
        %2520 = vmatprep.subr.bf16.mxu0 0
        %2521 = vmatpush1.bf16.msra.mxu0 0
        %2522 = vmatprep.subr.bf16.mxu0 0
        %2523 = vmatpush1.bf16.msra.mxu0 0
        %2524 = vmatprep.subr.bf16.mxu0 0
        %2525 = vmatpush1.bf16.msra.mxu0 0
        %2526 = vmatprep.subr.bf16.mxu0 0
        %2527 = vmatpush1.bf16.msra.mxu0 0
        %2528 = vmatprep.subr.bf16.mxu0 0
        %2529 = vmatpush1.bf16.msra.mxu0 0
        %2530 = vmatprep.mubr.bf16.mxu0 0
        %2531 = vmatmul.mubr.bf16.gmra.mrb[0].mxu0 %v2496
        %v2532 = vpop.f32.mrb[0].mxu0
        %v2533 = vadd.f32 0.0, %v2532
        %v2534 = vpop.f32.mrb[0].mxu0
        %v2535 = vpop.f32.mrb[0].mxu0
        %v2536 = vadd.f32 0.0, %v2535
        %v2537 = vpop.f32.mrb[0].mxu0
        %2538 = vdwg.mxu0
        %v2543 = vunpack.c.l.b16 %v2462
        %v2544 = vunpack.c.l.b16 %v2463
        %v2545 = vunpack.c.l.b16 %v2464
        %v2546 = vunpack.c.l.b16 %v2465
        %v2547 = vpack.c.b16 %v2544, %v2543
        %v2548 = vpack.c.b16 %v2546, %v2545
        %v2551 = vsel %vm410, %v2459, 0
        %2553 = vmatprep.subr.bf16.mxu0 0
        %2554 = vmatpush1.bf16.msra.mxu0 %v2547
        %2555 = vmatprep.subr.bf16.mxu0 0
        %2556 = vmatpush1.bf16.msra.mxu0 %v2548
        %2557 = vmatprep.subr.bf16.mxu0 0
        %2558 = vmatpush1.bf16.msra.mxu0 0
        %2559 = vmatprep.subr.bf16.mxu0 0
        %2560 = vmatpush1.bf16.msra.mxu0 0
        %2561 = vmatprep.subr.bf16.mxu0 0
        %2562 = vmatpush1.bf16.msra.mxu0 0
        %2563 = vmatprep.subr.bf16.mxu0 0
        %2564 = vmatpush1.bf16.msra.mxu0 0
        %2565 = vmatprep.subr.bf16.mxu0 0
        %2566 = vmatpush1.bf16.msra.mxu0 0
        %2567 = vmatprep.subr.bf16.mxu0 0
        %2568 = vmatpush1.bf16.msra.mxu0 0
        %2569 = vmatprep.subr.bf16.mxu0 0
        %2570 = vmatpush1.bf16.msra.mxu0 0
        %2571 = vmatprep.subr.bf16.mxu0 0
        %2572 = vmatpush1.bf16.msra.mxu0 0
        %2573 = vmatprep.subr.bf16.mxu0 0
        %2574 = vmatpush1.bf16.msra.mxu0 0
        %2575 = vmatprep.subr.bf16.mxu0 0
        %2576 = vmatpush1.bf16.msra.mxu0 0
        %2577 = vmatprep.subr.bf16.mxu0 0
        %2578 = vmatpush1.bf16.msra.mxu0 0
        %2579 = vmatprep.subr.bf16.mxu0 0
        %2580 = vmatpush1.bf16.msra.mxu0 0
        %2581 = vmatprep.subr.bf16.mxu0 0
        %2582 = vmatpush1.bf16.msra.mxu0 0
        %2583 = vmatprep.subr.bf16.mxu0 0
        %2584 = vmatpush1.bf16.msra.mxu0 0
        %2585 = vmatprep.mubr.bf16.mxu0 0
        %2586 = vmatmul.mubr.bf16.gmra.mrb[0].mxu0 %v2551
        %v2587 = vpop.f32.mrb[0].mxu0
        %v2588 = vadd.f32 %v2533, %v2587
        %v2589 = vpop.f32.mrb[0].mxu0
        %v2590 = vpop.f32.mrb[0].mxu0
        %v2591 = vadd.f32 %v2536, %v2590
        %v2592 = vpop.f32.mrb[0].mxu0
        %2593 = vdwg.mxu0
        %s2594 = scalar_lea.vmem [#allocation2], 272
        %v2595 = vld [vmem:[%s2594] sm:$0xf]
        %v2596 = vld [vmem:[%s2594 + $0x4] sm:$0xf]
        %v2597 = vld [vmem:[%s2594 + $0x8] sm:$0xf]
        %v2598 = vld [vmem:[%s2594 + $0xc] sm:$0xf]
        %v2601 = vrot.slane %v2459, 1
        %v2602 = vrot.slane %v2460, 1
        %v2603 = vsel %vm536, %v2601, %v2602
        %v2608 = vunpack.c.l.b16 %v2595
        %v2609 = vunpack.c.l.b16 %v2596
        %v2610 = vunpack.c.l.b16 %v2597
        %v2611 = vunpack.c.l.b16 %v2598
        %v2612 = vpack.c.b16 %v2609, %v2608
        %v2613 = vpack.c.b16 %v2611, %v2610
        %v2617 = vsel %vm410, %v2603, 0
        %2619 = vmatprep.subr.bf16.mxu0 0
        %2620 = vmatpush1.bf16.msra.mxu0 %v2612
        %2621 = vmatprep.subr.bf16.mxu0 0
        %2622 = vmatpush1.bf16.msra.mxu0 %v2613
        %2623 = vmatprep.subr.bf16.mxu0 0
        %2624 = vmatpush1.bf16.msra.mxu0 0
        %2625 = vmatprep.subr.bf16.mxu0 0
        %2626 = vmatpush1.bf16.msra.mxu0 0
        %2627 = vmatprep.subr.bf16.mxu0 0
        %2628 = vmatpush1.bf16.msra.mxu0 0
        %2629 = vmatprep.subr.bf16.mxu0 0
        %2630 = vmatpush1.bf16.msra.mxu0 0
        %2631 = vmatprep.subr.bf16.mxu0 0
        %2632 = vmatpush1.bf16.msra.mxu0 0
        %2633 = vmatprep.subr.bf16.mxu0 0
        %2634 = vmatpush1.bf16.msra.mxu0 0
        %2635 = vmatprep.subr.bf16.mxu0 0
        %2636 = vmatpush1.bf16.msra.mxu0 0
        %2637 = vmatprep.subr.bf16.mxu0 0
        %2638 = vmatpush1.bf16.msra.mxu0 0
        %2639 = vmatprep.subr.bf16.mxu0 0
        %2640 = vmatpush1.bf16.msra.mxu0 0
        %2641 = vmatprep.subr.bf16.mxu0 0
        %2642 = vmatpush1.bf16.msra.mxu0 0
        %2643 = vmatprep.subr.bf16.mxu0 0
        %2644 = vmatpush1.bf16.msra.mxu0 0
        %2645 = vmatprep.subr.bf16.mxu0 0
        %2646 = vmatpush1.bf16.msra.mxu0 0
        %2647 = vmatprep.subr.bf16.mxu0 0
        %2648 = vmatpush1.bf16.msra.mxu0 0
        %2649 = vmatprep.subr.bf16.mxu0 0
        %2650 = vmatpush1.bf16.msra.mxu0 0
        %2651 = vmatprep.mubr.bf16.mxu0 0
        %2652 = vmatmul.mubr.bf16.gmra.mrb[0].mxu0 %v2617
        %v2653 = vpop.f32.mrb[0].mxu0
        %v2654 = vadd.f32 0.0, %v2653
        %v2655 = vpop.f32.mrb[0].mxu0
        %v2656 = vpop.f32.mrb[0].mxu0
        %v2657 = vadd.f32 0.0, %v2656
        %v2658 = vpop.f32.mrb[0].mxu0
        %2659 = vdwg.mxu0
        %v2660 = vadd.f32 %v2588, %v2654
        %v2661 = vadd.f32 %v2591, %v2657
        %s2662 = scalar_lea.vmem [#allocation2], 288
        %v2663 = vld [vmem:[%s2662] sm:$0xf]
        %v2664 = vld [vmem:[%s2662 + $0x4] sm:$0xf]
        %v2665 = vld [vmem:[%s2662 + $0x8] sm:$0xf]
        %v2666 = vld [vmem:[%s2662 + $0xc] sm:$0xf]
        %v2667 = vrot.slane %v2472, 1
        %v2668 = vrot.slane %v2474, 2
        %v2669 = vor.u32 %v2667, %v2668
        %v2670 = vshrl.u32 %v2460, 16
        %v2672 = vrot.slane %v2670, 1
        %v2673 = vrot.slane %v2479, 2
        %v2674 = vor.u32 %v2672, %v2673
        %v2675 = vsel %vm618, %v2669, %v2674
        %v2680 = vunpack.c.l.b16 %v2663
        %v2681 = vunpack.c.l.b16 %v2664
        %v2682 = vunpack.c.l.b16 %v2665
        %v2683 = vunpack.c.l.b16 %v2666
        %v2684 = vpack.c.b16 %v2681, %v2680
        %v2685 = vpack.c.b16 %v2683, %v2682
        %v2689 = vsel %vm410, %v2675, 0
        %2691 = vmatprep.subr.bf16.mxu0 0
        %2692 = vmatpush1.bf16.msra.mxu0 %v2684
        %2693 = vmatprep.subr.bf16.mxu0 0
        %2694 = vmatpush1.bf16.msra.mxu0 %v2685
        %2695 = vmatprep.subr.bf16.mxu0 0
        %2696 = vmatpush1.bf16.msra.mxu0 0
        %2697 = vmatprep.subr.bf16.mxu0 0
        %2698 = vmatpush1.bf16.msra.mxu0 0
        %2699 = vmatprep.subr.bf16.mxu0 0
        %2700 = vmatpush1.bf16.msra.mxu0 0
        %2701 = vmatprep.subr.bf16.mxu0 0
        %2702 = vmatpush1.bf16.msra.mxu0 0
        %2703 = vmatprep.subr.bf16.mxu0 0
        %2704 = vmatpush1.bf16.msra.mxu0 0
        %2705 = vmatprep.subr.bf16.mxu0 0
        %2706 = vmatpush1.bf16.msra.mxu0 0
        %2707 = vmatprep.subr.bf16.mxu0 0
        %2708 = vmatpush1.bf16.msra.mxu0 0
        %2709 = vmatprep.subr.bf16.mxu0 0
        %2710 = vmatpush1.bf16.msra.mxu0 0
        %2711 = vmatprep.subr.bf16.mxu0 0
        %2712 = vmatpush1.bf16.msra.mxu0 0
        %2713 = vmatprep.subr.bf16.mxu0 0
        %2714 = vmatpush1.bf16.msra.mxu0 0
        %2715 = vmatprep.subr.bf16.mxu0 0
        %2716 = vmatpush1.bf16.msra.mxu0 0
        %2717 = vmatprep.subr.bf16.mxu0 0
        %2718 = vmatpush1.bf16.msra.mxu0 0
        %2719 = vmatprep.subr.bf16.mxu0 0
        %2720 = vmatpush1.bf16.msra.mxu0 0
        %2721 = vmatprep.subr.bf16.mxu0 0
        %2722 = vmatpush1.bf16.msra.mxu0 0
        %2723 = vmatprep.mubr.bf16.mxu0 0
        %2724 = vmatmul.mubr.bf16.gmra.mrb[0].mxu0 %v2689
        %v2725 = vpop.f32.mrb[0].mxu0
        %v2726 = vadd.f32 0.0, %v2725
        %v2727 = vpop.f32.mrb[0].mxu0
        %v2728 = vpop.f32.mrb[0].mxu0
        %v2729 = vadd.f32 0.0, %v2728
        %v2730 = vpop.f32.mrb[0].mxu0
        %2731 = vdwg.mxu0
        %v2732 = vadd.f32 %v2660, %v2726
        %v2733 = vadd.f32 %v2661, %v2729
        %s2734 = scalar_lea.vmem [#allocation2], 304
        %v2735 = vld [vmem:[%s2734] sm:$0xf]
        %v2736 = vld [vmem:[%s2734 + $0x4] sm:$0xf]
        %v2737 = vld [vmem:[%s2734 + $0x8] sm:$0xf]
        %v2738 = vld [vmem:[%s2734 + $0xc] sm:$0xf]
        %v2739 = vrot.slane %v2459, 2
        %v2740 = vrot.slane %v2460, 2
        %v2741 = vsel %vm708, %v2739, %v2740
        %v2746 = vunpack.c.l.b16 %v2735
        %v2747 = vunpack.c.l.b16 %v2736
        %v2748 = vunpack.c.l.b16 %v2737
        %v2749 = vunpack.c.l.b16 %v2738
        %v2750 = vpack.c.b16 %v2747, %v2746
        %v2751 = vpack.c.b16 %v2749, %v2748
        %v2755 = vsel %vm410, %v2741, 0
        %2757 = vmatprep.subr.bf16.mxu0 0
        %2758 = vmatpush1.bf16.msra.mxu0 %v2750
        %2759 = vmatprep.subr.bf16.mxu0 0
        %2760 = vmatpush1.bf16.msra.mxu0 %v2751
        %2761 = vmatprep.subr.bf16.mxu0 0
        %2762 = vmatpush1.bf16.msra.mxu0 0
        %2763 = vmatprep.subr.bf16.mxu0 0
        %2764 = vmatpush1.bf16.msra.mxu0 0
        %2765 = vmatprep.subr.bf16.mxu0 0
        %2766 = vmatpush1.bf16.msra.mxu0 0
        %2767 = vmatprep.subr.bf16.mxu0 0
        %2768 = vmatpush1.bf16.msra.mxu0 0
        %2769 = vmatprep.subr.bf16.mxu0 0
        %2770 = vmatpush1.bf16.msra.mxu0 0
        %2771 = vmatprep.subr.bf16.mxu0 0
        %2772 = vmatpush1.bf16.msra.mxu0 0
        %2773 = vmatprep.subr.bf16.mxu0 0
        %2774 = vmatpush1.bf16.msra.mxu0 0
        %2775 = vmatprep.subr.bf16.mxu0 0
        %2776 = vmatpush1.bf16.msra.mxu0 0
        %2777 = vmatprep.subr.bf16.mxu0 0
        %2778 = vmatpush1.bf16.msra.mxu0 0
        %2779 = vmatprep.subr.bf16.mxu0 0
        %2780 = vmatpush1.bf16.msra.mxu0 0
        %2781 = vmatprep.subr.bf16.mxu0 0
        %2782 = vmatpush1.bf16.msra.mxu0 0
        %2783 = vmatprep.subr.bf16.mxu0 0
        %2784 = vmatpush1.bf16.msra.mxu0 0
        %2785 = vmatprep.subr.bf16.mxu0 0
        %2786 = vmatpush1.bf16.msra.mxu0 0
        %2787 = vmatprep.subr.bf16.mxu0 0
        %2788 = vmatpush1.bf16.msra.mxu0 0
        %2789 = vmatprep.mubr.bf16.mxu0 0
        %2790 = vmatmul.mubr.bf16.gmra.mrb[0].mxu0 %v2755
        %v2791 = vpop.f32.mrb[0].mxu0
        %v2792 = vadd.f32 0.0, %v2791
        %v2793 = vpop.f32.mrb[0].mxu0
        %v2794 = vpop.f32.mrb[0].mxu0
        %v2795 = vadd.f32 0.0, %v2794
        %v2796 = vpop.f32.mrb[0].mxu0
        %2797 = vdwg.mxu0
        %v2798 = vadd.f32 %v2732, %v2792
        %v2799 = vadd.f32 %v2733, %v2795
        %s2800 = scalar_lea.vmem %s3, 4
        %v2801 = vld [vmem:[%s2800] sm:$0x1]
        %v2803 = vlaneseq
        %v2804 = vshrl.u32 %v2803, 7
        %v2805 = vsub.s32 0, %v2804
        %v2806 = vrot.slane %v2801, %v2805
        %v2808 = vadd.f32 %v2798, %v2806
        %v2809 = vadd.f32 %v2799, %v2806
        %v2810 = vmax.f32 %v2808, 0.0
        %v2811 = vmax.f32 %v2809, 0.0
        %v2812 = vsel %vm410, %v2810, 0.0
        %2813 = vadd.xlane.f32.xlu0 %v2812
        %v2814 = vpop.xlane.xlu0 %2813
        %v2815 = vsel %vm410, %v2811, 0.0
        %2816 = vadd.xlane.f32.xlu0 %v2815
        %v2817 = vpop.xlane.xlu0 %2816
        %v2818 = vmul.f32 %v2814, 0.03125
        %v2819 = vmul.f32 %v2817, 0.03125
        %v2820 = vmul.f32 %v2810, %v2810
        %v2821 = vmul.f32 %v2811, %v2811
        %v2822 = vsel %vm410, %v2820, 0.0
        %2823 = vadd.xlane.f32.xlu0 %v2822
        %v2824 = vpop.xlane.xlu0 %2823
        %v2825 = vsel %vm410, %v2821, 0.0
        %2826 = vadd.xlane.f32.xlu0 %v2825
        %v2827 = vpop.xlane.xlu0 %2826
        %v2828 = vmul.f32 %v2824, 0.03125
        %v2829 = vmul.f32 %v2827, 0.03125
        %v2830 = vmul.f32 %v2818, %v2818
        %v2831 = vmul.f32 %v2819, %v2819
        %v2832 = vsub.f32 %v2828, %v2830
        %v2833 = vsub.f32 %v2829, %v2831
        %v2834 = vmax.f32 %v2832, 0.0
        %v2835 = vmax.f32 %v2833, 0.0
        %v2836 = vsub.f32 %v2810, %v2818
        %v2837 = vsub.f32 %v2811, %v2819
        %v2838 = vadd.f32 %v2834, 1e-05
        %v2839 = vadd.f32 %v2835, 1e-05
        %v2840 = vrsqrt.pop %v2838
        %v2841 = vrsqrt.pop %v2839
        %v2842 = vmul.f32 %v2836, %v2840
        %v2843 = vmul.f32 %v2837, %v2841
        %s2844 = scalar_lea.vmem %s4, 4
        %v2845 = vld [vmem:[%s2844] sm:$0x1]
        %v2847 = vlaneseq
        %v2848 = vshrl.u32 %v2847, 7
        %v2849 = vsub.s32 0, %v2848
        %v2850 = vrot.slane %v2845, %v2849
        %v2852 = vmul.f32 %v2842, %v2850
        %v2853 = vmul.f32 %v2843, %v2850
        %s2854 = scalar_lea.vmem %s5, 4
        %v2855 = vld [vmem:[%s2854] sm:$0x1]
        %v2857 = vlaneseq
        %v2858 = vshrl.u32 %v2857, 7
        %v2859 = vsub.s32 0, %v2858
        %v2860 = vrot.slane %v2855, %v2859
        %v2862 = vadd.f32 %v2852, %v2860
        %v2863 = vadd.f32 %v2853, %v2860
        %v2864 = vstv %s345
        %v2865 = vadd.s32 %v888, %v2864
        %v2866 = vadd.s32 %v889, %v2864
        %vm2867 = vcmp.ge.s32.totalorder %v2865, 0
        %vm2868 = vcmp.ge.s32.totalorder %v2866, 0
        %vm2869 = vcmp.lt.s32.totalorder %v2865, 16
        %vm2870 = vcmp.lt.s32.totalorder %v2866, 16
        %vm2871 = vmand %vm2867, %vm2869
        %vm2872 = vmand %vm2868, %vm2870
        %v2873 = vsel %vm2871, 1, 0
        %v2874 = vsel %vm2872, 1, 0
        %v2875 = vcvt.s32.f32 %v2873
        %v2876 = vcvt.s32.f32 %v2874
        %v2877 = vmul.f32 %v2862, %v2875
        %v2878 = vmul.f32 %v2863, %v2876
        %v2879 = vpack.c.bf16 %v2878, %v2877
        %v2880 = vld [vmem:[%s6] sm:$0xf]
        %v2881 = vld [vmem:[%s6 + $0x4] sm:$0xf]
        %v2882 = vld [vmem:[%s6 + $0x8] sm:$0xf]
        %v2883 = vld [vmem:[%s6 + $0xc] sm:$0xf]
        %v2884 = vld [vmem:[%s7] sm:$0x1]
        %v2886 = vlaneseq
        %v2887 = vshrl.u32 %v2886, 7
        %v2888 = vsub.s32 0, %v2887
        %v2889 = vrot.slane %v2884, %v2888
        %v2895 = vunpack.c.l.b16 %v2880
        %v2896 = vunpack.c.l.b16 %v2881
        %v2897 = vunpack.c.l.b16 %v2882
        %v2898 = vunpack.c.l.b16 %v2883
        %v2899 = vpack.c.b16 %v2896, %v2895
        %v2900 = vpack.c.b16 %v2898, %v2897
        %v2904 = vsel %vm410, %v2879, 0
        %2906 = vmatprep.subr.bf16.mxu0 0
        %2907 = vmatpush1.bf16.msra.mxu0 %v2899
        %2908 = vmatprep.subr.bf16.mxu0 0
        %2909 = vmatpush1.bf16.msra.mxu0 %v2900
        %2910 = vmatprep.subr.bf16.mxu0 0
        %2911 = vmatpush1.bf16.msra.mxu0 0
        %2912 = vmatprep.subr.bf16.mxu0 0
        %2913 = vmatpush1.bf16.msra.mxu0 0
        %2914 = vmatprep.subr.bf16.mxu0 0
        %2915 = vmatpush1.bf16.msra.mxu0 0
        %2916 = vmatprep.subr.bf16.mxu0 0
        %2917 = vmatpush1.bf16.msra.mxu0 0
        %2918 = vmatprep.subr.bf16.mxu0 0
        %2919 = vmatpush1.bf16.msra.mxu0 0
        %2920 = vmatprep.subr.bf16.mxu0 0
        %2921 = vmatpush1.bf16.msra.mxu0 0
        %2922 = vmatprep.subr.bf16.mxu0 0
        %2923 = vmatpush1.bf16.msra.mxu0 0
        %2924 = vmatprep.subr.bf16.mxu0 0
        %2925 = vmatpush1.bf16.msra.mxu0 0
        %2926 = vmatprep.subr.bf16.mxu0 0
        %2927 = vmatpush1.bf16.msra.mxu0 0
        %2928 = vmatprep.subr.bf16.mxu0 0
        %2929 = vmatpush1.bf16.msra.mxu0 0
        %2930 = vmatprep.subr.bf16.mxu0 0
        %2931 = vmatpush1.bf16.msra.mxu0 0
        %2932 = vmatprep.subr.bf16.mxu0 0
        %2933 = vmatpush1.bf16.msra.mxu0 0
        %2934 = vmatprep.subr.bf16.mxu0 0
        %2935 = vmatpush1.bf16.msra.mxu0 0
        %2936 = vmatprep.subr.bf16.mxu0 0
        %2937 = vmatpush1.bf16.msra.mxu0 0
        %2938 = vmatprep.mubr.bf16.mxu0 0
        %2939 = vmatmul.mubr.bf16.gmra.mrb[0].mxu0 %v2904
        %v2940 = vpop.f32.mrb[0].mxu0
        %v2941 = vadd.f32 %v2889, %v2940
        %v2942 = vpop.f32.mrb[0].mxu0
        %v2943 = vpop.f32.mrb[0].mxu0
        %v2944 = vadd.f32 %v2889, %v2943
        %v2945 = vpop.f32.mrb[0].mxu0
        %2946 = vdwg.mxu0
        %vm2947 = vcmask 15360
        %2948 = vst.msk [vmem:[%s342] sm:$0xff] %vm2947, %v2941
        %2949 = vst.msk [vmem:[%s342 + $0x8] sm:$0xff] %vm2947, %v2944
        %s2950 = smul.u32 2, %s25
        %p2951 = scmp.lt.s32.totalorder %s24, 1
        %s2952 = scalar_select %p2951, %s24, 1
        %p2953 = scmp.lt.s32.totalorder %s2950, 1
        %s2954 = scalar_select %p2953, %s2950, 1
        %s2955 = smul.addr %s2952, 2
        %s2956 = sadd.s32 %s2954, %s2955
        %s2957 = smul.addr %s2956, 8
        %s2958 = scalar_lea.vmem %s8, %s2957
        // Predicated region
        $region57: #{tpu_custom_call.1} parent=51 // pred_check
          %p2959 = pneg %p225
        $region58: #{tpu_custom_call.1} parent=51 // pred_check_branch
          %2961 = sbr.rel (%p2959) target = $region60
        $region59: #{tpu_custom_call.1} parent=51 // pred_region
          %s2962 = smul.u32 2, %s25
        $region60: #{tpu_custom_call.1} parent=51 // pred_fallthru
          _
      $region52: #{tpu_custom_call.1} parent=5 // pred_fallthru
        _
      %p2963 = scmp.le.s32.totalorder 2, %s15
      // Predicated region
      $region61: #{tpu_custom_call.1} parent=5 // pred_check
        %p2964 = pneg %p2963
      $region62: #{tpu_custom_call.1} parent=5 // pred_check_branch
        %2966 = sbr.rel (%p2964) target = $region64
      $region63: #{tpu_custom_call.1} parent=5 // pred_region
        %s2967 = ssub.s32 %s15, 2
        // Predicated region
        $region65: #{tpu_custom_call.1} parent=63 // pred_check
          %p2968 = pneg %p231
        $region66: #{tpu_custom_call.1} parent=63 // pred_check_branch
          %2970 = sbr.rel (%p2968) target = $region68
        $region67: #{tpu_custom_call.1} parent=63 // pred_region
          %s2971 = smul.u32 2, %s27
          %p2972 = scmp.lt.s32.totalorder %s26, 1
          %s2973 = scalar_select %p2972, %s26, 1
          %p2974 = scmp.lt.s32.totalorder %s2971, 1
          %s2975 = scalar_select %p2974, %s2971, 1
          %s2976 = smul.addr %s2973, 2
          %s2977 = sadd.s32 %s2975, %s2976
          %s2978 = smul.addr %s2977, 8
          %s2979 = scalar_lea.vmem %s8, %s2978
        $region68: #{tpu_custom_call.1} parent=63 // pred_fallthru
          _
      $region64: #{tpu_custom_call.1} parent=5 // pred_fallthru
        _
    $region6: #{tpu_custom_call.1} parent=1 // loop_footer
      %s19 = sadd.s32 1, %s15
    $region7: #{tpu_custom_call.1} parent=1 // loop_footer_branch
      %14 = sbr.rel target = $region3
    $region8: #{tpu_custom_call.1} parent=1 // loop_exit
      _
    %2980 = vsyncpa [#allocation3], 1
    %s2981 = scalar_lea.sflag [#allocation3], 1
    %2982 = vsyncpa %s2981, 1

</llo_original>
